<compile_context>
chip_gen: v7x
topology: tpu7x:2x2x1
jax: 0.10.0
libtpu: 0.0.40
codegen_flags: <defaults>
</compile_context>

<pallas_src>
import functools

import jax
import jax.numpy as jnp
from jax.experimental import pallas as pl
from jax.experimental.pallas import tpu as pltpu


def _round_up(x, m):
    return (x + m - 1) // m * m


def _dncnn_fused_kernel(x_ref, w_ref, b_ref, m_ref, o_ref, act_ref, *,
                        Wp, Lout, c_in, c_out, n_layers, slope):
    """Fused DnCNN forward for one batch element.

    x_ref  : (1, Nbuf, c_in)        f32  input in zero-halo flattened layout
    w_ref  : (n_layers, 9*C, C)     bf16 tap-stacked 3x3 weights
    b_ref  : (n_layers, 1, C)       f32  per-layer bias
    m_ref  : (Lout, 1)              f32  interior mask (0 on the pad column)
    o_ref  : (1, Lout, c_out)       f32  output (padded-flat spatial layout)
    act_ref: (2, Nbuf, C)           f32  resident ping-pong activations
    """
    q0 = 1 + Wp  # buffer index of image pixel (0, 0)

    def conv3x3(src_slot, layer_idx):
        # Stack the 9 tap-shifted views along the contraction axis and do a
        # single MXU matmul with K = 9*C; tap sum accumulates inside the MXU.
        taps = []
        for dy in (-1, 0, 1):
            for dx in (-1, 0, 1):
                off = q0 + dy * Wp + dx                       # static offset
                taps.append(
                    act_ref[src_slot, pl.ds(off, Lout), :].astype(jnp.bfloat16))
        lhs = jnp.concatenate(taps, axis=-1)                  # (Lout, 9C) bf16
        return jnp.dot(lhs, w_ref[layer_idx],
                       preferred_element_type=jnp.float32)

    # One-time init: zero both ping-pong buffers (halo rows / pad column must
    # be zero) and drop the true-channel input into lanes [0, c_in).
    act_ref[...] = jnp.zeros(act_ref.shape, act_ref.dtype)
    act_ref[0, :, :c_in] = x_ref[0]

    def layer(l, carry):
        src = l % 2
        acc = conv3x3(src, l) + b_ref[l]
        acc = jnp.where(acc >= 0.0, acc, acc * slope)         # LeakyReLU(slope)
        # Mask re-zeroes the pad column so the next layer's taps read zeros;
        # broadcast is done per layer (not hoisted) to avoid vreg spills.
        act_ref[1 - src, pl.ds(q0, Lout), :] = acc * m_ref[...]
        return carry

    jax.lax.fori_loop(0, n_layers - 1, layer, 0)

    last = n_layers - 1
    acc = conv3x3(last % 2, last) + b_ref[last]               # no LeakyReLU
    o_ref[0] = acc[:, :c_out]                                 # true channels only


def dncnn_forward(x_nchw, params, slope=0.2):
    """DnCNN forward: conv1 -> LReLU -> (dep-2)*[conv -> LReLU] -> conv_last."""
    N, c_in, H, W = x_nchw.shape
    n_layers = len(params)
    c_out = params[-1][0].shape[-1]

    # Zero-halo flattened spatial layout.
    Wp = W + 1                       # one zero pad column per row
    Np = (H + 2) * Wp                # padded image (halo rows top/bottom)
    Nbuf = _round_up(Np + 2, 8)      # +1 lead zero, +1 tail; sublane aligned
    Lout = H * Wp                    # compute span (interior rows, padded width)
    q0_host = 1 + Wp

    # Padded (lane-dense) channel count shared by all layers.
    c_max = max(max(w.shape[2], w.shape[3]) for w, _ in params)
    C = _round_up(c_max, 128)

    # Pack tap-stacked weights (9*C, C) bf16 and biases (1, C) f32 per layer.
    w_all = jnp.zeros((n_layers, 9, C, C), jnp.float32)
    b_all = jnp.zeros((n_layers, 1, C), jnp.float32)
    for l, (w, b) in enumerate(params):
        cin, cout = w.shape[2], w.shape[3]
        w_all = w_all.at[l, :, :cin, :cout].set(w.reshape(9, cin, cout))
        b_all = b_all.at[l, 0, :cout].set(b)
    w_all = w_all.reshape(n_layers, 9 * C, C).astype(jnp.bfloat16)

    # Interior mask: 1 on real pixels, 0 on the per-row pad column.
    m = ((jnp.arange(Lout, dtype=jnp.int32) % Wp) < W)
    m = m.astype(jnp.float32).reshape(Lout, 1)

    # NCHW -> zero-halo flattened NHWC at TRUE channel count (no 128-padding
    # of the HBM input).
    x_nhwc = jnp.transpose(x_nchw, (0, 2, 3, 1)).astype(jnp.float32)
    xp = jnp.pad(x_nhwc, ((0, 0), (1, 1), (0, 1), (0, 0)))    # halo rows + col
    xp = xp.reshape(N, Np, c_in)
    xp = jnp.pad(xp, ((0, 0), (1, Nbuf - Np - 1), (0, 0)))    # lead + tail zeros

    kernel = functools.partial(
        _dncnn_fused_kernel, Wp=Wp, Lout=Lout, c_in=c_in, c_out=c_out,
        n_layers=n_layers, slope=slope)

    out = pl.pallas_call(
        kernel,
        out_shape=jax.ShapeDtypeStruct((N, Lout, c_out), jnp.float32),
        grid_spec=pltpu.PrefetchScalarGridSpec(
            num_scalar_prefetch=0,
            grid=(N,),
            in_specs=[
                pl.BlockSpec((1, Nbuf, c_in), lambda n: (n, 0, 0)),        # x
                pl.BlockSpec((n_layers, 9 * C, C), lambda n: (0, 0, 0)),   # W
                pl.BlockSpec((n_layers, 1, C), lambda n: (0, 0, 0)),       # b
                pl.BlockSpec((Lout, 1), lambda n: (0, 0)),                 # mask
            ],
            out_specs=pl.BlockSpec((1, Lout, c_out), lambda n: (n, 0, 0)),
            scratch_shapes=[pltpu.VMEM((2, Nbuf, C), jnp.float32)],
        ),
        compiler_params=pltpu.CompilerParams(
            dimension_semantics=("parallel",),
            vmem_limit_bytes=48 * 1024 * 1024,
        ),
    )(xp, w_all, b_all, m)

    # Strip the pad column and return NCHW.
    out = out.reshape(N, H, Wp, c_out)[:, :, :W, :]
    return jnp.transpose(out, (0, 3, 1, 2))


def init_dncnn_params(key, in_channels, out_channels, dep, num_filters):
    """Deterministic synthetic parameters. Weight layout: (3, 3, Cin, Cout)."""
    params = []
    dims = (
        [(in_channels, num_filters)]
        + [(num_filters, num_filters)] * (dep - 2)
        + [(num_filters, out_channels)]
    )
    for cin, cout in dims:
        key, kw, kb = jax.random.split(key, 3)
        fan_in = cin * 9
        scale = 1.0 / jnp.sqrt(fan_in)
        w = jax.random.uniform(kw, (3, 3, cin, cout), jnp.float32, -scale, scale)
        b = jax.random.uniform(kb, (cout,), jnp.float32, -scale, scale)
        params.append((w, b))
    return params


def _reference_forward(x_nchw, params, slope):
    """Pure-JAX reference (f32) of the same forward pass, for sanity checking."""
    x = jnp.transpose(x_nchw, (0, 2, 3, 1))
    for i, (w, b) in enumerate(params):
        x = jax.lax.conv_general_dilated(
            x, w, window_strides=(1, 1), padding="SAME",
            dimension_numbers=("NHWC", "HWIO", "NHWC"),
            precision=jax.lax.Precision.HIGHEST) + b
        if i < len(params) - 1:
            x = jnp.where(x >= 0.0, x, x * slope)
    return jnp.transpose(x, (0, 3, 1, 2))


if __name__ == "__main__":
    # Small shapes consistent with the module's forward.
    N, C_IN, C_OUT, H, W = 2, 4, 4, 16, 16
    DEP, NUM_FILTERS, SLOPE = 5, 32, 0.2

    key = jax.random.PRNGKey(0)
    key, kx = jax.random.split(key)
    x = jax.random.normal(kx, (N, C_IN, H, W), jnp.float32)
    params = init_dncnn_params(key, C_IN, C_OUT, DEP, NUM_FILTERS)

    fwd = jax.jit(functools.partial(dncnn_forward, slope=SLOPE))
    out = fwd(x, params)
    jax.block_until_ready(out)

    assert out.shape == (N, C_OUT, H, W), out.shape
    assert out.dtype == jnp.float32

    # Sanity check vs. f32 reference (kernel uses bf16 MXU operands).
    ref = _reference_forward(x, params, SLOPE)
    rel_err = jnp.max(jnp.abs(out - ref)) / (jnp.max(jnp.abs(ref)) + 1e-8)
    assert float(rel_err) < 0.1, float(rel_err)

    print("KERNEL_OK")
</pallas_src>

<mosaic_0001>
module attributes {stable_mosaic.version = 11 : i64} {
  func.func @_dncnn_fused_kernel(%arg0: i32, %arg1: memref<1x312x4xf32, #tpu.memory_space<vmem>>, %arg2: memref<5x1152x128xbf16, #tpu.memory_space<vmem>>, %arg3: memref<5x1x128xf32, #tpu.memory_space<vmem>>, %arg4: memref<272x1xf32, #tpu.memory_space<vmem>>, %arg5: memref<1x272x4xf32, #tpu.memory_space<vmem>>, %arg6: memref<2x312x128xf32, #tpu.memory_space<vmem>>) attributes {dimension_semantics = [#tpu.dimension_semantics<parallel>], iteration_bounds = array<i64: 2>, scalar_prefetch = 0 : i64, scratch_operands = 1 : i64, tpu.core_type = #tpu.core_type<tc>, window_params = [{transform_indices = @transform_0, window_bounds = array<i64: 1, 312, 4>}, {pipeline_mode = #tpu.pipeline_mode<synchronous>, transform_indices = @transform_1, window_bounds = array<i64: 5, 1152, 128>}, {pipeline_mode = #tpu.pipeline_mode<synchronous>, transform_indices = @transform_2, window_bounds = array<i64: 5, 1, 128>}, {pipeline_mode = #tpu.pipeline_mode<synchronous>, transform_indices = @transform_3, window_bounds = array<i64: 272, 1>}, {transform_indices = @transform_4, window_bounds = array<i64: 1, 272, 4>}]} {
    %cst = arith.constant 0.000000e+00 : f32
    %0 = vector.broadcast %cst : f32 to vector<2x312x128xf32>
    %c0 = arith.constant 0 : index
    %c0_0 = arith.constant 0 : index
    %c0_1 = arith.constant 0 : index
    %1 = vector.load %arg6[%c0, %c0_0, %c0_1] : memref<2x312x128xf32, #tpu.memory_space<vmem>>, vector<2x312x128xf32>
    tpu.vector_store %arg6[%c0, %c0_0, %c0_1], %0 {strides = array<i32>} : memref<2x312x128xf32, #tpu.memory_space<vmem>>, vector<2x312x128xf32>,
    %c0_2 = arith.constant 0 : index
    %c0_3 = arith.constant 0 : index
    %c0_4 = arith.constant 0 : index
    %2 = vector.load %arg1[%c0_2, %c0_3, %c0_4] : memref<1x312x4xf32, #tpu.memory_space<vmem>>, vector<1x312x4xf32>
    %3 = vector.shape_cast %2 : vector<1x312x4xf32> to vector<312x4xf32>
    %c0_5 = arith.constant 0 : index
    %c0_6 = arith.constant 0 : index
    %c0_7 = arith.constant 0 : index
    %4 = vector.load %arg6[%c0_5, %c0_6, %c0_7] : memref<2x312x128xf32, #tpu.memory_space<vmem>>, vector<1x312x4xf32>
    %5 = vector.shape_cast %4 : vector<1x312x4xf32> to vector<312x4xf32>
    %6 = vector.shape_cast %3 : vector<312x4xf32> to vector<1x312x4xf32>
    tpu.vector_store %arg6[%c0_5, %c0_6, %c0_7], %6 {strides = array<i32>} : memref<2x312x128xf32, #tpu.memory_space<vmem>>, vector<1x312x4xf32>,
    %c0_i32 = arith.constant 0 : i32
    %c4_i32 = arith.constant 4 : i32
    %7 = arith.addi %c0_i32, %c4_i32 : i32
    %c1_i32 = arith.constant 1 : i32
    scf.for %arg7 = %c0_i32 to %7 step %c1_i32  : i32 {
      %c2_i32 = arith.constant 2 : i32
      %c0_i32_37 = arith.constant 0 : i32
      %47 = arith.cmpi eq, %c2_i32, %c0_i32_37 : i32
      %c1_i32_38 = arith.constant 1 : i32
      %48 = arith.select %47, %c1_i32_38, %c2_i32 : i32
      %49 = arith.remsi %arg7, %48 : i32
      %c0_i32_39 = arith.constant 0 : i32
      %50 = arith.cmpi ne, %49, %c0_i32_39 : i32
      %c0_i32_40 = arith.constant 0 : i32
      %51 = arith.cmpi slt, %49, %c0_i32_40 : i32
      %c0_i32_41 = arith.constant 0 : i32
      %52 = arith.cmpi slt, %48, %c0_i32_41 : i32
      %53 = arith.xori %51, %52 : i1
      %54 = arith.andi %53, %50 : i1
      %55 = arith.addi %49, %48 : i32
      %56 = arith.select %54, %55, %49 : i32
      %57 = arith.index_cast %56 : i32 to index
      %c0_42 = arith.constant 0 : index
      %c0_43 = arith.constant 0 : index
      %58 = vector.load %arg6[%57, %c0_42, %c0_43] : memref<2x312x128xf32, #tpu.memory_space<vmem>>, vector<1x272x128xf32>
      %59 = vector.shape_cast %58 : vector<1x272x128xf32> to vector<272x128xf32>
      %60 = arith.truncf %59 : vector<272x128xf32> to vector<272x128xbf16>
      %61 = arith.index_cast %56 : i32 to index
      %c1_44 = arith.constant 1 : index
      %c0_45 = arith.constant 0 : index
      %62 = vector.load %arg6[%61, %c1_44, %c0_45] : memref<2x312x128xf32, #tpu.memory_space<vmem>>, vector<1x272x128xf32>
      %63 = vector.shape_cast %62 : vector<1x272x128xf32> to vector<272x128xf32>
      %64 = arith.truncf %63 : vector<272x128xf32> to vector<272x128xbf16>
      %65 = arith.index_cast %56 : i32 to index
      %c2_46 = arith.constant 2 : index
      %c0_47 = arith.constant 0 : index
      %66 = vector.load %arg6[%65, %c2_46, %c0_47] : memref<2x312x128xf32, #tpu.memory_space<vmem>>, vector<1x272x128xf32>
      %67 = vector.shape_cast %66 : vector<1x272x128xf32> to vector<272x128xf32>
      %68 = arith.truncf %67 : vector<272x128xf32> to vector<272x128xbf16>
      %69 = arith.index_cast %56 : i32 to index
      %c17_48 = arith.constant 17 : index
      %c0_49 = arith.constant 0 : index
      %70 = vector.load %arg6[%69, %c17_48, %c0_49] : memref<2x312x128xf32, #tpu.memory_space<vmem>>, vector<1x272x128xf32>
      %71 = vector.shape_cast %70 : vector<1x272x128xf32> to vector<272x128xf32>
      %72 = arith.truncf %71 : vector<272x128xf32> to vector<272x128xbf16>
      %73 = arith.index_cast %56 : i32 to index
      %c18_50 = arith.constant 18 : index
      %c0_51 = arith.constant 0 : index
      %74 = vector.load %arg6[%73, %c18_50, %c0_51] : memref<2x312x128xf32, #tpu.memory_space<vmem>>, vector<1x272x128xf32>
      %75 = vector.shape_cast %74 : vector<1x272x128xf32> to vector<272x128xf32>
      %76 = arith.truncf %75 : vector<272x128xf32> to vector<272x128xbf16>
      %77 = arith.index_cast %56 : i32 to index
      %c19_52 = arith.constant 19 : index
      %c0_53 = arith.constant 0 : index
      %78 = vector.load %arg6[%77, %c19_52, %c0_53] : memref<2x312x128xf32, #tpu.memory_space<vmem>>, vector<1x272x128xf32>
      %79 = vector.shape_cast %78 : vector<1x272x128xf32> to vector<272x128xf32>
      %80 = arith.truncf %79 : vector<272x128xf32> to vector<272x128xbf16>
      %81 = arith.index_cast %56 : i32 to index
      %c34_54 = arith.constant 34 : index
      %c0_55 = arith.constant 0 : index
      %82 = vector.load %arg6[%81, %c34_54, %c0_55] : memref<2x312x128xf32, #tpu.memory_space<vmem>>, vector<1x272x128xf32>
      %83 = vector.shape_cast %82 : vector<1x272x128xf32> to vector<272x128xf32>
      %84 = arith.truncf %83 : vector<272x128xf32> to vector<272x128xbf16>
      %85 = arith.index_cast %56 : i32 to index
      %c35_56 = arith.constant 35 : index
      %c0_57 = arith.constant 0 : index
      %86 = vector.load %arg6[%85, %c35_56, %c0_57] : memref<2x312x128xf32, #tpu.memory_space<vmem>>, vector<1x272x128xf32>
      %87 = vector.shape_cast %86 : vector<1x272x128xf32> to vector<272x128xf32>
      %88 = arith.truncf %87 : vector<272x128xf32> to vector<272x128xbf16>
      %89 = arith.index_cast %56 : i32 to index
      %c36_58 = arith.constant 36 : index
      %c0_59 = arith.constant 0 : index
      %90 = vector.load %arg6[%89, %c36_58, %c0_59] : memref<2x312x128xf32, #tpu.memory_space<vmem>>, vector<1x272x128xf32>
      %91 = vector.shape_cast %90 : vector<1x272x128xf32> to vector<272x128xf32>
      %92 = arith.truncf %91 : vector<272x128xf32> to vector<272x128xbf16>
      %93 = tpu.concatenate %60, %64, %68, %72, %76, %80, %84, %88, %92 in 1 : vector<272x128xbf16>, vector<272x128xbf16>, vector<272x128xbf16>, vector<272x128xbf16>, vector<272x128xbf16>, vector<272x128xbf16>, vector<272x128xbf16>, vector<272x128xbf16>, vector<272x128xbf16> -> vector<272x1152xbf16>
      %94 = arith.index_cast %arg7 : i32 to index
      %c0_60 = arith.constant 0 : index
      %c0_61 = arith.constant 0 : index
      %95 = vector.load %arg2[%94, %c0_60, %c0_61] : memref<5x1152x128xbf16, #tpu.memory_space<vmem>>, vector<1x1152x128xbf16>
      %96 = vector.shape_cast %95 : vector<1x1152x128xbf16> to vector<1152x128xbf16>
      %cst_62 = arith.constant dense<0.000000e+00> : vector<272x128xf32>
      %97 = tpu.matmul %93, %96, %cst_62 {dimension_numbers = #tpu.dot_dimension_numbers<[1], [0], [0], [1], [0, 0, 1, 1], [], []>} : vector<272x1152xbf16>, vector<1152x128xbf16>, vector<272x128xf32> -> vector<272x128xf32>
      %98 = arith.index_cast %arg7 : i32 to index
      %c0_63 = arith.constant 0 : index
      %c0_64 = arith.constant 0 : index
      %99 = vector.load %arg3[%98, %c0_63, %c0_64] : memref<5x1x128xf32, #tpu.memory_space<vmem>>, vector<1x1x128xf32>
      %100 = vector.shape_cast %99 : vector<1x1x128xf32> to vector<1x128xf32>
      %101 = vector.broadcast %100 : vector<1x128xf32> to vector<272x128xf32>
      %102 = arith.addf %97, %101 : vector<272x128xf32>
      %cst_65 = arith.constant 0.000000e+00 : f32
      %103 = vector.broadcast %cst_65 : f32 to vector<272x128xf32>
      %104 = arith.cmpf oge, %102, %103 : vector<272x128xf32>
      %cst_66 = arith.constant 2.000000e-01 : f32
      %105 = vector.broadcast %cst_66 : f32 to vector<272x128xf32>
      %106 = arith.mulf %102, %105 : vector<272x128xf32>
      %107 = arith.select %104, %102, %106 : vector<272x128xi1>, vector<272x128xf32>
      %c0_67 = arith.constant 0 : index
      %c0_68 = arith.constant 0 : index
      %108 = vector.load %arg4[%c0_67, %c0_68] : memref<272x1xf32, #tpu.memory_space<vmem>>, vector<272x1xf32>
      %109 = vector.broadcast %108 : vector<272x1xf32> to vector<272x128xf32>
      %110 = arith.mulf %107, %109 : vector<272x128xf32>
      %c1_i32_69 = arith.constant 1 : i32
      %111 = arith.subi %c1_i32_69, %56 : i32
      %112 = arith.index_cast %111 : i32 to index
      %c18_70 = arith.constant 18 : index
      %c0_71 = arith.constant 0 : index
      %113 = vector.load %arg6[%112, %c18_70, %c0_71] : memref<2x312x128xf32, #tpu.memory_space<vmem>>, vector<1x272x128xf32>
      %114 = vector.shape_cast %113 : vector<1x272x128xf32> to vector<272x128xf32>
      %115 = vector.shape_cast %110 : vector<272x128xf32> to vector<1x272x128xf32>
      tpu.vector_store %arg6[%112, %c18_70, %c0_71], %115 {strides = array<i32>} : memref<2x312x128xf32, #tpu.memory_space<vmem>>, vector<1x272x128xf32>,
    }
    %c4_i32_8 = arith.constant 4 : i32
    %c0_9 = arith.constant 0 : index
    %c0_10 = arith.constant 0 : index
    %c0_11 = arith.constant 0 : index
    %8 = vector.load %arg6[%c0_9, %c0_10, %c0_11] : memref<2x312x128xf32, #tpu.memory_space<vmem>>, vector<1x272x128xf32>
    %9 = vector.shape_cast %8 : vector<1x272x128xf32> to vector<272x128xf32>
    %10 = arith.truncf %9 : vector<272x128xf32> to vector<272x128xbf16>
    %c0_12 = arith.constant 0 : index
    %c1 = arith.constant 1 : index
    %c0_13 = arith.constant 0 : index
    %11 = vector.load %arg6[%c0_12, %c1, %c0_13] : memref<2x312x128xf32, #tpu.memory_space<vmem>>, vector<1x272x128xf32>
    %12 = vector.shape_cast %11 : vector<1x272x128xf32> to vector<272x128xf32>
    %13 = arith.truncf %12 : vector<272x128xf32> to vector<272x128xbf16>
    %c0_14 = arith.constant 0 : index
    %c2 = arith.constant 2 : index
    %c0_15 = arith.constant 0 : index
    %14 = vector.load %arg6[%c0_14, %c2, %c0_15] : memref<2x312x128xf32, #tpu.memory_space<vmem>>, vector<1x272x128xf32>
    %15 = vector.shape_cast %14 : vector<1x272x128xf32> to vector<272x128xf32>
    %16 = arith.truncf %15 : vector<272x128xf32> to vector<272x128xbf16>
    %c0_16 = arith.constant 0 : index
    %c17 = arith.constant 17 : index
    %c0_17 = arith.constant 0 : index
    %17 = vector.load %arg6[%c0_16, %c17, %c0_17] : memref<2x312x128xf32, #tpu.memory_space<vmem>>, vector<1x272x128xf32>
    %18 = vector.shape_cast %17 : vector<1x272x128xf32> to vector<272x128xf32>
    %19 = arith.truncf %18 : vector<272x128xf32> to vector<272x128xbf16>
    %c0_18 = arith.constant 0 : index
    %c18 = arith.constant 18 : index
    %c0_19 = arith.constant 0 : index
    %20 = vector.load %arg6[%c0_18, %c18, %c0_19] : memref<2x312x128xf32, #tpu.memory_space<vmem>>, vector<1x272x128xf32>
    %21 = vector.shape_cast %20 : vector<1x272x128xf32> to vector<272x128xf32>
    %22 = arith.truncf %21 : vector<272x128xf32> to vector<272x128xbf16>
    %c0_20 = arith.constant 0 : index
    %c19 = arith.constant 19 : index
    %c0_21 = arith.constant 0 : index
    %23 = vector.load %arg6[%c0_20, %c19, %c0_21] : memref<2x312x128xf32, #tpu.memory_space<vmem>>, vector<1x272x128xf32>
    %24 = vector.shape_cast %23 : vector<1x272x128xf32> to vector<272x128xf32>
    %25 = arith.truncf %24 : vector<272x128xf32> to vector<272x128xbf16>
    %c0_22 = arith.constant 0 : index
    %c34 = arith.constant 34 : index
    %c0_23 = arith.constant 0 : index
    %26 = vector.load %arg6[%c0_22, %c34, %c0_23] : memref<2x312x128xf32, #tpu.memory_space<vmem>>, vector<1x272x128xf32>
    %27 = vector.shape_cast %26 : vector<1x272x128xf32> to vector<272x128xf32>
    %28 = arith.truncf %27 : vector<272x128xf32> to vector<272x128xbf16>
    %c0_24 = arith.constant 0 : index
    %c35 = arith.constant 35 : index
    %c0_25 = arith.constant 0 : index
    %29 = vector.load %arg6[%c0_24, %c35, %c0_25] : memref<2x312x128xf32, #tpu.memory_space<vmem>>, vector<1x272x128xf32>
    %30 = vector.shape_cast %29 : vector<1x272x128xf32> to vector<272x128xf32>
    %31 = arith.truncf %30 : vector<272x128xf32> to vector<272x128xbf16>
    %c0_26 = arith.constant 0 : index
    %c36 = arith.constant 36 : index
    %c0_27 = arith.constant 0 : index
    %32 = vector.load %arg6[%c0_26, %c36, %c0_27] : memref<2x312x128xf32, #tpu.memory_space<vmem>>, vector<1x272x128xf32>
    %33 = vector.shape_cast %32 : vector<1x272x128xf32> to vector<272x128xf32>
    %34 = arith.truncf %33 : vector<272x128xf32> to vector<272x128xbf16>
    %35 = tpu.concatenate %10, %13, %16, %19, %22, %25, %28, %31, %34 in 1 : vector<272x128xbf16>, vector<272x128xbf16>, vector<272x128xbf16>, vector<272x128xbf16>, vector<272x128xbf16>, vector<272x128xbf16>, vector<272x128xbf16>, vector<272x128xbf16>, vector<272x128xbf16> -> vector<272x1152xbf16>
    %c4 = arith.constant 4 : index
    %c0_28 = arith.constant 0 : index
    %c0_29 = arith.constant 0 : index
    %36 = vector.load %arg2[%c4, %c0_28, %c0_29] : memref<5x1152x128xbf16, #tpu.memory_space<vmem>>, vector<1x1152x128xbf16>
    %37 = vector.shape_cast %36 : vector<1x1152x128xbf16> to vector<1152x128xbf16>
    %cst_30 = arith.constant dense<0.000000e+00> : vector<272x128xf32>
    %38 = tpu.matmul %35, %37, %cst_30 {dimension_numbers = #tpu.dot_dimension_numbers<[1], [0], [0], [1], [0, 0, 1, 1], [], []>} : vector<272x1152xbf16>, vector<1152x128xbf16>, vector<272x128xf32> -> vector<272x128xf32>
    %c4_31 = arith.constant 4 : index
    %c0_32 = arith.constant 0 : index
    %c0_33 = arith.constant 0 : index
    %39 = vector.load %arg3[%c4_31, %c0_32, %c0_33] : memref<5x1x128xf32, #tpu.memory_space<vmem>>, vector<1x1x128xf32>
    %40 = vector.shape_cast %39 : vector<1x1x128xf32> to vector<1x128xf32>
    %41 = vector.broadcast %40 : vector<1x128xf32> to vector<272x128xf32>
    %42 = arith.addf %38, %41 : vector<272x128xf32>
    %43 = vector.extract_strided_slice %42 {offsets = [0, 0], sizes = [272, 4], strides = [1, 1]} : vector<272x128xf32> to vector<272x4xf32>
    %c0_34 = arith.constant 0 : index
    %c0_35 = arith.constant 0 : index
    %c0_36 = arith.constant 0 : index
    %44 = vector.load %arg5[%c0_34, %c0_35, %c0_36] : memref<1x272x4xf32, #tpu.memory_space<vmem>>, vector<1x272x4xf32>
    %45 = vector.shape_cast %44 : vector<1x272x4xf32> to vector<272x4xf32>
    %46 = vector.shape_cast %43 : vector<272x4xf32> to vector<1x272x4xf32>
    tpu.vector_store %arg5[%c0_34, %c0_35, %c0_36], %46 {strides = array<i32>} : memref<1x272x4xf32, #tpu.memory_space<vmem>>, vector<1x272x4xf32>,
    return
  }
  func.func @transform_0(%arg0: i32) -> (i32, i32, i32) {
    %c0_i32 = arith.constant 0 : i32
    %c0_i32_0 = arith.constant 0 : i32
    %c0_i32_1 = arith.constant 0 : i32
    return %arg0, %c0_i32, %c0_i32_0 : i32, i32, i32
  }
  func.func @transform_1(%arg0: i32) -> (i32, i32, i32) {
    %c0_i32 = arith.constant 0 : i32
    %c0_i32_0 = arith.constant 0 : i32
    %c0_i32_1 = arith.constant 0 : i32
    %c0_i32_2 = arith.constant 0 : i32
    return %c0_i32, %c0_i32_0, %c0_i32_1 : i32, i32, i32
  }
  func.func @transform_2(%arg0: i32) -> (i32, i32, i32) {
    %c0_i32 = arith.constant 0 : i32
    %c0_i32_0 = arith.constant 0 : i32
    %c0_i32_1 = arith.constant 0 : i32
    %c0_i32_2 = arith.constant 0 : i32
    return %c0_i32, %c0_i32_0, %c0_i32_1 : i32, i32, i32
  }
  func.func @transform_3(%arg0: i32) -> (i32, i32) {
    %c0_i32 = arith.constant 0 : i32
    %c0_i32_0 = arith.constant 0 : i32
    %c0_i32_1 = arith.constant 0 : i32
    return %c0_i32, %c0_i32_0 : i32, i32
  }
  func.func @transform_4(%arg0: i32) -> (i32, i32, i32) {
    %c0_i32 = arith.constant 0 : i32
    %c0_i32_0 = arith.constant 0 : i32
    %c0_i32_1 = arith.constant 0 : i32
    return %arg0, %c0_i32, %c0_i32_0 : i32, i32, i32
  }
}

</mosaic_0001>

<llo_original>
// kernel: dncnn_forward.1
$region0: #{dncnn_forward.1}
  #allocation0 [shape = 'u32[]', space=smem, size = 0x4, offset = 0x4, fixed_abs, tag = 'smem constant byte address 0x4 - core index']
  #allocation1 [shape = 'u32[144,128]{1,0:T(1,128)}', space=vmem, size = 0x12000, scoped, tag = 'internal scratch']
  #allocation2 [shape = 'f32[2,312,128]{2,1,0:T(8,128)}', space=vmem, size = 0x4e000, scoped, tag = 'scratch operand']
  %s0 = inlined_call_operand.vmem [shape: f32[2,312,4], index: 0, kind: input, shape index: {}]
  %s1 = inlined_call_operand.vmem [shape: bf16[5,1152,128], index: 1, kind: input, shape index: {}]
  %s2 = inlined_call_operand.vmem [shape: f32[5,1,128], index: 2, kind: input, shape index: {}]
  %s3 = inlined_call_operand.vmem [shape: f32[272,1], index: 3, kind: input, shape index: {}]
  %s4 = inlined_call_operand.vmem [shape: f32[2,272,4], index: 4, kind: output, shape index: {}]
  %s5 = sld [smem:[#allocation0]]
  $region56: #{dncnn_forward.1} parent=0
    _
  %s7 = ssub.s32 1, %s5
  %s8 = scalar_select 0, %s7, %s5
  loop: start=0, step=1, limit=4
  $region2: #{dncnn_forward.1} parent=0 // loop_pre_header
    _
  $region3: #{dncnn_forward.1} parent=0 // loop_header
    %s10 = sphi 0, %s14
    %p11 = scmp.ge.s32.totalorder %s10, 4
    %s20 = sphi 0, %s22
    %s23 = sphi 0, %s20
    %s24 = sphi 0, %s23
    %s40 = sphi 0, %s24
    %s44 = sphi 0, %s44
    %s46 = sphi 0, %s44
    %s47 = sphi 0, %s46
    %s61 = sphi 0, %s47
    %s65 = sphi 0, %s65
    %s67 = sphi 0, %s65
    %s68 = sphi 0, %s67
    %s82 = sphi 0, %s68
    %s86 = sphi 0, %s86
    %s88 = sphi 0, %s86
    %s89 = sphi 0, %s88
    %s103 = sphi 0, %s89
    %s109 = sphi 0, %s111
    %s112 = sphi 0, %s109
    %s113 = sphi 0, %s112
    %s129 = sphi 0, %s113
  $region4: #{dncnn_forward.1} parent=0 // loop_header_branch
    %13 = sbr.rel (%p11) target = $region8
  $region5: #{dncnn_forward.1} parent=0 // loop_body
    %s15 = ssub.s32 %s10, 1
    %s16 = ssub.s32 %s10, 2
    %s17 = sadd.s32 %s10, 1
    %s18 = ssub.s32 %s10, %s17
    %p19 = scmp.eq.s32.totalorder %s18, 0
    %s21 = sadd.s32 %s20, 1
    %s22 = scalar_select %p19, %s20, %s21
    %p25 = pneg %p19
    %p26 = scmp.eq.s32.totalorder %s10, 1
    %p27 = por %p25, %p26
    %p28 = scmp.ne.s32.totalorder %s20, %s23
    %p29 = scmp.eq.s32.totalorder %s10, 0
    %p30 = por %p28, %p29
    %p31 = scmp.ne.s32.totalorder %s20, %s23
    %p32 = scmp.eq.s32.totalorder %s15, 1
    %p33 = por %p31, %p32
    %p34 = scmp.ne.s32.totalorder %s23, %s24
    %p35 = scmp.eq.s32.totalorder %s15, 0
    %p36 = por %p34, %p35
    %p37 = scmp.ne.s32.totalorder %s23, %s24
    %p38 = scmp.eq.s32.totalorder %s16, 1
    %p39 = por %p37, %p38
    %p41 = scmp.ne.s32.totalorder %s24, %s40
    %p42 = scmp.eq.s32.totalorder %s16, 0
    %p43 = por %p41, %p42
    %s45 = sadd.s32 %s44, 1
    %p48 = scmp.eq.s32.totalorder %s10, 1
    %p49 = scmp.ne.s32.totalorder %s44, %s46
    %p50 = scmp.eq.s32.totalorder %s10, 0
    %p51 = por %p49, %p50
    %p52 = scmp.ne.s32.totalorder %s44, %s46
    %p53 = scmp.eq.s32.totalorder %s15, 1
    %p54 = por %p52, %p53
    %p55 = scmp.ne.s32.totalorder %s46, %s47
    %p56 = scmp.eq.s32.totalorder %s15, 0
    %p57 = por %p55, %p56
    %p58 = scmp.ne.s32.totalorder %s46, %s47
    %p59 = scmp.eq.s32.totalorder %s16, 1
    %p60 = por %p58, %p59
    %p62 = scmp.ne.s32.totalorder %s47, %s61
    %p63 = scmp.eq.s32.totalorder %s16, 0
    %p64 = por %p62, %p63
    %s66 = sadd.s32 %s65, 1
    %p69 = scmp.eq.s32.totalorder %s10, 1
    %p70 = scmp.ne.s32.totalorder %s65, %s67
    %p71 = scmp.eq.s32.totalorder %s10, 0
    %p72 = por %p70, %p71
    %p73 = scmp.ne.s32.totalorder %s65, %s67
    %p74 = scmp.eq.s32.totalorder %s15, 1
    %p75 = por %p73, %p74
    %p76 = scmp.ne.s32.totalorder %s67, %s68
    %p77 = scmp.eq.s32.totalorder %s15, 0
    %p78 = por %p76, %p77
    %p79 = scmp.ne.s32.totalorder %s67, %s68
    %p80 = scmp.eq.s32.totalorder %s16, 1
    %p81 = por %p79, %p80
    %p83 = scmp.ne.s32.totalorder %s68, %s82
    %p84 = scmp.eq.s32.totalorder %s16, 0
    %p85 = por %p83, %p84
    %s87 = sadd.s32 %s86, 1
    %p90 = scmp.eq.s32.totalorder %s10, 1
    %p91 = scmp.ne.s32.totalorder %s86, %s88
    %p92 = scmp.eq.s32.totalorder %s10, 0
    %p93 = por %p91, %p92
    %p94 = scmp.ne.s32.totalorder %s86, %s88
    %p95 = scmp.eq.s32.totalorder %s15, 1
    %p96 = por %p94, %p95
    %p97 = scmp.ne.s32.totalorder %s88, %s89
    %p98 = scmp.eq.s32.totalorder %s15, 0
    %p99 = por %p97, %p98
    %p100 = scmp.ne.s32.totalorder %s88, %s89
    %p101 = scmp.eq.s32.totalorder %s16, 1
    %p102 = por %p100, %p101
    %p104 = scmp.ne.s32.totalorder %s89, %s103
    %p105 = scmp.eq.s32.totalorder %s16, 0
    %p106 = por %p104, %p105
    %s107 = ssub.s32 %s10, %s17
    %p108 = scmp.eq.s32.totalorder %s107, 0
    %s110 = sadd.s32 %s109, 1
    %s111 = scalar_select %p108, %s109, %s110
    %p114 = pneg %p108
    %p115 = scmp.eq.s32.totalorder %s10, 1
    %p116 = por %p114, %p115
    %p117 = scmp.ne.s32.totalorder %s109, %s112
    %p118 = scmp.eq.s32.totalorder %s10, 0
    %p119 = por %p117, %p118
    %p120 = scmp.ne.s32.totalorder %s109, %s112
    %p121 = scmp.eq.s32.totalorder %s15, 1
    %p122 = por %p120, %p121
    %p123 = scmp.ne.s32.totalorder %s112, %s113
    %p124 = scmp.eq.s32.totalorder %s15, 0
    %p125 = por %p123, %p124
    %p126 = scmp.ne.s32.totalorder %s112, %s113
    %p127 = scmp.eq.s32.totalorder %s16, 1
    %p128 = por %p126, %p127
    %p130 = scmp.ne.s32.totalorder %s113, %s129
    %p131 = scmp.eq.s32.totalorder %s16, 0
    %p132 = por %p130, %p131
    %p133 = scmp.le.s32.totalorder 1, %s10
    %p134 = scmp.lt.s32.totalorder %s10, 3
    %p135 = pnand %p133, %p134
    %p136 = pneg %p135
    // Predicated region
    $region9: #{dncnn_forward.1} parent=5 // pred_check
      _
    $region10: #{dncnn_forward.1} parent=5 // pred_check_branch
      %138 = sbr.rel (%p135) target = $region12
    $region11: #{dncnn_forward.1} parent=5 // pred_region
      %s139 = ssub.s32 %s10, 1
      // Predicated region
      $region13: #{dncnn_forward.1} parent=11 // pred_check
        %p140 = pneg %p57
      $region14: #{dncnn_forward.1} parent=11 // pred_check_branch
        %142 = sbr.rel (%p140) target = $region16
      $region15: #{dncnn_forward.1} parent=11 // pred_region
        _
      $region16: #{dncnn_forward.1} parent=11 // pred_fallthru
        _
      // Predicated region
      $region17: #{dncnn_forward.1} parent=11 // pred_check
        %p143 = pneg %p78
      $region18: #{dncnn_forward.1} parent=11 // pred_check_branch
        %145 = sbr.rel (%p143) target = $region20
      $region19: #{dncnn_forward.1} parent=11 // pred_region
        _
      $region20: #{dncnn_forward.1} parent=11 // pred_fallthru
        _
      // Predicated region
      $region21: #{dncnn_forward.1} parent=11 // pred_check
        %p146 = pneg %p99
      $region22: #{dncnn_forward.1} parent=11 // pred_check_branch
        %148 = sbr.rel (%p146) target = $region24
      $region23: #{dncnn_forward.1} parent=11 // pred_region
        _
      $region24: #{dncnn_forward.1} parent=11 // pred_fallthru
        _
    $region12: #{dncnn_forward.1} parent=5 // pred_fallthru
      _
    %p149 = scmp.lt.s32.totalorder %s10, 2
    // Predicated region
    $region25: #{dncnn_forward.1} parent=5 // pred_check
      %p150 = pneg %p149
    $region26: #{dncnn_forward.1} parent=5 // pred_check_branch
      %152 = sbr.rel (%p150) target = $region28
    $region27: #{dncnn_forward.1} parent=5 // pred_region
      // Predicated region
      $region29: #{dncnn_forward.1} parent=27 // pred_check
        %p153 = pneg %p30
      $region30: #{dncnn_forward.1} parent=27 // pred_check_branch
        %155 = sbr.rel (%p153) target = $region32
      $region31: #{dncnn_forward.1} parent=27 // pred_region
        %p156 = scmp.lt.s32.totalorder %s10, 1
        %s157 = scalar_select %p156, %s10, 1
        %s158 = smul.addr %s157, 39
        %s159 = smul.addr %s158, 8
        %s160 = scalar_lea.vmem %s0, %s159
      $region32: #{dncnn_forward.1} parent=27 // pred_fallthru
        _
    $region28: #{dncnn_forward.1} parent=5 // pred_fallthru
      _
    %p161 = scmp.le.s32.totalorder 1, %s10
    %p162 = scmp.lt.s32.totalorder %s10, 3
    %p163 = pnand %p161, %p162
    %p164 = pneg %p163
    // Predicated region
    $region33: #{dncnn_forward.1} parent=5 // pred_check
      _
    $region34: #{dncnn_forward.1} parent=5 // pred_check_branch
      %166 = sbr.rel (%p163) target = $region36
    $region35: #{dncnn_forward.1} parent=5 // pred_region
      %s167 = ssub.s32 %s10, 1
      %p168 = scmp.lt.s32.totalorder %s15, 1
      %s169 = scalar_select %p168, %s15, 1
      %s170 = smul.addr %s169, 39
      %s171 = smul.addr %s170, 8
      %s172 = scalar_lea.vmem %s0, %s171
      %p173 = pneg %p36
      %p174 = pneg %p33
      %p175 = pneg %p57
      %p176 = pneg %p54
      %p177 = pneg %p78
      %p178 = pneg %p75
      %p179 = pneg %p99
      %p180 = pneg %p96
      %p181 = pneg %p125
      %p182 = pneg %p122
      %p183 = scmp.lt.s32.totalorder %s15, 1
      %s184 = scalar_select %p183, %s15, 1
      %s185 = smul.addr %s184, 34
      %s186 = smul.addr %s185, 8
      %s187 = scalar_lea.vmem %s4, %s186
      %p188 = scmp.lt.s32.totalorder %s15, 1
      %s189 = scalar_select %p188, %s15, 1
      %s190 = smul.addr %s189, 39
      %s191 = smul.addr %s190, 8
      %s192 = scalar_lea.vmem %s0, %s191
      %p193 = scmp.lt.s32.totalorder %s15, 1
      %s194 = scalar_select %p193, %s15, 1
      %s195 = smul.addr %s194, 34
      %s196 = smul.addr %s195, 8
      %s197 = scalar_lea.vmem %s4, %s196
      %199 = vst [vmem:[#allocation2] sm:$0xff] 0.0
      %200 = vst [vmem:[#allocation2 + $0x8] sm:$0xff] 0.0
      %201 = vst [vmem:[#allocation2 + $0x10] sm:$0xff] 0.0
      %202 = vst [vmem:[#allocation2 + $0x18] sm:$0xff] 0.0
      %203 = vst [vmem:[#allocation2 + $0x20] sm:$0xff] 0.0
      %204 = vst [vmem:[#allocation2 + $0x28] sm:$0xff] 0.0
      %205 = vst [vmem:[#allocation2 + $0x30] sm:$0xff] 0.0
      %206 = vst [vmem:[#allocation2 + $0x38] sm:$0xff] 0.0
      %207 = vst [vmem:[#allocation2 + $0x40] sm:$0xff] 0.0
      %208 = vst [vmem:[#allocation2 + $0x48] sm:$0xff] 0.0
      %209 = vst [vmem:[#allocation2 + $0x50] sm:$0xff] 0.0
      %210 = vst [vmem:[#allocation2 + $0x58] sm:$0xff] 0.0
      %211 = vst [vmem:[#allocation2 + $0x60] sm:$0xff] 0.0
      %212 = vst [vmem:[#allocation2 + $0x68] sm:$0xff] 0.0
      %213 = vst [vmem:[#allocation2 + $0x70] sm:$0xff] 0.0
      %214 = vst [vmem:[#allocation2 + $0x78] sm:$0xff] 0.0
      %215 = vst [vmem:[#allocation2 + $0x80] sm:$0xff] 0.0
      %216 = vst [vmem:[#allocation2 + $0x88] sm:$0xff] 0.0
      %217 = vst [vmem:[#allocation2 + $0x90] sm:$0xff] 0.0
      %218 = vst [vmem:[#allocation2 + $0x98] sm:$0xff] 0.0
      %219 = vst [vmem:[#allocation2 + $0xa0] sm:$0xff] 0.0
      %220 = vst [vmem:[#allocation2 + $0xa8] sm:$0xff] 0.0
      %221 = vst [vmem:[#allocation2 + $0xb0] sm:$0xff] 0.0
      %222 = vst [vmem:[#allocation2 + $0xb8] sm:$0xff] 0.0
      %223 = vst [vmem:[#allocation2 + $0xc0] sm:$0xff] 0.0
      %224 = vst [vmem:[#allocation2 + $0xc8] sm:$0xff] 0.0
      %225 = vst [vmem:[#allocation2 + $0xd0] sm:$0xff] 0.0
      %226 = vst [vmem:[#allocation2 + $0xd8] sm:$0xff] 0.0
      %227 = vst [vmem:[#allocation2 + $0xe0] sm:$0xff] 0.0
      %228 = vst [vmem:[#allocation2 + $0xe8] sm:$0xff] 0.0
      %229 = vst [vmem:[#allocation2 + $0xf0] sm:$0xff] 0.0
      %230 = vst [vmem:[#allocation2 + $0xf8] sm:$0xff] 0.0
      %231 = vst [vmem:[#allocation2 + $0x100] sm:$0xff] 0.0
      %232 = vst [vmem:[#allocation2 + $0x108] sm:$0xff] 0.0
      %233 = vst [vmem:[#allocation2 + $0x110] sm:$0xff] 0.0
      %234 = vst [vmem:[#allocation2 + $0x118] sm:$0xff] 0.0
      %235 = vst [vmem:[#allocation2 + $0x120] sm:$0xff] 0.0
      %236 = vst [vmem:[#allocation2 + $0x128] sm:$0xff] 0.0
      %237 = vst [vmem:[#allocation2 + $0x130] sm:$0xff] 0.0
      %238 = vst [vmem:[#allocation2 + $0x138] sm:$0xff] 0.0
      %239 = vst [vmem:[#allocation2 + $0x140] sm:$0xff] 0.0
      %240 = vst [vmem:[#allocation2 + $0x148] sm:$0xff] 0.0
      %241 = vst [vmem:[#allocation2 + $0x150] sm:$0xff] 0.0
      %242 = vst [vmem:[#allocation2 + $0x158] sm:$0xff] 0.0
      %243 = vst [vmem:[#allocation2 + $0x160] sm:$0xff] 0.0
      %244 = vst [vmem:[#allocation2 + $0x168] sm:$0xff] 0.0
      %245 = vst [vmem:[#allocation2 + $0x170] sm:$0xff] 0.0
      %246 = vst [vmem:[#allocation2 + $0x178] sm:$0xff] 0.0
      %247 = vst [vmem:[#allocation2 + $0x180] sm:$0xff] 0.0
      %248 = vst [vmem:[#allocation2 + $0x188] sm:$0xff] 0.0
      %249 = vst [vmem:[#allocation2 + $0x190] sm:$0xff] 0.0
      %250 = vst [vmem:[#allocation2 + $0x198] sm:$0xff] 0.0
      %251 = vst [vmem:[#allocation2 + $0x1a0] sm:$0xff] 0.0
      %252 = vst [vmem:[#allocation2 + $0x1a8] sm:$0xff] 0.0
      %253 = vst [vmem:[#allocation2 + $0x1b0] sm:$0xff] 0.0
      %254 = vst [vmem:[#allocation2 + $0x1b8] sm:$0xff] 0.0
      %255 = vst [vmem:[#allocation2 + $0x1c0] sm:$0xff] 0.0
      %256 = vst [vmem:[#allocation2 + $0x1c8] sm:$0xff] 0.0
      %257 = vst [vmem:[#allocation2 + $0x1d0] sm:$0xff] 0.0
      %258 = vst [vmem:[#allocation2 + $0x1d8] sm:$0xff] 0.0
      %259 = vst [vmem:[#allocation2 + $0x1e0] sm:$0xff] 0.0
      %260 = vst [vmem:[#allocation2 + $0x1e8] sm:$0xff] 0.0
      %261 = vst [vmem:[#allocation2 + $0x1f0] sm:$0xff] 0.0
      %262 = vst [vmem:[#allocation2 + $0x1f8] sm:$0xff] 0.0
      %263 = vst [vmem:[#allocation2 + $0x200] sm:$0xff] 0.0
      %264 = vst [vmem:[#allocation2 + $0x208] sm:$0xff] 0.0
      %265 = vst [vmem:[#allocation2 + $0x210] sm:$0xff] 0.0
      %266 = vst [vmem:[#allocation2 + $0x218] sm:$0xff] 0.0
      %267 = vst [vmem:[#allocation2 + $0x220] sm:$0xff] 0.0
      %268 = vst [vmem:[#allocation2 + $0x228] sm:$0xff] 0.0
      %269 = vst [vmem:[#allocation2 + $0x230] sm:$0xff] 0.0
      %270 = vst [vmem:[#allocation2 + $0x238] sm:$0xff] 0.0
      %271 = vst [vmem:[#allocation2 + $0x240] sm:$0xff] 0.0
      %272 = vst [vmem:[#allocation2 + $0x248] sm:$0xff] 0.0
      %273 = vst [vmem:[#allocation2 + $0x250] sm:$0xff] 0.0
      %274 = vst [vmem:[#allocation2 + $0x258] sm:$0xff] 0.0
      %275 = vst [vmem:[#allocation2 + $0x260] sm:$0xff] 0.0
      %276 = vst [vmem:[#allocation2 + $0x268] sm:$0xff] 0.0
      %v277 = vld [vmem:[%s192] sm:$0xff]
      %v278 = vld [vmem:[%s192 + $0x8] sm:$0xff]
      %v279 = vld [vmem:[%s192 + $0x10] sm:$0xff]
      %v280 = vld [vmem:[%s192 + $0x18] sm:$0xff]
      %v281 = vld [vmem:[%s192 + $0x20] sm:$0xff]
      %v282 = vld [vmem:[%s192 + $0x28] sm:$0xff]
      %v283 = vld [vmem:[%s192 + $0x30] sm:$0xff]
      %v284 = vld [vmem:[%s192 + $0x38] sm:$0xff]
      %v285 = vld [vmem:[%s192 + $0x40] sm:$0xff]
      %v286 = vld [vmem:[%s192 + $0x48] sm:$0xff]
      %v287 = vld [vmem:[%s192 + $0x50] sm:$0xff]
      %v288 = vld [vmem:[%s192 + $0x58] sm:$0xff]
      %v289 = vld [vmem:[%s192 + $0x60] sm:$0xff]
      %v290 = vld [vmem:[%s192 + $0x68] sm:$0xff]
      %v291 = vld [vmem:[%s192 + $0x70] sm:$0xff]
      %v292 = vld [vmem:[%s192 + $0x78] sm:$0xff]
      %v293 = vld [vmem:[%s192 + $0x80] sm:$0xff]
      %v294 = vld [vmem:[%s192 + $0x88] sm:$0xff]
      %v295 = vld [vmem:[%s192 + $0x90] sm:$0xff]
      %v296 = vld [vmem:[%s192 + $0x98] sm:$0xff]
      %v297 = vld [vmem:[%s192 + $0xa0] sm:$0xff]
      %v298 = vld [vmem:[%s192 + $0xa8] sm:$0xff]
      %v299 = vld [vmem:[%s192 + $0xb0] sm:$0xff]
      %v300 = vld [vmem:[%s192 + $0xb8] sm:$0xff]
      %v301 = vld [vmem:[%s192 + $0xc0] sm:$0xff]
      %v302 = vld [vmem:[%s192 + $0xc8] sm:$0xff]
      %v303 = vld [vmem:[%s192 + $0xd0] sm:$0xff]
      %v304 = vld [vmem:[%s192 + $0xd8] sm:$0xff]
      %v305 = vld [vmem:[%s192 + $0xe0] sm:$0xff]
      %v306 = vld [vmem:[%s192 + $0xe8] sm:$0xff]
      %v307 = vld [vmem:[%s192 + $0xf0] sm:$0xff]
      %v308 = vld [vmem:[%s192 + $0xf8] sm:$0xff]
      %v309 = vld [vmem:[%s192 + $0x100] sm:$0xff]
      %v310 = vld [vmem:[%s192 + $0x108] sm:$0xff]
      %v311 = vld [vmem:[%s192 + $0x110] sm:$0xff]
      %v312 = vld [vmem:[%s192 + $0x118] sm:$0xff]
      %v313 = vld [vmem:[%s192 + $0x120] sm:$0xff]
      %v314 = vld [vmem:[%s192 + $0x128] sm:$0xff]
      %v315 = vld [vmem:[%s192 + $0x130] sm:$0xff]
      %vm316 = vcmask 31744
      %317 = vst.msk [vmem:[#allocation2] sm:$0xff] %vm316, %v277
      %318 = vst.msk [vmem:[#allocation2 + $0x8] sm:$0xff] %vm316, %v278
      %319 = vst.msk [vmem:[#allocation2 + $0x10] sm:$0xff] %vm316, %v279
      %320 = vst.msk [vmem:[#allocation2 + $0x18] sm:$0xff] %vm316, %v280
      %321 = vst.msk [vmem:[#allocation2 + $0x20] sm:$0xff] %vm316, %v281
      %322 = vst.msk [vmem:[#allocation2 + $0x28] sm:$0xff] %vm316, %v282
      %323 = vst.msk [vmem:[#allocation2 + $0x30] sm:$0xff] %vm316, %v283
      %324 = vst.msk [vmem:[#allocation2 + $0x38] sm:$0xff] %vm316, %v284
      %325 = vst.msk [vmem:[#allocation2 + $0x40] sm:$0xff] %vm316, %v285
      %326 = vst.msk [vmem:[#allocation2 + $0x48] sm:$0xff] %vm316, %v286
      %327 = vst.msk [vmem:[#allocation2 + $0x50] sm:$0xff] %vm316, %v287
      %328 = vst.msk [vmem:[#allocation2 + $0x58] sm:$0xff] %vm316, %v288
      %329 = vst.msk [vmem:[#allocation2 + $0x60] sm:$0xff] %vm316, %v289
      %330 = vst.msk [vmem:[#allocation2 + $0x68] sm:$0xff] %vm316, %v290
      %331 = vst.msk [vmem:[#allocation2 + $0x70] sm:$0xff] %vm316, %v291
      %332 = vst.msk [vmem:[#allocation2 + $0x78] sm:$0xff] %vm316, %v292
      %333 = vst.msk [vmem:[#allocation2 + $0x80] sm:$0xff] %vm316, %v293
      %334 = vst.msk [vmem:[#allocation2 + $0x88] sm:$0xff] %vm316, %v294
      %335 = vst.msk [vmem:[#allocation2 + $0x90] sm:$0xff] %vm316, %v295
      %336 = vst.msk [vmem:[#allocation2 + $0x98] sm:$0xff] %vm316, %v296
      %337 = vst.msk [vmem:[#allocation2 + $0xa0] sm:$0xff] %vm316, %v297
      %338 = vst.msk [vmem:[#allocation2 + $0xa8] sm:$0xff] %vm316, %v298
      %339 = vst.msk [vmem:[#allocation2 + $0xb0] sm:$0xff] %vm316, %v299
      %340 = vst.msk [vmem:[#allocation2 + $0xb8] sm:$0xff] %vm316, %v300
      %341 = vst.msk [vmem:[#allocation2 + $0xc0] sm:$0xff] %vm316, %v301
      %342 = vst.msk [vmem:[#allocation2 + $0xc8] sm:$0xff] %vm316, %v302
      %343 = vst.msk [vmem:[#allocation2 + $0xd0] sm:$0xff] %vm316, %v303
      %344 = vst.msk [vmem:[#allocation2 + $0xd8] sm:$0xff] %vm316, %v304
      %345 = vst.msk [vmem:[#allocation2 + $0xe0] sm:$0xff] %vm316, %v305
      %346 = vst.msk [vmem:[#allocation2 + $0xe8] sm:$0xff] %vm316, %v306
      %347 = vst.msk [vmem:[#allocation2 + $0xf0] sm:$0xff] %vm316, %v307
      %348 = vst.msk [vmem:[#allocation2 + $0xf8] sm:$0xff] %vm316, %v308
      %349 = vst.msk [vmem:[#allocation2 + $0x100] sm:$0xff] %vm316, %v309
      %350 = vst.msk [vmem:[#allocation2 + $0x108] sm:$0xff] %vm316, %v310
      %351 = vst.msk [vmem:[#allocation2 + $0x110] sm:$0xff] %vm316, %v311
      %352 = vst.msk [vmem:[#allocation2 + $0x118] sm:$0xff] %vm316, %v312
      %353 = vst.msk [vmem:[#allocation2 + $0x120] sm:$0xff] %vm316, %v313
      %354 = vst.msk [vmem:[#allocation2 + $0x128] sm:$0xff] %vm316, %v314
      %355 = vst.msk [vmem:[#allocation2 + $0x130] sm:$0xff] %vm316, %v315
      loop: start=0, step=1, limit=4
      $region37: #{dncnn_forward.1} parent=35 // loop_pre_header
        _
      $region38: #{dncnn_forward.1} parent=35 // loop_header
        %s357 = sphi 0, %s361
        %p358 = scmp.ge.s32.totalorder %s357, 4
      $region39: #{dncnn_forward.1} parent=35 // loop_header_branch
        %360 = sbr.rel (%p358) target = $region43
      $region40: #{dncnn_forward.1} parent=35 // loop_body
        %p362 = scmp.lt.s32.totalorder %s357, 0
        %s363 = ssub.s32 0, %s357
        %s364 = scalar_select %p362, %s363, %s357
        %s365 = sand.u32 %s364, 1
        %s366 = ssub.s32 0, %s365
        %s367 = scalar_select %p362, %s366, %s365
        %p368 = scmp.ne.s32.totalorder %s367, 0
        %p369 = scmp.lt.s32.totalorder %s367, 0
        %p370 = pnand %p369, %p368
        %p371 = pneg %p370
        %s372 = sadd.s32 %s367, 2
        %s373 = scalar_select %p371, %s372, %s367
        %s374 = smul.u32 %s373, 312
        %s375 = scalar_lea.vmem [#allocation2], %s374
        %v376 = vld [vmem:[%s375] sm:$0xff]
        %v377 = vld [vmem:[%s375 + $0x8] sm:$0xff]
        %v378 = vld [vmem:[%s375 + $0x10] sm:$0xff]
        %v379 = vld [vmem:[%s375 + $0x18] sm:$0xff]
        %v380 = vld [vmem:[%s375 + $0x20] sm:$0xff]
        %v381 = vld [vmem:[%s375 + $0x28] sm:$0xff]
        %v382 = vld [vmem:[%s375 + $0x30] sm:$0xff]
        %v383 = vld [vmem:[%s375 + $0x38] sm:$0xff]
        %v384 = vld [vmem:[%s375 + $0x40] sm:$0xff]
        %v385 = vld [vmem:[%s375 + $0x48] sm:$0xff]
        %v386 = vld [vmem:[%s375 + $0x50] sm:$0xff]
        %v387 = vld [vmem:[%s375 + $0x58] sm:$0xff]
        %v388 = vld [vmem:[%s375 + $0x60] sm:$0xff]
        %v389 = vld [vmem:[%s375 + $0x68] sm:$0xff]
        %v390 = vld [vmem:[%s375 + $0x70] sm:$0xff]
        %v391 = vld [vmem:[%s375 + $0x78] sm:$0xff]
        %v392 = vld [vmem:[%s375 + $0x80] sm:$0xff]
        %v393 = vld [vmem:[%s375 + $0x88] sm:$0xff]
        %v394 = vld [vmem:[%s375 + $0x90] sm:$0xff]
        %v395 = vld [vmem:[%s375 + $0x98] sm:$0xff]
        %v396 = vld [vmem:[%s375 + $0xa0] sm:$0xff]
        %v397 = vld [vmem:[%s375 + $0xa8] sm:$0xff]
        %v398 = vld [vmem:[%s375 + $0xb0] sm:$0xff]
        %v399 = vld [vmem:[%s375 + $0xb8] sm:$0xff]
        %v400 = vld [vmem:[%s375 + $0xc0] sm:$0xff]
        %v401 = vld [vmem:[%s375 + $0xc8] sm:$0xff]
        %v402 = vld [vmem:[%s375 + $0xd0] sm:$0xff]
        %v403 = vld [vmem:[%s375 + $0xd8] sm:$0xff]
        %v404 = vld [vmem:[%s375 + $0xe0] sm:$0xff]
        %v405 = vld [vmem:[%s375 + $0xe8] sm:$0xff]
        %v406 = vld [vmem:[%s375 + $0xf0] sm:$0xff]
        %v407 = vld [vmem:[%s375 + $0xf8] sm:$0xff]
        %v408 = vld [vmem:[%s375 + $0x100] sm:$0xff]
        %v409 = vld [vmem:[%s375 + $0x108] sm:$0xff]
        %v410 = vpack.c.bf16 %v377, %v376
        %v411 = vpack.c.bf16 %v379, %v378
        %v412 = vpack.c.bf16 %v381, %v380
        %v413 = vpack.c.bf16 %v383, %v382
        %v414 = vpack.c.bf16 %v385, %v384
        %v415 = vpack.c.bf16 %v387, %v386
        %v416 = vpack.c.bf16 %v389, %v388
        %v417 = vpack.c.bf16 %v391, %v390
        %v418 = vpack.c.bf16 %v393, %v392
        %v419 = vpack.c.bf16 %v395, %v394
        %v420 = vpack.c.bf16 %v397, %v396
        %v421 = vpack.c.bf16 %v399, %v398
        %v422 = vpack.c.bf16 %v401, %v400
        %v423 = vpack.c.bf16 %v403, %v402
        %v424 = vpack.c.bf16 %v405, %v404
        %v425 = vpack.c.bf16 %v407, %v406
        %v426 = vpack.c.bf16 %v409, %v408
        %v427 = vld [vmem:[%s375 + $0x1] sm:$0xff]
        %v428 = vld [vmem:[%s375 + $0x9] sm:$0xff]
        %v429 = vld [vmem:[%s375 + $0x11] sm:$0xff]
        %v430 = vld [vmem:[%s375 + $0x19] sm:$0xff]
        %v431 = vld [vmem:[%s375 + $0x21] sm:$0xff]
        %v432 = vld [vmem:[%s375 + $0x29] sm:$0xff]
        %v433 = vld [vmem:[%s375 + $0x31] sm:$0xff]
        %v434 = vld [vmem:[%s375 + $0x39] sm:$0xff]
        %v435 = vld [vmem:[%s375 + $0x41] sm:$0xff]
        %v436 = vld [vmem:[%s375 + $0x49] sm:$0xff]
        %v437 = vld [vmem:[%s375 + $0x51] sm:$0xff]
        %v438 = vld [vmem:[%s375 + $0x59] sm:$0xff]
        %v439 = vld [vmem:[%s375 + $0x61] sm:$0xff]
        %v440 = vld [vmem:[%s375 + $0x69] sm:$0xff]
        %v441 = vld [vmem:[%s375 + $0x71] sm:$0xff]
        %v442 = vld [vmem:[%s375 + $0x79] sm:$0xff]
        %v443 = vld [vmem:[%s375 + $0x81] sm:$0xff]
        %v444 = vld [vmem:[%s375 + $0x89] sm:$0xff]
        %v445 = vld [vmem:[%s375 + $0x91] sm:$0xff]
        %v446 = vld [vmem:[%s375 + $0x99] sm:$0xff]
        %v447 = vld [vmem:[%s375 + $0xa1] sm:$0xff]
        %v448 = vld [vmem:[%s375 + $0xa9] sm:$0xff]
        %v449 = vld [vmem:[%s375 + $0xb1] sm:$0xff]
        %v450 = vld [vmem:[%s375 + $0xb9] sm:$0xff]
        %v451 = vld [vmem:[%s375 + $0xc1] sm:$0xff]
        %v452 = vld [vmem:[%s375 + $0xc9] sm:$0xff]
        %v453 = vld [vmem:[%s375 + $0xd1] sm:$0xff]
        %v454 = vld [vmem:[%s375 + $0xd9] sm:$0xff]
        %v455 = vld [vmem:[%s375 + $0xe1] sm:$0xff]
        %v456 = vld [vmem:[%s375 + $0xe9] sm:$0xff]
        %v457 = vld [vmem:[%s375 + $0xf1] sm:$0xff]
        %v458 = vld [vmem:[%s375 + $0xf9] sm:$0xff]
        %v459 = vld [vmem:[%s375 + $0x101] sm:$0xff]
        %v460 = vld [vmem:[%s375 + $0x109] sm:$0xff]
        %v461 = vpack.c.bf16 %v428, %v427
        %v462 = vpack.c.bf16 %v430, %v429
        %v463 = vpack.c.bf16 %v432, %v431
        %v464 = vpack.c.bf16 %v434, %v433
        %v465 = vpack.c.bf16 %v436, %v435
        %v466 = vpack.c.bf16 %v438, %v437
        %v467 = vpack.c.bf16 %v440, %v439
        %v468 = vpack.c.bf16 %v442, %v441
        %v469 = vpack.c.bf16 %v444, %v443
        %v470 = vpack.c.bf16 %v446, %v445
        %v471 = vpack.c.bf16 %v448, %v447
        %v472 = vpack.c.bf16 %v450, %v449
        %v473 = vpack.c.bf16 %v452, %v451
        %v474 = vpack.c.bf16 %v454, %v453
        %v475 = vpack.c.bf16 %v456, %v455
        %v476 = vpack.c.bf16 %v458, %v457
        %v477 = vpack.c.bf16 %v460, %v459
        %v478 = vld [vmem:[%s375 + $0x2] sm:$0xff]
        %v479 = vld [vmem:[%s375 + $0xa] sm:$0xff]
        %v480 = vld [vmem:[%s375 + $0x12] sm:$0xff]
        %v481 = vld [vmem:[%s375 + $0x1a] sm:$0xff]
        %v482 = vld [vmem:[%s375 + $0x22] sm:$0xff]
        %v483 = vld [vmem:[%s375 + $0x2a] sm:$0xff]
        %v484 = vld [vmem:[%s375 + $0x32] sm:$0xff]
        %v485 = vld [vmem:[%s375 + $0x3a] sm:$0xff]
        %v486 = vld [vmem:[%s375 + $0x42] sm:$0xff]
        %v487 = vld [vmem:[%s375 + $0x4a] sm:$0xff]
        %v488 = vld [vmem:[%s375 + $0x52] sm:$0xff]
        %v489 = vld [vmem:[%s375 + $0x5a] sm:$0xff]
        %v490 = vld [vmem:[%s375 + $0x62] sm:$0xff]
        %v491 = vld [vmem:[%s375 + $0x6a] sm:$0xff]
        %v492 = vld [vmem:[%s375 + $0x72] sm:$0xff]
        %v493 = vld [vmem:[%s375 + $0x7a] sm:$0xff]
        %v494 = vld [vmem:[%s375 + $0x82] sm:$0xff]
        %v495 = vld [vmem:[%s375 + $0x8a] sm:$0xff]
        %v496 = vld [vmem:[%s375 + $0x92] sm:$0xff]
        %v497 = vld [vmem:[%s375 + $0x9a] sm:$0xff]
        %v498 = vld [vmem:[%s375 + $0xa2] sm:$0xff]
        %v499 = vld [vmem:[%s375 + $0xaa] sm:$0xff]
        %v500 = vld [vmem:[%s375 + $0xb2] sm:$0xff]
        %v501 = vld [vmem:[%s375 + $0xba] sm:$0xff]
        %v502 = vld [vmem:[%s375 + $0xc2] sm:$0xff]
        %v503 = vld [vmem:[%s375 + $0xca] sm:$0xff]
        %v504 = vld [vmem:[%s375 + $0xd2] sm:$0xff]
        %v505 = vld [vmem:[%s375 + $0xda] sm:$0xff]
        %v506 = vld [vmem:[%s375 + $0xe2] sm:$0xff]
        %v507 = vld [vmem:[%s375 + $0xea] sm:$0xff]
        %v508 = vld [vmem:[%s375 + $0xf2] sm:$0xff]
        %v509 = vld [vmem:[%s375 + $0xfa] sm:$0xff]
        %v510 = vld [vmem:[%s375 + $0x102] sm:$0xff]
        %v511 = vld [vmem:[%s375 + $0x10a] sm:$0xff]
        %v512 = vpack.c.bf16 %v479, %v478
        %v513 = vpack.c.bf16 %v481, %v480
        %v514 = vpack.c.bf16 %v483, %v482
        %v515 = vpack.c.bf16 %v485, %v484
        %v516 = vpack.c.bf16 %v487, %v486
        %v517 = vpack.c.bf16 %v489, %v488
        %v518 = vpack.c.bf16 %v491, %v490
        %v519 = vpack.c.bf16 %v493, %v492
        %v520 = vpack.c.bf16 %v495, %v494
        %v521 = vpack.c.bf16 %v497, %v496
        %v522 = vpack.c.bf16 %v499, %v498
        %v523 = vpack.c.bf16 %v501, %v500
        %v524 = vpack.c.bf16 %v503, %v502
        %v525 = vpack.c.bf16 %v505, %v504
        %v526 = vpack.c.bf16 %v507, %v506
        %v527 = vpack.c.bf16 %v509, %v508
        %v528 = vpack.c.bf16 %v511, %v510
        %v529 = vld [vmem:[%s375 + $0x111] sm:$0xff]
        %v530 = vld [vmem:[%s375 + $0x119] sm:$0xff]
        %v531 = vpack.c.bf16 %v530, %v529
        %v532 = vld [vmem:[%s375 + $0x112] sm:$0xff]
        %v533 = vld [vmem:[%s375 + $0x11a] sm:$0xff]
        %v534 = vpack.c.bf16 %v533, %v532
        %v535 = vld [vmem:[%s375 + $0x13] sm:$0xff]
        %v536 = vld [vmem:[%s375 + $0x1b] sm:$0xff]
        %v537 = vld [vmem:[%s375 + $0x23] sm:$0xff]
        %v538 = vld [vmem:[%s375 + $0x2b] sm:$0xff]
        %v539 = vld [vmem:[%s375 + $0x33] sm:$0xff]
        %v540 = vld [vmem:[%s375 + $0x3b] sm:$0xff]
        %v541 = vld [vmem:[%s375 + $0x43] sm:$0xff]
        %v542 = vld [vmem:[%s375 + $0x4b] sm:$0xff]
        %v543 = vld [vmem:[%s375 + $0x53] sm:$0xff]
        %v544 = vld [vmem:[%s375 + $0x5b] sm:$0xff]
        %v545 = vld [vmem:[%s375 + $0x63] sm:$0xff]
        %v546 = vld [vmem:[%s375 + $0x6b] sm:$0xff]
        %v547 = vld [vmem:[%s375 + $0x73] sm:$0xff]
        %v548 = vld [vmem:[%s375 + $0x7b] sm:$0xff]
        %v549 = vld [vmem:[%s375 + $0x83] sm:$0xff]
        %v550 = vld [vmem:[%s375 + $0x8b] sm:$0xff]
        %v551 = vld [vmem:[%s375 + $0x93] sm:$0xff]
        %v552 = vld [vmem:[%s375 + $0x9b] sm:$0xff]
        %v553 = vld [vmem:[%s375 + $0xa3] sm:$0xff]
        %v554 = vld [vmem:[%s375 + $0xab] sm:$0xff]
        %v555 = vld [vmem:[%s375 + $0xb3] sm:$0xff]
        %v556 = vld [vmem:[%s375 + $0xbb] sm:$0xff]
        %v557 = vld [vmem:[%s375 + $0xc3] sm:$0xff]
        %v558 = vld [vmem:[%s375 + $0xcb] sm:$0xff]
        %v559 = vld [vmem:[%s375 + $0xd3] sm:$0xff]
        %v560 = vld [vmem:[%s375 + $0xdb] sm:$0xff]
        %v561 = vld [vmem:[%s375 + $0xe3] sm:$0xff]
        %v562 = vld [vmem:[%s375 + $0xeb] sm:$0xff]
        %v563 = vld [vmem:[%s375 + $0xf3] sm:$0xff]
        %v564 = vld [vmem:[%s375 + $0xfb] sm:$0xff]
        %v565 = vld [vmem:[%s375 + $0x103] sm:$0xff]
        %v566 = vld [vmem:[%s375 + $0x10b] sm:$0xff]
        %v567 = vld [vmem:[%s375 + $0x113] sm:$0xff]
        %v568 = vld [vmem:[%s375 + $0x11b] sm:$0xff]
        %v569 = vpack.c.bf16 %v536, %v535
        %v570 = vpack.c.bf16 %v538, %v537
        %v571 = vpack.c.bf16 %v540, %v539
        %v572 = vpack.c.bf16 %v542, %v541
        %v573 = vpack.c.bf16 %v544, %v543
        %v574 = vpack.c.bf16 %v546, %v545
        %v575 = vpack.c.bf16 %v548, %v547
        %v576 = vpack.c.bf16 %v550, %v549
        %v577 = vpack.c.bf16 %v552, %v551
        %v578 = vpack.c.bf16 %v554, %v553
        %v579 = vpack.c.bf16 %v556, %v555
        %v580 = vpack.c.bf16 %v558, %v557
        %v581 = vpack.c.bf16 %v560, %v559
        %v582 = vpack.c.bf16 %v562, %v561
        %v583 = vpack.c.bf16 %v564, %v563
        %v584 = vpack.c.bf16 %v566, %v565
        %v585 = vpack.c.bf16 %v568, %v567
        %v586 = vld [vmem:[%s375 + $0x122] sm:$0xff]
        %v587 = vld [vmem:[%s375 + $0x12a] sm:$0xff]
        %v588 = vpack.c.bf16 %v587, %v586
        %v589 = vld [vmem:[%s375 + $0x123] sm:$0xff]
        %v590 = vld [vmem:[%s375 + $0x12b] sm:$0xff]
        %v591 = vpack.c.bf16 %v590, %v589
        %v592 = vld [vmem:[%s375 + $0x24] sm:$0xff]
        %v593 = vld [vmem:[%s375 + $0x2c] sm:$0xff]
        %v594 = vld [vmem:[%s375 + $0x34] sm:$0xff]
        %v595 = vld [vmem:[%s375 + $0x3c] sm:$0xff]
        %v596 = vld [vmem:[%s375 + $0x44] sm:$0xff]
        %v597 = vld [vmem:[%s375 + $0x4c] sm:$0xff]
        %v598 = vld [vmem:[%s375 + $0x54] sm:$0xff]
        %v599 = vld [vmem:[%s375 + $0x5c] sm:$0xff]
        %v600 = vld [vmem:[%s375 + $0x64] sm:$0xff]
        %v601 = vld [vmem:[%s375 + $0x6c] sm:$0xff]
        %v602 = vld [vmem:[%s375 + $0x74] sm:$0xff]
        %v603 = vld [vmem:[%s375 + $0x7c] sm:$0xff]
        %v604 = vld [vmem:[%s375 + $0x84] sm:$0xff]
        %v605 = vld [vmem:[%s375 + $0x8c] sm:$0xff]
        %v606 = vld [vmem:[%s375 + $0x94] sm:$0xff]
        %v607 = vld [vmem:[%s375 + $0x9c] sm:$0xff]
        %v608 = vld [vmem:[%s375 + $0xa4] sm:$0xff]
        %v609 = vld [vmem:[%s375 + $0xac] sm:$0xff]
        %v610 = vld [vmem:[%s375 + $0xb4] sm:$0xff]
        %v611 = vld [vmem:[%s375 + $0xbc] sm:$0xff]
        %v612 = vld [vmem:[%s375 + $0xc4] sm:$0xff]
        %v613 = vld [vmem:[%s375 + $0xcc] sm:$0xff]
        %v614 = vld [vmem:[%s375 + $0xd4] sm:$0xff]
        %v615 = vld [vmem:[%s375 + $0xdc] sm:$0xff]
        %v616 = vld [vmem:[%s375 + $0xe4] sm:$0xff]
        %v617 = vld [vmem:[%s375 + $0xec] sm:$0xff]
        %v618 = vld [vmem:[%s375 + $0xf4] sm:$0xff]
        %v619 = vld [vmem:[%s375 + $0xfc] sm:$0xff]
        %v620 = vld [vmem:[%s375 + $0x104] sm:$0xff]
        %v621 = vld [vmem:[%s375 + $0x10c] sm:$0xff]
        %v622 = vld [vmem:[%s375 + $0x114] sm:$0xff]
        %v623 = vld [vmem:[%s375 + $0x11c] sm:$0xff]
        %v624 = vld [vmem:[%s375 + $0x124] sm:$0xff]
        %v625 = vld [vmem:[%s375 + $0x12c] sm:$0xff]
        %v626 = vpack.c.bf16 %v593, %v592
        %v627 = vpack.c.bf16 %v595, %v594
        %v628 = vpack.c.bf16 %v597, %v596
        %v629 = vpack.c.bf16 %v599, %v598
        %v630 = vpack.c.bf16 %v601, %v600
        %v631 = vpack.c.bf16 %v603, %v602
        %v632 = vpack.c.bf16 %v605, %v604
        %v633 = vpack.c.bf16 %v607, %v606
        %v634 = vpack.c.bf16 %v609, %v608
        %v635 = vpack.c.bf16 %v611, %v610
        %v636 = vpack.c.bf16 %v613, %v612
        %v637 = vpack.c.bf16 %v615, %v614
        %v638 = vpack.c.bf16 %v617, %v616
        %v639 = vpack.c.bf16 %v619, %v618
        %v640 = vpack.c.bf16 %v621, %v620
        %v641 = vpack.c.bf16 %v623, %v622
        %v642 = vpack.c.bf16 %v625, %v624
        %s643 = smul.u32 %s357, 144
        %s644 = smul.addr %s643, 4
        %s645 = scalar_lea.vmem %s1, %s644
        %v646 = vld [vmem:[%s645] sm:$0xf]
        %v647 = vld [vmem:[%s645 + $0x4] sm:$0xf]
        %v648 = vld [vmem:[%s645 + $0x8] sm:$0xf]
        %v649 = vld [vmem:[%s645 + $0xc] sm:$0xf]
        %v650 = vld [vmem:[%s645 + $0x10] sm:$0xf]
        %v651 = vld [vmem:[%s645 + $0x14] sm:$0xf]
        %v652 = vld [vmem:[%s645 + $0x18] sm:$0xf]
        %v653 = vld [vmem:[%s645 + $0x1c] sm:$0xf]
        %v654 = vld [vmem:[%s645 + $0x20] sm:$0xf]
        %v655 = vld [vmem:[%s645 + $0x24] sm:$0xf]
        %v656 = vld [vmem:[%s645 + $0x28] sm:$0xf]
        %v657 = vld [vmem:[%s645 + $0x2c] sm:$0xf]
        %v658 = vld [vmem:[%s645 + $0x30] sm:$0xf]
        %v659 = vld [vmem:[%s645 + $0x34] sm:$0xf]
        %v660 = vld [vmem:[%s645 + $0x38] sm:$0xf]
        %v661 = vld [vmem:[%s645 + $0x3c] sm:$0xf]
        %v662 = vld [vmem:[%s645 + $0x40] sm:$0xf]
        %v663 = vld [vmem:[%s645 + $0x44] sm:$0xf]
        %v664 = vld [vmem:[%s645 + $0x48] sm:$0xf]
        %v665 = vld [vmem:[%s645 + $0x4c] sm:$0xf]
        %v666 = vld [vmem:[%s645 + $0x50] sm:$0xf]
        %v667 = vld [vmem:[%s645 + $0x54] sm:$0xf]
        %v668 = vld [vmem:[%s645 + $0x58] sm:$0xf]
        %v669 = vld [vmem:[%s645 + $0x5c] sm:$0xf]
        %v670 = vld [vmem:[%s645 + $0x60] sm:$0xf]
        %v671 = vld [vmem:[%s645 + $0x64] sm:$0xf]
        %v672 = vld [vmem:[%s645 + $0x68] sm:$0xf]
        %v673 = vld [vmem:[%s645 + $0x6c] sm:$0xf]
        %v674 = vld [vmem:[%s645 + $0x70] sm:$0xf]
        %v675 = vld [vmem:[%s645 + $0x74] sm:$0xf]
        %v676 = vld [vmem:[%s645 + $0x78] sm:$0xf]
        %v677 = vld [vmem:[%s645 + $0x7c] sm:$0xf]
        %v678 = vld [vmem:[%s645 + $0x80] sm:$0xf]
        %v679 = vld [vmem:[%s645 + $0x84] sm:$0xf]
        %v680 = vld [vmem:[%s645 + $0x88] sm:$0xf]
        %v681 = vld [vmem:[%s645 + $0x8c] sm:$0xf]
        %v682 = vld [vmem:[%s645 + $0x90] sm:$0xf]
        %v683 = vld [vmem:[%s645 + $0x94] sm:$0xf]
        %v684 = vld [vmem:[%s645 + $0x98] sm:$0xf]
        %v685 = vld [vmem:[%s645 + $0x9c] sm:$0xf]
        %v686 = vld [vmem:[%s645 + $0xa0] sm:$0xf]
        %v687 = vld [vmem:[%s645 + $0xa4] sm:$0xf]
        %v688 = vld [vmem:[%s645 + $0xa8] sm:$0xf]
        %v689 = vld [vmem:[%s645 + $0xac] sm:$0xf]
        %v690 = vld [vmem:[%s645 + $0xb0] sm:$0xf]
        %v691 = vld [vmem:[%s645 + $0xb4] sm:$0xf]
        %v692 = vld [vmem:[%s645 + $0xb8] sm:$0xf]
        %v693 = vld [vmem:[%s645 + $0xbc] sm:$0xf]
        %v694 = vld [vmem:[%s645 + $0xc0] sm:$0xf]
        %v695 = vld [vmem:[%s645 + $0xc4] sm:$0xf]
        %v696 = vld [vmem:[%s645 + $0xc8] sm:$0xf]
        %v697 = vld [vmem:[%s645 + $0xcc] sm:$0xf]
        %v698 = vld [vmem:[%s645 + $0xd0] sm:$0xf]
        %v699 = vld [vmem:[%s645 + $0xd4] sm:$0xf]
        %v700 = vld [vmem:[%s645 + $0xd8] sm:$0xf]
        %v701 = vld [vmem:[%s645 + $0xdc] sm:$0xf]
        %v702 = vld [vmem:[%s645 + $0xe0] sm:$0xf]
        %v703 = vld [vmem:[%s645 + $0xe4] sm:$0xf]
        %v704 = vld [vmem:[%s645 + $0xe8] sm:$0xf]
        %v705 = vld [vmem:[%s645 + $0xec] sm:$0xf]
        %v706 = vld [vmem:[%s645 + $0xf0] sm:$0xf]
        %v707 = vld [vmem:[%s645 + $0xf4] sm:$0xf]
        %v708 = vld [vmem:[%s645 + $0xf8] sm:$0xf]
        %v709 = vld [vmem:[%s645 + $0xfc] sm:$0xf]
        %v710 = vld [vmem:[%s645 + $0x100] sm:$0xf]
        %v711 = vld [vmem:[%s645 + $0x104] sm:$0xf]
        %v712 = vld [vmem:[%s645 + $0x108] sm:$0xf]
        %v713 = vld [vmem:[%s645 + $0x10c] sm:$0xf]
        %v714 = vld [vmem:[%s645 + $0x110] sm:$0xf]
        %v715 = vld [vmem:[%s645 + $0x114] sm:$0xf]
        %v716 = vld [vmem:[%s645 + $0x118] sm:$0xf]
        %v717 = vld [vmem:[%s645 + $0x11c] sm:$0xf]
        %v718 = vld [vmem:[%s645 + $0x120] sm:$0xf]
        %v719 = vld [vmem:[%s645 + $0x124] sm:$0xf]
        %v720 = vld [vmem:[%s645 + $0x128] sm:$0xf]
        %v721 = vld [vmem:[%s645 + $0x12c] sm:$0xf]
        %v722 = vld [vmem:[%s645 + $0x130] sm:$0xf]
        %v723 = vld [vmem:[%s645 + $0x134] sm:$0xf]
        %v724 = vld [vmem:[%s645 + $0x138] sm:$0xf]
        %v725 = vld [vmem:[%s645 + $0x13c] sm:$0xf]
        %v726 = vld [vmem:[%s645 + $0x140] sm:$0xf]
        %v727 = vld [vmem:[%s645 + $0x144] sm:$0xf]
        %v728 = vld [vmem:[%s645 + $0x148] sm:$0xf]
        %v729 = vld [vmem:[%s645 + $0x14c] sm:$0xf]
        %v730 = vld [vmem:[%s645 + $0x150] sm:$0xf]
        %v731 = vld [vmem:[%s645 + $0x154] sm:$0xf]
        %v732 = vld [vmem:[%s645 + $0x158] sm:$0xf]
        %v733 = vld [vmem:[%s645 + $0x15c] sm:$0xf]
        %v734 = vld [vmem:[%s645 + $0x160] sm:$0xf]
        %v735 = vld [vmem:[%s645 + $0x164] sm:$0xf]
        %v736 = vld [vmem:[%s645 + $0x168] sm:$0xf]
        %v737 = vld [vmem:[%s645 + $0x16c] sm:$0xf]
        %v738 = vld [vmem:[%s645 + $0x170] sm:$0xf]
        %v739 = vld [vmem:[%s645 + $0x174] sm:$0xf]
        %v740 = vld [vmem:[%s645 + $0x178] sm:$0xf]
        %v741 = vld [vmem:[%s645 + $0x17c] sm:$0xf]
        %v742 = vld [vmem:[%s645 + $0x180] sm:$0xf]
        %v743 = vld [vmem:[%s645 + $0x184] sm:$0xf]
        %v744 = vld [vmem:[%s645 + $0x188] sm:$0xf]
        %v745 = vld [vmem:[%s645 + $0x18c] sm:$0xf]
        %v746 = vld [vmem:[%s645 + $0x190] sm:$0xf]
        %v747 = vld [vmem:[%s645 + $0x194] sm:$0xf]
        %v748 = vld [vmem:[%s645 + $0x198] sm:$0xf]
        %v749 = vld [vmem:[%s645 + $0x19c] sm:$0xf]
        %v750 = vld [vmem:[%s645 + $0x1a0] sm:$0xf]
        %v751 = vld [vmem:[%s645 + $0x1a4] sm:$0xf]
        %v752 = vld [vmem:[%s645 + $0x1a8] sm:$0xf]
        %v753 = vld [vmem:[%s645 + $0x1ac] sm:$0xf]
        %v754 = vld [vmem:[%s645 + $0x1b0] sm:$0xf]
        %v755 = vld [vmem:[%s645 + $0x1b4] sm:$0xf]
        %v756 = vld [vmem:[%s645 + $0x1b8] sm:$0xf]
        %v757 = vld [vmem:[%s645 + $0x1bc] sm:$0xf]
        %v758 = vld [vmem:[%s645 + $0x1c0] sm:$0xf]
        %v759 = vld [vmem:[%s645 + $0x1c4] sm:$0xf]
        %v760 = vld [vmem:[%s645 + $0x1c8] sm:$0xf]
        %v761 = vld [vmem:[%s645 + $0x1cc] sm:$0xf]
        %v762 = vld [vmem:[%s645 + $0x1d0] sm:$0xf]
        %v763 = vld [vmem:[%s645 + $0x1d4] sm:$0xf]
        %v764 = vld [vmem:[%s645 + $0x1d8] sm:$0xf]
        %v765 = vld [vmem:[%s645 + $0x1dc] sm:$0xf]
        %v766 = vld [vmem:[%s645 + $0x1e0] sm:$0xf]
        %v767 = vld [vmem:[%s645 + $0x1e4] sm:$0xf]
        %v768 = vld [vmem:[%s645 + $0x1e8] sm:$0xf]
        %v769 = vld [vmem:[%s645 + $0x1ec] sm:$0xf]
        %v770 = vld [vmem:[%s645 + $0x1f0] sm:$0xf]
        %v771 = vld [vmem:[%s645 + $0x1f4] sm:$0xf]
        %v772 = vld [vmem:[%s645 + $0x1f8] sm:$0xf]
        %v773 = vld [vmem:[%s645 + $0x1fc] sm:$0xf]
        %v774 = vld [vmem:[%s645 + $0x200] sm:$0xf]
        %v775 = vld [vmem:[%s645 + $0x204] sm:$0xf]
        %v776 = vld [vmem:[%s645 + $0x208] sm:$0xf]
        %v777 = vld [vmem:[%s645 + $0x20c] sm:$0xf]
        %v778 = vld [vmem:[%s645 + $0x210] sm:$0xf]
        %v779 = vld [vmem:[%s645 + $0x214] sm:$0xf]
        %v780 = vld [vmem:[%s645 + $0x218] sm:$0xf]
        %v781 = vld [vmem:[%s645 + $0x21c] sm:$0xf]
        %v782 = vld [vmem:[%s645 + $0x220] sm:$0xf]
        %v783 = vld [vmem:[%s645 + $0x224] sm:$0xf]
        %v784 = vld [vmem:[%s645 + $0x228] sm:$0xf]
        %v785 = vld [vmem:[%s645 + $0x22c] sm:$0xf]
        %v786 = vld [vmem:[%s645 + $0x230] sm:$0xf]
        %v787 = vld [vmem:[%s645 + $0x234] sm:$0xf]
        %v788 = vld [vmem:[%s645 + $0x238] sm:$0xf]
        %v789 = vld [vmem:[%s645 + $0x23c] sm:$0xf]
        %s790 = scalar_lea.vmem %s2, %s357
        %v791 = vld [vmem:[%s790] sm:$0x1]
        %v793 = vlaneseq
        %v794 = vshrl.u32 %v793, 7
        %v795 = vsub.s32 0, %v794
        %v796 = vrot.slane %v791, %v795
        %v942 = vunpack.c.l.b16 %v646
        %v943 = vunpack.c.l.b16 %v647
        %v944 = vunpack.c.l.b16 %v648
        %v945 = vunpack.c.l.b16 %v649
        %v946 = vunpack.c.l.b16 %v650
        %v947 = vunpack.c.l.b16 %v651
        %v948 = vunpack.c.l.b16 %v652
        %v949 = vunpack.c.l.b16 %v653
        %v950 = vunpack.c.l.b16 %v654
        %v951 = vunpack.c.l.b16 %v655
        %v952 = vunpack.c.l.b16 %v656
        %v953 = vunpack.c.l.b16 %v657
        %v954 = vunpack.c.l.b16 %v658
        %v955 = vunpack.c.l.b16 %v659
        %v956 = vunpack.c.l.b16 %v660
        %v957 = vunpack.c.l.b16 %v661
        %v958 = vunpack.c.l.b16 %v662
        %v959 = vunpack.c.l.b16 %v663
        %v960 = vunpack.c.l.b16 %v664
        %v961 = vunpack.c.l.b16 %v665
        %v962 = vunpack.c.l.b16 %v666
        %v963 = vunpack.c.l.b16 %v667
        %v964 = vunpack.c.l.b16 %v668
        %v965 = vunpack.c.l.b16 %v669
        %v966 = vunpack.c.l.b16 %v670
        %v967 = vunpack.c.l.b16 %v671
        %v968 = vunpack.c.l.b16 %v672
        %v969 = vunpack.c.l.b16 %v673
        %v970 = vunpack.c.l.b16 %v674
        %v971 = vunpack.c.l.b16 %v675
        %v972 = vunpack.c.l.b16 %v676
        %v973 = vunpack.c.l.b16 %v677
        %v974 = vunpack.c.l.b16 %v678
        %v975 = vunpack.c.l.b16 %v679
        %v976 = vunpack.c.l.b16 %v680
        %v977 = vunpack.c.l.b16 %v681
        %v978 = vunpack.c.l.b16 %v682
        %v979 = vunpack.c.l.b16 %v683
        %v980 = vunpack.c.l.b16 %v684
        %v981 = vunpack.c.l.b16 %v685
        %v982 = vunpack.c.l.b16 %v686
        %v983 = vunpack.c.l.b16 %v687
        %v984 = vunpack.c.l.b16 %v688
        %v985 = vunpack.c.l.b16 %v689
        %v986 = vunpack.c.l.b16 %v690
        %v987 = vunpack.c.l.b16 %v691
        %v988 = vunpack.c.l.b16 %v692
        %v989 = vunpack.c.l.b16 %v693
        %v990 = vunpack.c.l.b16 %v694
        %v991 = vunpack.c.l.b16 %v695
        %v992 = vunpack.c.l.b16 %v696
        %v993 = vunpack.c.l.b16 %v697
        %v994 = vunpack.c.l.b16 %v698
        %v995 = vunpack.c.l.b16 %v699
        %v996 = vunpack.c.l.b16 %v700
        %v997 = vunpack.c.l.b16 %v701
        %v998 = vunpack.c.l.b16 %v702
        %v999 = vunpack.c.l.b16 %v703
        %v1000 = vunpack.c.l.b16 %v704
        %v1001 = vunpack.c.l.b16 %v705
        %v1002 = vunpack.c.l.b16 %v706
        %v1003 = vunpack.c.l.b16 %v707
        %v1004 = vunpack.c.l.b16 %v708
        %v1005 = vunpack.c.l.b16 %v709
        %v1006 = vunpack.c.l.b16 %v710
        %v1007 = vunpack.c.l.b16 %v711
        %v1008 = vunpack.c.l.b16 %v712
        %v1009 = vunpack.c.l.b16 %v713
        %v1010 = vunpack.c.l.b16 %v714
        %v1011 = vunpack.c.l.b16 %v715
        %v1012 = vunpack.c.l.b16 %v716
        %v1013 = vunpack.c.l.b16 %v717
        %v1014 = vunpack.c.l.b16 %v718
        %v1015 = vunpack.c.l.b16 %v719
        %v1016 = vunpack.c.l.b16 %v720
        %v1017 = vunpack.c.l.b16 %v721
        %v1018 = vunpack.c.l.b16 %v722
        %v1019 = vunpack.c.l.b16 %v723
        %v1020 = vunpack.c.l.b16 %v724
        %v1021 = vunpack.c.l.b16 %v725
        %v1022 = vunpack.c.l.b16 %v726
        %v1023 = vunpack.c.l.b16 %v727
        %v1024 = vunpack.c.l.b16 %v728
        %v1025 = vunpack.c.l.b16 %v729
        %v1026 = vunpack.c.l.b16 %v730
        %v1027 = vunpack.c.l.b16 %v731
        %v1028 = vunpack.c.l.b16 %v732
        %v1029 = vunpack.c.l.b16 %v733
        %v1030 = vunpack.c.l.b16 %v734
        %v1031 = vunpack.c.l.b16 %v735
        %v1032 = vunpack.c.l.b16 %v736
        %v1033 = vunpack.c.l.b16 %v737
        %v1034 = vunpack.c.l.b16 %v738
        %v1035 = vunpack.c.l.b16 %v739
        %v1036 = vunpack.c.l.b16 %v740
        %v1037 = vunpack.c.l.b16 %v741
        %v1038 = vunpack.c.l.b16 %v742
        %v1039 = vunpack.c.l.b16 %v743
        %v1040 = vunpack.c.l.b16 %v744
        %v1041 = vunpack.c.l.b16 %v745
        %v1042 = vunpack.c.l.b16 %v746
        %v1043 = vunpack.c.l.b16 %v747
        %v1044 = vunpack.c.l.b16 %v748
        %v1045 = vunpack.c.l.b16 %v749
        %v1046 = vunpack.c.l.b16 %v750
        %v1047 = vunpack.c.l.b16 %v751
        %v1048 = vunpack.c.l.b16 %v752
        %v1049 = vunpack.c.l.b16 %v753
        %v1050 = vunpack.c.l.b16 %v754
        %v1051 = vunpack.c.l.b16 %v755
        %v1052 = vunpack.c.l.b16 %v756
        %v1053 = vunpack.c.l.b16 %v757
        %v1054 = vunpack.c.l.b16 %v758
        %v1055 = vunpack.c.l.b16 %v759
        %v1056 = vunpack.c.l.b16 %v760
        %v1057 = vunpack.c.l.b16 %v761
        %v1058 = vunpack.c.l.b16 %v762
        %v1059 = vunpack.c.l.b16 %v763
        %v1060 = vunpack.c.l.b16 %v764
        %v1061 = vunpack.c.l.b16 %v765
        %v1062 = vunpack.c.l.b16 %v766
        %v1063 = vunpack.c.l.b16 %v767
        %v1064 = vunpack.c.l.b16 %v768
        %v1065 = vunpack.c.l.b16 %v769
        %v1066 = vunpack.c.l.b16 %v770
        %v1067 = vunpack.c.l.b16 %v771
        %v1068 = vunpack.c.l.b16 %v772
        %v1069 = vunpack.c.l.b16 %v773
        %v1070 = vunpack.c.l.b16 %v774
        %v1071 = vunpack.c.l.b16 %v775
        %v1072 = vunpack.c.l.b16 %v776
        %v1073 = vunpack.c.l.b16 %v777
        %v1074 = vunpack.c.l.b16 %v778
        %v1075 = vunpack.c.l.b16 %v779
        %v1076 = vunpack.c.l.b16 %v780
        %v1077 = vunpack.c.l.b16 %v781
        %v1078 = vunpack.c.l.b16 %v782
        %v1079 = vunpack.c.l.b16 %v783
        %v1080 = vunpack.c.l.b16 %v784
        %v1081 = vunpack.c.l.b16 %v785
        %v1082 = vunpack.c.l.b16 %v786
        %v1083 = vunpack.c.l.b16 %v787
        %v1084 = vunpack.c.l.b16 %v788
        %v1085 = vunpack.c.l.b16 %v789
        %v1086 = vpack.c.b16 %v943, %v942
        %v1087 = vpack.c.b16 %v945, %v944
        %v1088 = vpack.c.b16 %v947, %v946
        %v1089 = vpack.c.b16 %v949, %v948
        %v1090 = vpack.c.b16 %v951, %v950
        %v1091 = vpack.c.b16 %v953, %v952
        %v1092 = vpack.c.b16 %v955, %v954
        %v1093 = vpack.c.b16 %v957, %v956
        %v1094 = vpack.c.b16 %v959, %v958
        %v1095 = vpack.c.b16 %v961, %v960
        %v1096 = vpack.c.b16 %v963, %v962
        %v1097 = vpack.c.b16 %v965, %v964
        %v1098 = vpack.c.b16 %v967, %v966
        %v1099 = vpack.c.b16 %v969, %v968
        %v1100 = vpack.c.b16 %v971, %v970
        %v1101 = vpack.c.b16 %v973, %v972
        %v1102 = vpack.c.b16 %v975, %v974
        %v1103 = vpack.c.b16 %v977, %v976
        %v1104 = vpack.c.b16 %v979, %v978
        %v1105 = vpack.c.b16 %v981, %v980
        %v1106 = vpack.c.b16 %v983, %v982
        %v1107 = vpack.c.b16 %v985, %v984
        %v1108 = vpack.c.b16 %v987, %v986
        %v1109 = vpack.c.b16 %v989, %v988
        %v1110 = vpack.c.b16 %v991, %v990
        %v1111 = vpack.c.b16 %v993, %v992
        %v1112 = vpack.c.b16 %v995, %v994
        %v1113 = vpack.c.b16 %v997, %v996
        %v1114 = vpack.c.b16 %v999, %v998
        %v1115 = vpack.c.b16 %v1001, %v1000
        %v1116 = vpack.c.b16 %v1003, %v1002
        %v1117 = vpack.c.b16 %v1005, %v1004
        %v1118 = vpack.c.b16 %v1007, %v1006
        %v1119 = vpack.c.b16 %v1009, %v1008
        %v1120 = vpack.c.b16 %v1011, %v1010
        %v1121 = vpack.c.b16 %v1013, %v1012
        %v1122 = vpack.c.b16 %v1015, %v1014
        %v1123 = vpack.c.b16 %v1017, %v1016
        %v1124 = vpack.c.b16 %v1019, %v1018
        %v1125 = vpack.c.b16 %v1021, %v1020
        %v1126 = vpack.c.b16 %v1023, %v1022
        %v1127 = vpack.c.b16 %v1025, %v1024
        %v1128 = vpack.c.b16 %v1027, %v1026
        %v1129 = vpack.c.b16 %v1029, %v1028
        %v1130 = vpack.c.b16 %v1031, %v1030
        %v1131 = vpack.c.b16 %v1033, %v1032
        %v1132 = vpack.c.b16 %v1035, %v1034
        %v1133 = vpack.c.b16 %v1037, %v1036
        %v1134 = vpack.c.b16 %v1039, %v1038
        %v1135 = vpack.c.b16 %v1041, %v1040
        %v1136 = vpack.c.b16 %v1043, %v1042
        %v1137 = vpack.c.b16 %v1045, %v1044
        %v1138 = vpack.c.b16 %v1047, %v1046
        %v1139 = vpack.c.b16 %v1049, %v1048
        %v1140 = vpack.c.b16 %v1051, %v1050
        %v1141 = vpack.c.b16 %v1053, %v1052
        %v1142 = vpack.c.b16 %v1055, %v1054
        %v1143 = vpack.c.b16 %v1057, %v1056
        %v1144 = vpack.c.b16 %v1059, %v1058
        %v1145 = vpack.c.b16 %v1061, %v1060
        %v1146 = vpack.c.b16 %v1063, %v1062
        %v1147 = vpack.c.b16 %v1065, %v1064
        %v1148 = vpack.c.b16 %v1067, %v1066
        %v1149 = vpack.c.b16 %v1069, %v1068
        %v1150 = vpack.c.b16 %v1071, %v1070
        %v1151 = vpack.c.b16 %v1073, %v1072
        %v1152 = vpack.c.b16 %v1075, %v1074
        %v1153 = vpack.c.b16 %v1077, %v1076
        %v1154 = vpack.c.b16 %v1079, %v1078
        %v1155 = vpack.c.b16 %v1081, %v1080
        %v1156 = vpack.c.b16 %v1083, %v1082
        %v1157 = vpack.c.b16 %v1085, %v1084
        %1230 = vmatprep.subr.bf16.mxu0 0
        %1231 = vmatpush1.bf16.msra.mxu0 %v1086
        %1232 = vmatprep.subr.bf16.mxu0 0
        %1233 = vmatpush1.bf16.msra.mxu0 %v1087
        %1234 = vmatprep.subr.bf16.mxu0 0
        %1235 = vmatpush1.bf16.msra.mxu0 %v1088
        %1236 = vmatprep.subr.bf16.mxu0 0
        %1237 = vmatpush1.bf16.msra.mxu0 %v1089
        %1238 = vmatprep.subr.bf16.mxu0 0
        %1239 = vmatpush1.bf16.msra.mxu0 %v1090
        %1240 = vmatprep.subr.bf16.mxu0 0
        %1241 = vmatpush1.bf16.msra.mxu0 %v1091
        %1242 = vmatprep.subr.bf16.mxu0 0
        %1243 = vmatpush1.bf16.msra.mxu0 %v1092
        %1244 = vmatprep.subr.bf16.mxu0 0
        %1245 = vmatpush1.bf16.msra.mxu0 %v1093
        %1246 = vmatprep.subr.bf16.mxu0 0
        %1247 = vmatpush1.bf16.msra.mxu0 %v1094
        %1248 = vmatprep.subr.bf16.mxu0 0
        %1249 = vmatpush1.bf16.msra.mxu0 %v1095
        %1250 = vmatprep.subr.bf16.mxu0 0
        %1251 = vmatpush1.bf16.msra.mxu0 %v1096
        %1252 = vmatprep.subr.bf16.mxu0 0
        %1253 = vmatpush1.bf16.msra.mxu0 %v1097
        %1254 = vmatprep.subr.bf16.mxu0 0
        %1255 = vmatpush1.bf16.msra.mxu0 %v1098
        %1256 = vmatprep.subr.bf16.mxu0 0
        %1257 = vmatpush1.bf16.msra.mxu0 %v1099
        %1258 = vmatprep.subr.bf16.mxu0 0
        %1259 = vmatpush1.bf16.msra.mxu0 %v1100
        %1260 = vmatprep.subr.bf16.mxu0 0
        %1261 = vmatpush1.bf16.msra.mxu0 %v1101
        %1262 = vmatprep.mubr.bf16.mxu0 %v461
        %1263 = vmatmul.mubr.bf16.gmra.mrb[0].mxu0 %v410
        %v1264 = vpop.f32.mrb[0].mxu0
        %v1265 = vadd.f32 %v796, %v1264
        %v1266 = vpop.f32.mrb[0].mxu0
        %v1267 = vpop.f32.mrb[0].mxu0
        %v1268 = vadd.f32 %v796, %v1267
        %v1269 = vpop.f32.mrb[0].mxu0
        %1270 = vmatprep.mubr.bf16.mxu0 %v462
        %1271 = vmatmul.mubr.bf16.gmra.mrb[0].mxu0 %v411
        %v1272 = vpop.f32.mrb[0].mxu0
        %v1273 = vadd.f32 %v796, %v1272
        %v1274 = vpop.f32.mrb[0].mxu0
        %v1275 = vpop.f32.mrb[0].mxu0
        %v1276 = vadd.f32 %v796, %v1275
        %v1277 = vpop.f32.mrb[0].mxu0
        %1278 = vmatprep.mubr.bf16.mxu0 %v463
        %1279 = vmatmul.mubr.bf16.gmra.mrb[0].mxu0 %v412
        %v1280 = vpop.f32.mrb[0].mxu0
        %v1281 = vadd.f32 %v796, %v1280
        %v1282 = vpop.f32.mrb[0].mxu0
        %v1283 = vpop.f32.mrb[0].mxu0
        %v1284 = vadd.f32 %v796, %v1283
        %v1285 = vpop.f32.mrb[0].mxu0
        %1286 = vmatprep.mubr.bf16.mxu0 %v464
        %1287 = vmatmul.mubr.bf16.gmra.mrb[0].mxu0 %v413
        %v1288 = vpop.f32.mrb[0].mxu0
        %v1289 = vadd.f32 %v796, %v1288
        %v1290 = vpop.f32.mrb[0].mxu0
        %v1291 = vpop.f32.mrb[0].mxu0
        %v1292 = vadd.f32 %v796, %v1291
        %v1293 = vpop.f32.mrb[0].mxu0
        %1294 = vmatprep.mubr.bf16.mxu0 %v465
        %1295 = vmatmul.mubr.bf16.gmra.mrb[0].mxu0 %v414
        %v1296 = vpop.f32.mrb[0].mxu0
        %v1297 = vadd.f32 %v796, %v1296
        %v1298 = vpop.f32.mrb[0].mxu0
        %v1299 = vpop.f32.mrb[0].mxu0
        %v1300 = vadd.f32 %v796, %v1299
        %v1301 = vpop.f32.mrb[0].mxu0
        %1302 = vmatprep.mubr.bf16.mxu0 %v466
        %1303 = vmatmul.mubr.bf16.gmra.mrb[0].mxu0 %v415
        %v1304 = vpop.f32.mrb[0].mxu0
        %v1305 = vadd.f32 %v796, %v1304
        %v1306 = vpop.f32.mrb[0].mxu0
        %v1307 = vpop.f32.mrb[0].mxu0
        %v1308 = vadd.f32 %v796, %v1307
        %v1309 = vpop.f32.mrb[0].mxu0
        %1310 = vmatprep.mubr.bf16.mxu0 %v467
        %1311 = vmatmul.mubr.bf16.gmra.mrb[0].mxu0 %v416
        %v1312 = vpop.f32.mrb[0].mxu0
        %v1313 = vadd.f32 %v796, %v1312
        %v1314 = vpop.f32.mrb[0].mxu0
        %v1315 = vpop.f32.mrb[0].mxu0
        %v1316 = vadd.f32 %v796, %v1315
        %v1317 = vpop.f32.mrb[0].mxu0
        %1318 = vmatprep.mubr.bf16.mxu0 %v468
        %1319 = vmatmul.mubr.bf16.gmra.mrb[0].mxu0 %v417
        %v1320 = vpop.f32.mrb[0].mxu0
        %v1321 = vadd.f32 %v796, %v1320
        %v1322 = vpop.f32.mrb[0].mxu0
        %v1323 = vpop.f32.mrb[0].mxu0
        %v1324 = vadd.f32 %v796, %v1323
        %v1325 = vpop.f32.mrb[0].mxu0
        %1326 = vmatprep.mubr.bf16.mxu0 %v469
        %1327 = vmatmul.mubr.bf16.gmra.mrb[0].mxu0 %v418
        %v1328 = vpop.f32.mrb[0].mxu0
        %v1329 = vadd.f32 %v796, %v1328
        %v1330 = vpop.f32.mrb[0].mxu0
        %v1331 = vpop.f32.mrb[0].mxu0
        %v1332 = vadd.f32 %v796, %v1331
        %v1333 = vpop.f32.mrb[0].mxu0
        %1334 = vmatprep.mubr.bf16.mxu0 %v470
        %1335 = vmatmul.mubr.bf16.gmra.mrb[0].mxu0 %v419
        %v1336 = vpop.f32.mrb[0].mxu0
        %v1337 = vadd.f32 %v796, %v1336
        %v1338 = vpop.f32.mrb[0].mxu0
        %v1339 = vpop.f32.mrb[0].mxu0
        %v1340 = vadd.f32 %v796, %v1339
        %v1341 = vpop.f32.mrb[0].mxu0
        %1342 = vmatprep.mubr.bf16.mxu0 %v471
        %1343 = vmatmul.mubr.bf16.gmra.mrb[0].mxu0 %v420
        %v1344 = vpop.f32.mrb[0].mxu0
        %v1345 = vadd.f32 %v796, %v1344
        %v1346 = vpop.f32.mrb[0].mxu0
        %v1347 = vpop.f32.mrb[0].mxu0
        %v1348 = vadd.f32 %v796, %v1347
        %v1349 = vpop.f32.mrb[0].mxu0
        %1350 = vmatprep.mubr.bf16.mxu0 %v472
        %1351 = vmatmul.mubr.bf16.gmra.mrb[0].mxu0 %v421
        %v1352 = vpop.f32.mrb[0].mxu0
        %v1353 = vadd.f32 %v796, %v1352
        %v1354 = vpop.f32.mrb[0].mxu0
        %v1355 = vpop.f32.mrb[0].mxu0
        %v1356 = vadd.f32 %v796, %v1355
        %v1357 = vpop.f32.mrb[0].mxu0
        %1358 = vmatprep.mubr.bf16.mxu0 %v473
        %1359 = vmatmul.mubr.bf16.gmra.mrb[0].mxu0 %v422
        %v1360 = vpop.f32.mrb[0].mxu0
        %v1361 = vadd.f32 %v796, %v1360
        %v1362 = vpop.f32.mrb[0].mxu0
        %v1363 = vpop.f32.mrb[0].mxu0
        %v1364 = vadd.f32 %v796, %v1363
        %v1365 = vpop.f32.mrb[0].mxu0
        %1366 = vmatprep.mubr.bf16.mxu0 %v474
        %1367 = vmatmul.mubr.bf16.gmra.mrb[0].mxu0 %v423
        %v1368 = vpop.f32.mrb[0].mxu0
        %v1369 = vadd.f32 %v796, %v1368
        %v1370 = vpop.f32.mrb[0].mxu0
        %v1371 = vpop.f32.mrb[0].mxu0
        %v1372 = vadd.f32 %v796, %v1371
        %v1373 = vpop.f32.mrb[0].mxu0
        %1374 = vmatprep.mubr.bf16.mxu0 %v475
        %1375 = vmatmul.mubr.bf16.gmra.mrb[0].mxu0 %v424
        %v1376 = vpop.f32.mrb[0].mxu0
        %v1377 = vadd.f32 %v796, %v1376
        %v1378 = vpop.f32.mrb[0].mxu0
        %v1379 = vpop.f32.mrb[0].mxu0
        %v1380 = vadd.f32 %v796, %v1379
        %v1381 = vpop.f32.mrb[0].mxu0
        %1382 = vmatprep.mubr.bf16.mxu0 %v476
        %1383 = vmatmul.mubr.bf16.gmra.mrb[0].mxu0 %v425
        %v1384 = vpop.f32.mrb[0].mxu0
        %v1385 = vadd.f32 %v796, %v1384
        %v1386 = vpop.f32.mrb[0].mxu0
        %v1387 = vpop.f32.mrb[0].mxu0
        %v1388 = vadd.f32 %v796, %v1387
        %v1389 = vpop.f32.mrb[0].mxu0
        %1390 = vmatprep.mubr.bf16.mxu0 %v477
        %1391 = vmatmul.mubr.bf16.gmra.mrb[0].mxu0 %v426
        %v1392 = vpop.f32.mrb[0].mxu0
        %v1393 = vadd.f32 %v796, %v1392
        %v1394 = vpop.f32.mrb[0].mxu0
        %v1395 = vpop.f32.mrb[0].mxu0
        %v1396 = vadd.f32 %v796, %v1395
        %v1397 = vpop.f32.mrb[0].mxu0
        %1398 = vdwg.mxu0
        %1399 = vmatprep.subr.bf16.mxu0 0
        %1400 = vmatpush1.bf16.msra.mxu0 %v1102
        %1401 = vmatprep.subr.bf16.mxu0 0
        %1402 = vmatpush1.bf16.msra.mxu0 %v1103
        %1403 = vmatprep.subr.bf16.mxu0 0
        %1404 = vmatpush1.bf16.msra.mxu0 %v1104
        %1405 = vmatprep.subr.bf16.mxu0 0
        %1406 = vmatpush1.bf16.msra.mxu0 %v1105
        %1407 = vmatprep.subr.bf16.mxu0 0
        %1408 = vmatpush1.bf16.msra.mxu0 %v1106
        %1409 = vmatprep.subr.bf16.mxu0 0
        %1410 = vmatpush1.bf16.msra.mxu0 %v1107
        %1411 = vmatprep.subr.bf16.mxu0 0
        %1412 = vmatpush1.bf16.msra.mxu0 %v1108
        %1413 = vmatprep.subr.bf16.mxu0 0
        %1414 = vmatpush1.bf16.msra.mxu0 %v1109
        %1415 = vmatprep.subr.bf16.mxu0 0
        %1416 = vmatpush1.bf16.msra.mxu0 %v1110
        %1417 = vmatprep.subr.bf16.mxu0 0
        %1418 = vmatpush1.bf16.msra.mxu0 %v1111
        %1419 = vmatprep.subr.bf16.mxu0 0
        %1420 = vmatpush1.bf16.msra.mxu0 %v1112
        %1421 = vmatprep.subr.bf16.mxu0 0
        %1422 = vmatpush1.bf16.msra.mxu0 %v1113
        %1423 = vmatprep.subr.bf16.mxu0 0
        %1424 = vmatpush1.bf16.msra.mxu0 %v1114
        %1425 = vmatprep.subr.bf16.mxu0 0
        %1426 = vmatpush1.bf16.msra.mxu0 %v1115
        %1427 = vmatprep.subr.bf16.mxu0 0
        %1428 = vmatpush1.bf16.msra.mxu0 %v1116
        %1429 = vmatprep.subr.bf16.mxu0 0
        %1430 = vmatpush1.bf16.msra.mxu0 %v1117
        %1431 = vmatprep.mubr.bf16.mxu0 %v462
        %1432 = vmatmul.mubr.bf16.gmra.mrb[0].mxu0 %v512
        %v1433 = vpop.f32.mrb[0].mxu0
        %v1434 = vadd.f32 %v1265, %v1433
        %v1435 = vpop.f32.mrb[0].mxu0
        %v1436 = vpop.f32.mrb[0].mxu0
        %v1437 = vadd.f32 %v1268, %v1436
        %v1438 = vpop.f32.mrb[0].mxu0
        %1439 = vmatprep.mubr.bf16.mxu0 %v463
        %1440 = vmatmul.mubr.bf16.gmra.mrb[0].mxu0 %v513
        %v1441 = vpop.f32.mrb[0].mxu0
        %v1442 = vadd.f32 %v1273, %v1441
        %v1443 = vpop.f32.mrb[0].mxu0
        %v1444 = vpop.f32.mrb[0].mxu0
        %v1445 = vadd.f32 %v1276, %v1444
        %v1446 = vpop.f32.mrb[0].mxu0
        %1447 = vmatprep.mubr.bf16.mxu0 %v464
        %1448 = vmatmul.mubr.bf16.gmra.mrb[0].mxu0 %v514
        %v1449 = vpop.f32.mrb[0].mxu0
        %v1450 = vadd.f32 %v1281, %v1449
        %v1451 = vpop.f32.mrb[0].mxu0
        %v1452 = vpop.f32.mrb[0].mxu0
        %v1453 = vadd.f32 %v1284, %v1452
        %v1454 = vpop.f32.mrb[0].mxu0
        %1455 = vmatprep.mubr.bf16.mxu0 %v465
        %1456 = vmatmul.mubr.bf16.gmra.mrb[0].mxu0 %v515
        %v1457 = vpop.f32.mrb[0].mxu0
        %v1458 = vadd.f32 %v1289, %v1457
        %v1459 = vpop.f32.mrb[0].mxu0
        %v1460 = vpop.f32.mrb[0].mxu0
        %v1461 = vadd.f32 %v1292, %v1460
        %v1462 = vpop.f32.mrb[0].mxu0
        %1463 = vmatprep.mubr.bf16.mxu0 %v466
        %1464 = vmatmul.mubr.bf16.gmra.mrb[0].mxu0 %v516
        %v1465 = vpop.f32.mrb[0].mxu0
        %v1466 = vadd.f32 %v1297, %v1465
        %v1467 = vpop.f32.mrb[0].mxu0
        %v1468 = vpop.f32.mrb[0].mxu0
        %v1469 = vadd.f32 %v1300, %v1468
        %v1470 = vpop.f32.mrb[0].mxu0
        %1471 = vmatprep.mubr.bf16.mxu0 %v467
        %1472 = vmatmul.mubr.bf16.gmra.mrb[0].mxu0 %v517
        %v1473 = vpop.f32.mrb[0].mxu0
        %v1474 = vadd.f32 %v1305, %v1473
        %v1475 = vpop.f32.mrb[0].mxu0
        %v1476 = vpop.f32.mrb[0].mxu0
        %v1477 = vadd.f32 %v1308, %v1476
        %v1478 = vpop.f32.mrb[0].mxu0
        %1479 = vmatprep.mubr.bf16.mxu0 %v468
        %1480 = vmatmul.mubr.bf16.gmra.mrb[0].mxu0 %v518
        %v1481 = vpop.f32.mrb[0].mxu0
        %v1482 = vadd.f32 %v1313, %v1481
        %v1483 = vpop.f32.mrb[0].mxu0
        %v1484 = vpop.f32.mrb[0].mxu0
        %v1485 = vadd.f32 %v1316, %v1484
        %v1486 = vpop.f32.mrb[0].mxu0
        %1487 = vmatprep.mubr.bf16.mxu0 %v469
        %1488 = vmatmul.mubr.bf16.gmra.mrb[0].mxu0 %v519
        %v1489 = vpop.f32.mrb[0].mxu0
        %v1490 = vadd.f32 %v1321, %v1489
        %v1491 = vpop.f32.mrb[0].mxu0
        %v1492 = vpop.f32.mrb[0].mxu0
        %v1493 = vadd.f32 %v1324, %v1492
        %v1494 = vpop.f32.mrb[0].mxu0
        %1495 = vmatprep.mubr.bf16.mxu0 %v470
        %1496 = vmatmul.mubr.bf16.gmra.mrb[0].mxu0 %v520
        %v1497 = vpop.f32.mrb[0].mxu0
        %v1498 = vadd.f32 %v1329, %v1497
        %v1499 = vpop.f32.mrb[0].mxu0
        %v1500 = vpop.f32.mrb[0].mxu0
        %v1501 = vadd.f32 %v1332, %v1500
        %v1502 = vpop.f32.mrb[0].mxu0
        %1503 = vmatprep.mubr.bf16.mxu0 %v471
        %1504 = vmatmul.mubr.bf16.gmra.mrb[0].mxu0 %v521
        %v1505 = vpop.f32.mrb[0].mxu0
        %v1506 = vadd.f32 %v1337, %v1505
        %v1507 = vpop.f32.mrb[0].mxu0
        %v1508 = vpop.f32.mrb[0].mxu0
        %v1509 = vadd.f32 %v1340, %v1508
        %v1510 = vpop.f32.mrb[0].mxu0
        %1511 = vmatprep.mubr.bf16.mxu0 %v472
        %1512 = vmatmul.mubr.bf16.gmra.mrb[0].mxu0 %v522
        %v1513 = vpop.f32.mrb[0].mxu0
        %v1514 = vadd.f32 %v1345, %v1513
        %v1515 = vpop.f32.mrb[0].mxu0
        %v1516 = vpop.f32.mrb[0].mxu0
        %v1517 = vadd.f32 %v1348, %v1516
        %v1518 = vpop.f32.mrb[0].mxu0
        %1519 = vmatprep.mubr.bf16.mxu0 %v473
        %1520 = vmatmul.mubr.bf16.gmra.mrb[0].mxu0 %v523
        %v1521 = vpop.f32.mrb[0].mxu0
        %v1522 = vadd.f32 %v1353, %v1521
        %v1523 = vpop.f32.mrb[0].mxu0
        %v1524 = vpop.f32.mrb[0].mxu0
        %v1525 = vadd.f32 %v1356, %v1524
        %v1526 = vpop.f32.mrb[0].mxu0
        %1527 = vmatprep.mubr.bf16.mxu0 %v474
        %1528 = vmatmul.mubr.bf16.gmra.mrb[0].mxu0 %v524
        %v1529 = vpop.f32.mrb[0].mxu0
        %v1530 = vadd.f32 %v1361, %v1529
        %v1531 = vpop.f32.mrb[0].mxu0
        %v1532 = vpop.f32.mrb[0].mxu0
        %v1533 = vadd.f32 %v1364, %v1532
        %v1534 = vpop.f32.mrb[0].mxu0
        %1535 = vmatprep.mubr.bf16.mxu0 %v475
        %1536 = vmatmul.mubr.bf16.gmra.mrb[0].mxu0 %v525
        %v1537 = vpop.f32.mrb[0].mxu0
        %v1538 = vadd.f32 %v1369, %v1537
        %v1539 = vpop.f32.mrb[0].mxu0
        %v1540 = vpop.f32.mrb[0].mxu0
        %v1541 = vadd.f32 %v1372, %v1540
        %v1542 = vpop.f32.mrb[0].mxu0
        %1543 = vmatprep.mubr.bf16.mxu0 %v476
        %1544 = vmatmul.mubr.bf16.gmra.mrb[0].mxu0 %v526
        %v1545 = vpop.f32.mrb[0].mxu0
        %v1546 = vadd.f32 %v1377, %v1545
        %v1547 = vpop.f32.mrb[0].mxu0
        %v1548 = vpop.f32.mrb[0].mxu0
        %v1549 = vadd.f32 %v1380, %v1548
        %v1550 = vpop.f32.mrb[0].mxu0
        %1551 = vmatprep.mubr.bf16.mxu0 %v477
        %1552 = vmatmul.mubr.bf16.gmra.mrb[0].mxu0 %v527
        %v1553 = vpop.f32.mrb[0].mxu0
        %v1554 = vadd.f32 %v1385, %v1553
        %v1555 = vpop.f32.mrb[0].mxu0
        %v1556 = vpop.f32.mrb[0].mxu0
        %v1557 = vadd.f32 %v1388, %v1556
        %v1558 = vpop.f32.mrb[0].mxu0
        %1559 = vmatprep.mubr.bf16.mxu0 %v531
        %1560 = vmatmul.mubr.bf16.gmra.mrb[0].mxu0 %v528
        %v1561 = vpop.f32.mrb[0].mxu0
        %v1562 = vadd.f32 %v1393, %v1561
        %v1563 = vpop.f32.mrb[0].mxu0
        %v1564 = vpop.f32.mrb[0].mxu0
        %v1565 = vadd.f32 %v1396, %v1564
        %v1566 = vpop.f32.mrb[0].mxu0
        %1567 = vdwg.mxu0
        %1568 = vmatprep.subr.bf16.mxu0 0
        %1569 = vmatpush1.bf16.msra.mxu0 %v1118
        %1570 = vmatprep.subr.bf16.mxu0 0
        %1571 = vmatpush1.bf16.msra.mxu0 %v1119
        %1572 = vmatprep.subr.bf16.mxu0 0
        %1573 = vmatpush1.bf16.msra.mxu0 %v1120
        %1574 = vmatprep.subr.bf16.mxu0 0
        %1575 = vmatpush1.bf16.msra.mxu0 %v1121
        %1576 = vmatprep.subr.bf16.mxu0 0
        %1577 = vmatpush1.bf16.msra.mxu0 %v1122
        %1578 = vmatprep.subr.bf16.mxu0 0
        %1579 = vmatpush1.bf16.msra.mxu0 %v1123
        %1580 = vmatprep.subr.bf16.mxu0 0
        %1581 = vmatpush1.bf16.msra.mxu0 %v1124
        %1582 = vmatprep.subr.bf16.mxu0 0
        %1583 = vmatpush1.bf16.msra.mxu0 %v1125
        %1584 = vmatprep.subr.bf16.mxu0 0
        %1585 = vmatpush1.bf16.msra.mxu0 %v1126
        %1586 = vmatprep.subr.bf16.mxu0 0
        %1587 = vmatpush1.bf16.msra.mxu0 %v1127
        %1588 = vmatprep.subr.bf16.mxu0 0
        %1589 = vmatpush1.bf16.msra.mxu0 %v1128
        %1590 = vmatprep.subr.bf16.mxu0 0
        %1591 = vmatpush1.bf16.msra.mxu0 %v1129
        %1592 = vmatprep.subr.bf16.mxu0 0
        %1593 = vmatpush1.bf16.msra.mxu0 %v1130
        %1594 = vmatprep.subr.bf16.mxu0 0
        %1595 = vmatpush1.bf16.msra.mxu0 %v1131
        %1596 = vmatprep.subr.bf16.mxu0 0
        %1597 = vmatpush1.bf16.msra.mxu0 %v1132
        %1598 = vmatprep.subr.bf16.mxu0 0
        %1599 = vmatpush1.bf16.msra.mxu0 %v1133
        %1600 = vmatprep.mubr.bf16.mxu0 %v569
        %1601 = vmatmul.mubr.bf16.gmra.mrb[0].mxu0 %v513
        %v1602 = vpop.f32.mrb[0].mxu0
        %v1603 = vadd.f32 %v1434, %v1602
        %v1604 = vpop.f32.mrb[0].mxu0
        %v1605 = vpop.f32.mrb[0].mxu0
        %v1606 = vadd.f32 %v1437, %v1605
        %v1607 = vpop.f32.mrb[0].mxu0
        %1608 = vmatprep.mubr.bf16.mxu0 %v570
        %1609 = vmatmul.mubr.bf16.gmra.mrb[0].mxu0 %v514
        %v1610 = vpop.f32.mrb[0].mxu0
        %v1611 = vadd.f32 %v1442, %v1610
        %v1612 = vpop.f32.mrb[0].mxu0
        %v1613 = vpop.f32.mrb[0].mxu0
        %v1614 = vadd.f32 %v1445, %v1613
        %v1615 = vpop.f32.mrb[0].mxu0
        %1616 = vmatprep.mubr.bf16.mxu0 %v571
        %1617 = vmatmul.mubr.bf16.gmra.mrb[0].mxu0 %v515
        %v1618 = vpop.f32.mrb[0].mxu0
        %v1619 = vadd.f32 %v1450, %v1618
        %v1620 = vpop.f32.mrb[0].mxu0
        %v1621 = vpop.f32.mrb[0].mxu0
        %v1622 = vadd.f32 %v1453, %v1621
        %v1623 = vpop.f32.mrb[0].mxu0
        %1624 = vmatprep.mubr.bf16.mxu0 %v572
        %1625 = vmatmul.mubr.bf16.gmra.mrb[0].mxu0 %v516
        %v1626 = vpop.f32.mrb[0].mxu0
        %v1627 = vadd.f32 %v1458, %v1626
        %v1628 = vpop.f32.mrb[0].mxu0
        %v1629 = vpop.f32.mrb[0].mxu0
        %v1630 = vadd.f32 %v1461, %v1629
        %v1631 = vpop.f32.mrb[0].mxu0
        %1632 = vmatprep.mubr.bf16.mxu0 %v573
        %1633 = vmatmul.mubr.bf16.gmra.mrb[0].mxu0 %v517
        %v1634 = vpop.f32.mrb[0].mxu0
        %v1635 = vadd.f32 %v1466, %v1634
        %v1636 = vpop.f32.mrb[0].mxu0
        %v1637 = vpop.f32.mrb[0].mxu0
        %v1638 = vadd.f32 %v1469, %v1637
        %v1639 = vpop.f32.mrb[0].mxu0
        %1640 = vmatprep.mubr.bf16.mxu0 %v574
        %1641 = vmatmul.mubr.bf16.gmra.mrb[0].mxu0 %v518
        %v1642 = vpop.f32.mrb[0].mxu0
        %v1643 = vadd.f32 %v1474, %v1642
        %v1644 = vpop.f32.mrb[0].mxu0
        %v1645 = vpop.f32.mrb[0].mxu0
        %v1646 = vadd.f32 %v1477, %v1645
        %v1647 = vpop.f32.mrb[0].mxu0
        %1648 = vmatprep.mubr.bf16.mxu0 %v575
        %1649 = vmatmul.mubr.bf16.gmra.mrb[0].mxu0 %v519
        %v1650 = vpop.f32.mrb[0].mxu0
        %v1651 = vadd.f32 %v1482, %v1650
        %v1652 = vpop.f32.mrb[0].mxu0
        %v1653 = vpop.f32.mrb[0].mxu0
        %v1654 = vadd.f32 %v1485, %v1653
        %v1655 = vpop.f32.mrb[0].mxu0
        %1656 = vmatprep.mubr.bf16.mxu0 %v576
        %1657 = vmatmul.mubr.bf16.gmra.mrb[0].mxu0 %v520
        %v1658 = vpop.f32.mrb[0].mxu0
        %v1659 = vadd.f32 %v1490, %v1658
        %v1660 = vpop.f32.mrb[0].mxu0
        %v1661 = vpop.f32.mrb[0].mxu0
        %v1662 = vadd.f32 %v1493, %v1661
        %v1663 = vpop.f32.mrb[0].mxu0
        %1664 = vmatprep.mubr.bf16.mxu0 %v577
        %1665 = vmatmul.mubr.bf16.gmra.mrb[0].mxu0 %v521
        %v1666 = vpop.f32.mrb[0].mxu0
        %v1667 = vadd.f32 %v1498, %v1666
        %v1668 = vpop.f32.mrb[0].mxu0
        %v1669 = vpop.f32.mrb[0].mxu0
        %v1670 = vadd.f32 %v1501, %v1669
        %v1671 = vpop.f32.mrb[0].mxu0
        %1672 = vmatprep.mubr.bf16.mxu0 %v578
        %1673 = vmatmul.mubr.bf16.gmra.mrb[0].mxu0 %v522
        %v1674 = vpop.f32.mrb[0].mxu0
        %v1675 = vadd.f32 %v1506, %v1674
        %v1676 = vpop.f32.mrb[0].mxu0
        %v1677 = vpop.f32.mrb[0].mxu0
        %v1678 = vadd.f32 %v1509, %v1677
        %v1679 = vpop.f32.mrb[0].mxu0
        %1680 = vmatprep.mubr.bf16.mxu0 %v579
        %1681 = vmatmul.mubr.bf16.gmra.mrb[0].mxu0 %v523
        %v1682 = vpop.f32.mrb[0].mxu0
        %v1683 = vadd.f32 %v1514, %v1682
        %v1684 = vpop.f32.mrb[0].mxu0
        %v1685 = vpop.f32.mrb[0].mxu0
        %v1686 = vadd.f32 %v1517, %v1685
        %v1687 = vpop.f32.mrb[0].mxu0
        %1688 = vmatprep.mubr.bf16.mxu0 %v580
        %1689 = vmatmul.mubr.bf16.gmra.mrb[0].mxu0 %v524
        %v1690 = vpop.f32.mrb[0].mxu0
        %v1691 = vadd.f32 %v1522, %v1690
        %v1692 = vpop.f32.mrb[0].mxu0
        %v1693 = vpop.f32.mrb[0].mxu0
        %v1694 = vadd.f32 %v1525, %v1693
        %v1695 = vpop.f32.mrb[0].mxu0
        %1696 = vmatprep.mubr.bf16.mxu0 %v581
        %1697 = vmatmul.mubr.bf16.gmra.mrb[0].mxu0 %v525
        %v1698 = vpop.f32.mrb[0].mxu0
        %v1699 = vadd.f32 %v1530, %v1698
        %v1700 = vpop.f32.mrb[0].mxu0
        %v1701 = vpop.f32.mrb[0].mxu0
        %v1702 = vadd.f32 %v1533, %v1701
        %v1703 = vpop.f32.mrb[0].mxu0
        %1704 = vmatprep.mubr.bf16.mxu0 %v582
        %1705 = vmatmul.mubr.bf16.gmra.mrb[0].mxu0 %v526
        %v1706 = vpop.f32.mrb[0].mxu0
        %v1707 = vadd.f32 %v1538, %v1706
        %v1708 = vpop.f32.mrb[0].mxu0
        %v1709 = vpop.f32.mrb[0].mxu0
        %v1710 = vadd.f32 %v1541, %v1709
        %v1711 = vpop.f32.mrb[0].mxu0
        %1712 = vmatprep.mubr.bf16.mxu0 %v583
        %1713 = vmatmul.mubr.bf16.gmra.mrb[0].mxu0 %v527
        %v1714 = vpop.f32.mrb[0].mxu0
        %v1715 = vadd.f32 %v1546, %v1714
        %v1716 = vpop.f32.mrb[0].mxu0
        %v1717 = vpop.f32.mrb[0].mxu0
        %v1718 = vadd.f32 %v1549, %v1717
        %v1719 = vpop.f32.mrb[0].mxu0
        %1720 = vmatprep.mubr.bf16.mxu0 %v584
        %1721 = vmatmul.mubr.bf16.gmra.mrb[0].mxu0 %v528
        %v1722 = vpop.f32.mrb[0].mxu0
        %v1723 = vadd.f32 %v1554, %v1722
        %v1724 = vpop.f32.mrb[0].mxu0
        %v1725 = vpop.f32.mrb[0].mxu0
        %v1726 = vadd.f32 %v1557, %v1725
        %v1727 = vpop.f32.mrb[0].mxu0
        %1728 = vmatprep.mubr.bf16.mxu0 %v585
        %1729 = vmatmul.mubr.bf16.gmra.mrb[0].mxu0 %v534
        %v1730 = vpop.f32.mrb[0].mxu0
        %v1731 = vadd.f32 %v1562, %v1730
        %v1732 = vpop.f32.mrb[0].mxu0
        %v1733 = vpop.f32.mrb[0].mxu0
        %v1734 = vadd.f32 %v1565, %v1733
        %v1735 = vpop.f32.mrb[0].mxu0
        %1736 = vdwg.mxu0
        %1737 = vmatprep.subr.bf16.mxu0 0
        %1738 = vmatpush1.bf16.msra.mxu0 %v1134
        %1739 = vmatprep.subr.bf16.mxu0 0
        %1740 = vmatpush1.bf16.msra.mxu0 %v1135
        %1741 = vmatprep.subr.bf16.mxu0 0
        %1742 = vmatpush1.bf16.msra.mxu0 %v1136
        %1743 = vmatprep.subr.bf16.mxu0 0
        %1744 = vmatpush1.bf16.msra.mxu0 %v1137
        %1745 = vmatprep.subr.bf16.mxu0 0
        %1746 = vmatpush1.bf16.msra.mxu0 %v1138
        %1747 = vmatprep.subr.bf16.mxu0 0
        %1748 = vmatpush1.bf16.msra.mxu0 %v1139
        %1749 = vmatprep.subr.bf16.mxu0 0
        %1750 = vmatpush1.bf16.msra.mxu0 %v1140
        %1751 = vmatprep.subr.bf16.mxu0 0
        %1752 = vmatpush1.bf16.msra.mxu0 %v1141
        %1753 = vmatprep.subr.bf16.mxu0 0
        %1754 = vmatpush1.bf16.msra.mxu0 %v1142
        %1755 = vmatprep.subr.bf16.mxu0 0
        %1756 = vmatpush1.bf16.msra.mxu0 %v1143
        %1757 = vmatprep.subr.bf16.mxu0 0
        %1758 = vmatpush1.bf16.msra.mxu0 %v1144
        %1759 = vmatprep.subr.bf16.mxu0 0
        %1760 = vmatpush1.bf16.msra.mxu0 %v1145
        %1761 = vmatprep.subr.bf16.mxu0 0
        %1762 = vmatpush1.bf16.msra.mxu0 %v1146
        %1763 = vmatprep.subr.bf16.mxu0 0
        %1764 = vmatpush1.bf16.msra.mxu0 %v1147
        %1765 = vmatprep.subr.bf16.mxu0 0
        %1766 = vmatpush1.bf16.msra.mxu0 %v1148
        %1767 = vmatprep.subr.bf16.mxu0 0
        %1768 = vmatpush1.bf16.msra.mxu0 %v1149
        %1769 = vmatprep.mubr.bf16.mxu0 %v570
        %1770 = vmatmul.mubr.bf16.gmra.mrb[0].mxu0 %v514
        %v1771 = vpop.f32.mrb[0].mxu0
        %v1772 = vadd.f32 %v1603, %v1771
        %v1773 = vpop.f32.mrb[0].mxu0
        %v1774 = vpop.f32.mrb[0].mxu0
        %v1775 = vadd.f32 %v1606, %v1774
        %v1776 = vpop.f32.mrb[0].mxu0
        %1777 = vmatprep.mubr.bf16.mxu0 %v571
        %1778 = vmatmul.mubr.bf16.gmra.mrb[0].mxu0 %v515
        %v1779 = vpop.f32.mrb[0].mxu0
        %v1780 = vadd.f32 %v1611, %v1779
        %v1781 = vpop.f32.mrb[0].mxu0
        %v1782 = vpop.f32.mrb[0].mxu0
        %v1783 = vadd.f32 %v1614, %v1782
        %v1784 = vpop.f32.mrb[0].mxu0
        %1785 = vmatprep.mubr.bf16.mxu0 %v572
        %1786 = vmatmul.mubr.bf16.gmra.mrb[0].mxu0 %v516
        %v1787 = vpop.f32.mrb[0].mxu0
        %v1788 = vadd.f32 %v1619, %v1787
        %v1789 = vpop.f32.mrb[0].mxu0
        %v1790 = vpop.f32.mrb[0].mxu0
        %v1791 = vadd.f32 %v1622, %v1790
        %v1792 = vpop.f32.mrb[0].mxu0
        %1793 = vmatprep.mubr.bf16.mxu0 %v573
        %1794 = vmatmul.mubr.bf16.gmra.mrb[0].mxu0 %v517
        %v1795 = vpop.f32.mrb[0].mxu0
        %v1796 = vadd.f32 %v1627, %v1795
        %v1797 = vpop.f32.mrb[0].mxu0
        %v1798 = vpop.f32.mrb[0].mxu0
        %v1799 = vadd.f32 %v1630, %v1798
        %v1800 = vpop.f32.mrb[0].mxu0
        %1801 = vmatprep.mubr.bf16.mxu0 %v574
        %1802 = vmatmul.mubr.bf16.gmra.mrb[0].mxu0 %v518
        %v1803 = vpop.f32.mrb[0].mxu0
        %v1804 = vadd.f32 %v1635, %v1803
        %v1805 = vpop.f32.mrb[0].mxu0
        %v1806 = vpop.f32.mrb[0].mxu0
        %v1807 = vadd.f32 %v1638, %v1806
        %v1808 = vpop.f32.mrb[0].mxu0
        %1809 = vmatprep.mubr.bf16.mxu0 %v575
        %1810 = vmatmul.mubr.bf16.gmra.mrb[0].mxu0 %v519
        %v1811 = vpop.f32.mrb[0].mxu0
        %v1812 = vadd.f32 %v1643, %v1811
        %v1813 = vpop.f32.mrb[0].mxu0
        %v1814 = vpop.f32.mrb[0].mxu0
        %v1815 = vadd.f32 %v1646, %v1814
        %v1816 = vpop.f32.mrb[0].mxu0
        %1817 = vmatprep.mubr.bf16.mxu0 %v576
        %1818 = vmatmul.mubr.bf16.gmra.mrb[0].mxu0 %v520
        %v1819 = vpop.f32.mrb[0].mxu0
        %v1820 = vadd.f32 %v1651, %v1819
        %v1821 = vpop.f32.mrb[0].mxu0
        %v1822 = vpop.f32.mrb[0].mxu0
        %v1823 = vadd.f32 %v1654, %v1822
        %v1824 = vpop.f32.mrb[0].mxu0
        %1825 = vmatprep.mubr.bf16.mxu0 %v577
        %1826 = vmatmul.mubr.bf16.gmra.mrb[0].mxu0 %v521
        %v1827 = vpop.f32.mrb[0].mxu0
        %v1828 = vadd.f32 %v1659, %v1827
        %v1829 = vpop.f32.mrb[0].mxu0
        %v1830 = vpop.f32.mrb[0].mxu0
        %v1831 = vadd.f32 %v1662, %v1830
        %v1832 = vpop.f32.mrb[0].mxu0
        %1833 = vmatprep.mubr.bf16.mxu0 %v578
        %1834 = vmatmul.mubr.bf16.gmra.mrb[0].mxu0 %v522
        %v1835 = vpop.f32.mrb[0].mxu0
        %v1836 = vadd.f32 %v1667, %v1835
        %v1837 = vpop.f32.mrb[0].mxu0
        %v1838 = vpop.f32.mrb[0].mxu0
        %v1839 = vadd.f32 %v1670, %v1838
        %v1840 = vpop.f32.mrb[0].mxu0
        %1841 = vmatprep.mubr.bf16.mxu0 %v579
        %1842 = vmatmul.mubr.bf16.gmra.mrb[0].mxu0 %v523
        %v1843 = vpop.f32.mrb[0].mxu0
        %v1844 = vadd.f32 %v1675, %v1843
        %v1845 = vpop.f32.mrb[0].mxu0
        %v1846 = vpop.f32.mrb[0].mxu0
        %v1847 = vadd.f32 %v1678, %v1846
        %v1848 = vpop.f32.mrb[0].mxu0
        %1849 = vmatprep.mubr.bf16.mxu0 %v580
        %1850 = vmatmul.mubr.bf16.gmra.mrb[0].mxu0 %v524
        %v1851 = vpop.f32.mrb[0].mxu0
        %v1852 = vadd.f32 %v1683, %v1851
        %v1853 = vpop.f32.mrb[0].mxu0
        %v1854 = vpop.f32.mrb[0].mxu0
        %v1855 = vadd.f32 %v1686, %v1854
        %v1856 = vpop.f32.mrb[0].mxu0
        %1857 = vmatprep.mubr.bf16.mxu0 %v581
        %1858 = vmatmul.mubr.bf16.gmra.mrb[0].mxu0 %v525
        %v1859 = vpop.f32.mrb[0].mxu0
        %v1860 = vadd.f32 %v1691, %v1859
        %v1861 = vpop.f32.mrb[0].mxu0
        %v1862 = vpop.f32.mrb[0].mxu0
        %v1863 = vadd.f32 %v1694, %v1862
        %v1864 = vpop.f32.mrb[0].mxu0
        %1865 = vmatprep.mubr.bf16.mxu0 %v582
        %1866 = vmatmul.mubr.bf16.gmra.mrb[0].mxu0 %v526
        %v1867 = vpop.f32.mrb[0].mxu0
        %v1868 = vadd.f32 %v1699, %v1867
        %v1869 = vpop.f32.mrb[0].mxu0
        %v1870 = vpop.f32.mrb[0].mxu0
        %v1871 = vadd.f32 %v1702, %v1870
        %v1872 = vpop.f32.mrb[0].mxu0
        %1873 = vmatprep.mubr.bf16.mxu0 %v583
        %1874 = vmatmul.mubr.bf16.gmra.mrb[0].mxu0 %v527
        %v1875 = vpop.f32.mrb[0].mxu0
        %v1876 = vadd.f32 %v1707, %v1875
        %v1877 = vpop.f32.mrb[0].mxu0
        %v1878 = vpop.f32.mrb[0].mxu0
        %v1879 = vadd.f32 %v1710, %v1878
        %v1880 = vpop.f32.mrb[0].mxu0
        %1881 = vmatprep.mubr.bf16.mxu0 %v584
        %1882 = vmatmul.mubr.bf16.gmra.mrb[0].mxu0 %v528
        %v1883 = vpop.f32.mrb[0].mxu0
        %v1884 = vadd.f32 %v1715, %v1883
        %v1885 = vpop.f32.mrb[0].mxu0
        %v1886 = vpop.f32.mrb[0].mxu0
        %v1887 = vadd.f32 %v1718, %v1886
        %v1888 = vpop.f32.mrb[0].mxu0
        %1889 = vmatprep.mubr.bf16.mxu0 %v585
        %1890 = vmatmul.mubr.bf16.gmra.mrb[0].mxu0 %v534
        %v1891 = vpop.f32.mrb[0].mxu0
        %v1892 = vadd.f32 %v1723, %v1891
        %v1893 = vpop.f32.mrb[0].mxu0
        %v1894 = vpop.f32.mrb[0].mxu0
        %v1895 = vadd.f32 %v1726, %v1894
        %v1896 = vpop.f32.mrb[0].mxu0
        %1897 = vmatprep.mubr.bf16.mxu0 %v591
        %1898 = vmatmul.mubr.bf16.gmra.mrb[0].mxu0 %v588
        %v1899 = vpop.f32.mrb[0].mxu0
        %v1900 = vadd.f32 %v1731, %v1899
        %v1901 = vpop.f32.mrb[0].mxu0
        %v1902 = vpop.f32.mrb[0].mxu0
        %v1903 = vadd.f32 %v1734, %v1902
        %v1904 = vpop.f32.mrb[0].mxu0
        %1905 = vdwg.mxu0
        %1906 = vmatprep.subr.bf16.mxu0 0
        %1907 = vmatpush1.bf16.msra.mxu0 %v1150
        %1908 = vmatprep.subr.bf16.mxu0 0
        %1909 = vmatpush1.bf16.msra.mxu0 %v1151
        %1910 = vmatprep.subr.bf16.mxu0 0
        %1911 = vmatpush1.bf16.msra.mxu0 %v1152
        %1912 = vmatprep.subr.bf16.mxu0 0
        %1913 = vmatpush1.bf16.msra.mxu0 %v1153
        %1914 = vmatprep.subr.bf16.mxu0 0
        %1915 = vmatpush1.bf16.msra.mxu0 %v1154
        %1916 = vmatprep.subr.bf16.mxu0 0
        %1917 = vmatpush1.bf16.msra.mxu0 %v1155
        %1918 = vmatprep.subr.bf16.mxu0 0
        %1919 = vmatpush1.bf16.msra.mxu0 %v1156
        %1920 = vmatprep.subr.bf16.mxu0 0
        %1921 = vmatpush1.bf16.msra.mxu0 %v1157
        %1922 = vmatprep.subr.bf16.mxu0 0
        %1923 = vmatpush1.bf16.msra.mxu0 0
        %1924 = vmatprep.subr.bf16.mxu0 0
        %1925 = vmatpush1.bf16.msra.mxu0 0
        %1926 = vmatprep.subr.bf16.mxu0 0
        %1927 = vmatpush1.bf16.msra.mxu0 0
        %1928 = vmatprep.subr.bf16.mxu0 0
        %1929 = vmatpush1.bf16.msra.mxu0 0
        %1930 = vmatprep.subr.bf16.mxu0 0
        %1931 = vmatpush1.bf16.msra.mxu0 0
        %1932 = vmatprep.subr.bf16.mxu0 0
        %1933 = vmatpush1.bf16.msra.mxu0 0
        %1934 = vmatprep.subr.bf16.mxu0 0
        %1935 = vmatpush1.bf16.msra.mxu0 0
        %1936 = vmatprep.subr.bf16.mxu0 0
        %1937 = vmatpush1.bf16.msra.mxu0 0
        %1938 = vmatprep.mubr.bf16.mxu0 0
        %1939 = vmatmul.mubr.bf16.gmra.mrb[0].mxu0 %v626
        %v1940 = vpop.f32.mrb[0].mxu0
        %v1941 = vadd.f32 %v1772, %v1940
        %v1942 = vpop.f32.mrb[0].mxu0
        %v1943 = vpop.f32.mrb[0].mxu0
        %v1944 = vadd.f32 %v1775, %v1943
        %v1945 = vpop.f32.mrb[0].mxu0
        %1946 = vmatprep.mubr.bf16.mxu0 0
        %1947 = vmatmul.mubr.bf16.gmra.mrb[0].mxu0 %v627
        %v1948 = vpop.f32.mrb[0].mxu0
        %v1949 = vadd.f32 %v1780, %v1948
        %v1950 = vpop.f32.mrb[0].mxu0
        %v1951 = vpop.f32.mrb[0].mxu0
        %v1952 = vadd.f32 %v1783, %v1951
        %v1953 = vpop.f32.mrb[0].mxu0
        %1954 = vmatprep.mubr.bf16.mxu0 0
        %1955 = vmatmul.mubr.bf16.gmra.mrb[0].mxu0 %v628
        %v1956 = vpop.f32.mrb[0].mxu0
        %v1957 = vadd.f32 %v1788, %v1956
        %v1958 = vpop.f32.mrb[0].mxu0
        %v1959 = vpop.f32.mrb[0].mxu0
        %v1960 = vadd.f32 %v1791, %v1959
        %v1961 = vpop.f32.mrb[0].mxu0
        %1962 = vmatprep.mubr.bf16.mxu0 0
        %1963 = vmatmul.mubr.bf16.gmra.mrb[0].mxu0 %v629
        %v1964 = vpop.f32.mrb[0].mxu0
        %v1965 = vadd.f32 %v1796, %v1964
        %v1966 = vpop.f32.mrb[0].mxu0
        %v1967 = vpop.f32.mrb[0].mxu0
        %v1968 = vadd.f32 %v1799, %v1967
        %v1969 = vpop.f32.mrb[0].mxu0
        %1970 = vmatprep.mubr.bf16.mxu0 0
        %1971 = vmatmul.mubr.bf16.gmra.mrb[0].mxu0 %v630
        %v1972 = vpop.f32.mrb[0].mxu0
        %v1973 = vadd.f32 %v1804, %v1972
        %v1974 = vpop.f32.mrb[0].mxu0
        %v1975 = vpop.f32.mrb[0].mxu0
        %v1976 = vadd.f32 %v1807, %v1975
        %v1977 = vpop.f32.mrb[0].mxu0
        %1978 = vmatprep.mubr.bf16.mxu0 0
        %1979 = vmatmul.mubr.bf16.gmra.mrb[0].mxu0 %v631
        %v1980 = vpop.f32.mrb[0].mxu0
        %v1981 = vadd.f32 %v1812, %v1980
        %v1982 = vpop.f32.mrb[0].mxu0
        %v1983 = vpop.f32.mrb[0].mxu0
        %v1984 = vadd.f32 %v1815, %v1983
        %v1985 = vpop.f32.mrb[0].mxu0
        %1986 = vmatprep.mubr.bf16.mxu0 0
        %1987 = vmatmul.mubr.bf16.gmra.mrb[0].mxu0 %v632
        %v1988 = vpop.f32.mrb[0].mxu0
        %v1989 = vadd.f32 %v1820, %v1988
        %v1990 = vpop.f32.mrb[0].mxu0
        %v1991 = vpop.f32.mrb[0].mxu0
        %v1992 = vadd.f32 %v1823, %v1991
        %v1993 = vpop.f32.mrb[0].mxu0
        %1994 = vmatprep.mubr.bf16.mxu0 0
        %1995 = vmatmul.mubr.bf16.gmra.mrb[0].mxu0 %v633
        %v1996 = vpop.f32.mrb[0].mxu0
        %v1997 = vadd.f32 %v1828, %v1996
        %v1998 = vpop.f32.mrb[0].mxu0
        %v1999 = vpop.f32.mrb[0].mxu0
        %v2000 = vadd.f32 %v1831, %v1999
        %v2001 = vpop.f32.mrb[0].mxu0
        %2002 = vmatprep.mubr.bf16.mxu0 0
        %2003 = vmatmul.mubr.bf16.gmra.mrb[0].mxu0 %v634
        %v2004 = vpop.f32.mrb[0].mxu0
        %v2005 = vadd.f32 %v1836, %v2004
        %v2006 = vpop.f32.mrb[0].mxu0
        %v2007 = vpop.f32.mrb[0].mxu0
        %v2008 = vadd.f32 %v1839, %v2007
        %v2009 = vpop.f32.mrb[0].mxu0
        %2010 = vmatprep.mubr.bf16.mxu0 0
        %2011 = vmatmul.mubr.bf16.gmra.mrb[0].mxu0 %v635
        %v2012 = vpop.f32.mrb[0].mxu0
        %v2013 = vadd.f32 %v1844, %v2012
        %v2014 = vpop.f32.mrb[0].mxu0
        %v2015 = vpop.f32.mrb[0].mxu0
        %v2016 = vadd.f32 %v1847, %v2015
        %v2017 = vpop.f32.mrb[0].mxu0
        %2018 = vmatprep.mubr.bf16.mxu0 0
        %2019 = vmatmul.mubr.bf16.gmra.mrb[0].mxu0 %v636
        %v2020 = vpop.f32.mrb[0].mxu0
        %v2021 = vadd.f32 %v1852, %v2020
        %v2022 = vpop.f32.mrb[0].mxu0
        %v2023 = vpop.f32.mrb[0].mxu0
        %v2024 = vadd.f32 %v1855, %v2023
        %v2025 = vpop.f32.mrb[0].mxu0
        %2026 = vmatprep.mubr.bf16.mxu0 0
        %2027 = vmatmul.mubr.bf16.gmra.mrb[0].mxu0 %v637
        %v2028 = vpop.f32.mrb[0].mxu0
        %v2029 = vadd.f32 %v1860, %v2028
        %v2030 = vpop.f32.mrb[0].mxu0
        %v2031 = vpop.f32.mrb[0].mxu0
        %v2032 = vadd.f32 %v1863, %v2031
        %v2033 = vpop.f32.mrb[0].mxu0
        %2034 = vmatprep.mubr.bf16.mxu0 0
        %2035 = vmatmul.mubr.bf16.gmra.mrb[0].mxu0 %v638
        %v2036 = vpop.f32.mrb[0].mxu0
        %v2037 = vadd.f32 %v1868, %v2036
        %v2038 = vpop.f32.mrb[0].mxu0
        %v2039 = vpop.f32.mrb[0].mxu0
        %v2040 = vadd.f32 %v1871, %v2039
        %v2041 = vpop.f32.mrb[0].mxu0
        %2042 = vmatprep.mubr.bf16.mxu0 0
        %2043 = vmatmul.mubr.bf16.gmra.mrb[0].mxu0 %v639
        %v2044 = vpop.f32.mrb[0].mxu0
        %v2045 = vadd.f32 %v1876, %v2044
        %v2046 = vpop.f32.mrb[0].mxu0
        %v2047 = vpop.f32.mrb[0].mxu0
        %v2048 = vadd.f32 %v1879, %v2047
        %v2049 = vpop.f32.mrb[0].mxu0
        %2050 = vmatprep.mubr.bf16.mxu0 0
        %2051 = vmatmul.mubr.bf16.gmra.mrb[0].mxu0 %v640
        %v2052 = vpop.f32.mrb[0].mxu0
        %v2053 = vadd.f32 %v1884, %v2052
        %v2054 = vpop.f32.mrb[0].mxu0
        %v2055 = vpop.f32.mrb[0].mxu0
        %v2056 = vadd.f32 %v1887, %v2055
        %v2057 = vpop.f32.mrb[0].mxu0
        %2058 = vmatprep.mubr.bf16.mxu0 0
        %2059 = vmatmul.mubr.bf16.gmra.mrb[0].mxu0 %v641
        %v2060 = vpop.f32.mrb[0].mxu0
        %v2061 = vadd.f32 %v1892, %v2060
        %v2062 = vpop.f32.mrb[0].mxu0
        %v2063 = vpop.f32.mrb[0].mxu0
        %v2064 = vadd.f32 %v1895, %v2063
        %v2065 = vpop.f32.mrb[0].mxu0
        %2066 = vmatprep.mubr.bf16.mxu0 0
        %2067 = vmatmul.mubr.bf16.gmra.mrb[0].mxu0 %v642
        %v2068 = vpop.f32.mrb[0].mxu0
        %v2069 = vadd.f32 %v1900, %v2068
        %v2070 = vpop.f32.mrb[0].mxu0
        %v2071 = vpop.f32.mrb[0].mxu0
        %v2072 = vadd.f32 %v1903, %v2071
        %v2073 = vpop.f32.mrb[0].mxu0
        %2074 = vdwg.mxu0
        %vm2075 = vcmp.ge.f32.partialorder %v1941, 0.0
        %vm2076 = vcmp.ge.f32.partialorder %v1944, 0.0
        %vm2077 = vcmp.ge.f32.partialorder %v1949, 0.0
        %vm2078 = vcmp.ge.f32.partialorder %v1952, 0.0
        %vm2079 = vcmp.ge.f32.partialorder %v1957, 0.0
        %vm2080 = vcmp.ge.f32.partialorder %v1960, 0.0
        %vm2081 = vcmp.ge.f32.partialorder %v1965, 0.0
        %vm2082 = vcmp.ge.f32.partialorder %v1968, 0.0
        %vm2083 = vcmp.ge.f32.partialorder %v1973, 0.0
        %vm2084 = vcmp.ge.f32.partialorder %v1976, 0.0
        %vm2085 = vcmp.ge.f32.partialorder %v1981, 0.0
        %vm2086 = vcmp.ge.f32.partialorder %v1984, 0.0
        %vm2087 = vcmp.ge.f32.partialorder %v1989, 0.0
        %vm2088 = vcmp.ge.f32.partialorder %v1992, 0.0
        %vm2089 = vcmp.ge.f32.partialorder %v1997, 0.0
        %vm2090 = vcmp.ge.f32.partialorder %v2000, 0.0
        %vm2091 = vcmp.ge.f32.partialorder %v2005, 0.0
        %vm2092 = vcmp.ge.f32.partialorder %v2008, 0.0
        %vm2093 = vcmp.ge.f32.partialorder %v2013, 0.0
        %vm2094 = vcmp.ge.f32.partialorder %v2016, 0.0
        %vm2095 = vcmp.ge.f32.partialorder %v2021, 0.0
        %vm2096 = vcmp.ge.f32.partialorder %v2024, 0.0
        %vm2097 = vcmp.ge.f32.partialorder %v2029, 0.0
        %vm2098 = vcmp.ge.f32.partialorder %v2032, 0.0
        %vm2099 = vcmp.ge.f32.partialorder %v2037, 0.0
        %vm2100 = vcmp.ge.f32.partialorder %v2040, 0.0
        %vm2101 = vcmp.ge.f32.partialorder %v2045, 0.0
        %vm2102 = vcmp.ge.f32.partialorder %v2048, 0.0
        %vm2103 = vcmp.ge.f32.partialorder %v2053, 0.0
        %vm2104 = vcmp.ge.f32.partialorder %v2056, 0.0
        %vm2105 = vcmp.ge.f32.partialorder %v2061, 0.0
        %vm2106 = vcmp.ge.f32.partialorder %v2064, 0.0
        %vm2107 = vcmp.ge.f32.partialorder %v2069, 0.0
        %vm2108 = vcmp.ge.f32.partialorder %v2072, 0.0
        %v2109 = vmul.f32 %v1941, 0.2
        %v2110 = vmul.f32 %v1944, 0.2
        %v2111 = vmul.f32 %v1949, 0.2
        %v2112 = vmul.f32 %v1952, 0.2
        %v2113 = vmul.f32 %v1957, 0.2
        %v2114 = vmul.f32 %v1960, 0.2
        %v2115 = vmul.f32 %v1965, 0.2
        %v2116 = vmul.f32 %v1968, 0.2
        %v2117 = vmul.f32 %v1973, 0.2
        %v2118 = vmul.f32 %v1976, 0.2
        %v2119 = vmul.f32 %v1981, 0.2
        %v2120 = vmul.f32 %v1984, 0.2
        %v2121 = vmul.f32 %v1989, 0.2
        %v2122 = vmul.f32 %v1992, 0.2
        %v2123 = vmul.f32 %v1997, 0.2
        %v2124 = vmul.f32 %v2000, 0.2
        %v2125 = vmul.f32 %v2005, 0.2
        %v2126 = vmul.f32 %v2008, 0.2
        %v2127 = vmul.f32 %v2013, 0.2
        %v2128 = vmul.f32 %v2016, 0.2
        %v2129 = vmul.f32 %v2021, 0.2
        %v2130 = vmul.f32 %v2024, 0.2
        %v2131 = vmul.f32 %v2029, 0.2
        %v2132 = vmul.f32 %v2032, 0.2
        %v2133 = vmul.f32 %v2037, 0.2
        %v2134 = vmul.f32 %v2040, 0.2
        %v2135 = vmul.f32 %v2045, 0.2
        %v2136 = vmul.f32 %v2048, 0.2
        %v2137 = vmul.f32 %v2053, 0.2
        %v2138 = vmul.f32 %v2056, 0.2
        %v2139 = vmul.f32 %v2061, 0.2
        %v2140 = vmul.f32 %v2064, 0.2
        %v2141 = vmul.f32 %v2069, 0.2
        %v2142 = vmul.f32 %v2072, 0.2
        %v2143 = vsel %vm2075, %v1941, %v2109
        %v2144 = vsel %vm2076, %v1944, %v2110
        %v2145 = vsel %vm2077, %v1949, %v2111
        %v2146 = vsel %vm2078, %v1952, %v2112
        %v2147 = vsel %vm2079, %v1957, %v2113
        %v2148 = vsel %vm2080, %v1960, %v2114
        %v2149 = vsel %vm2081, %v1965, %v2115
        %v2150 = vsel %vm2082, %v1968, %v2116
        %v2151 = vsel %vm2083, %v1973, %v2117
        %v2152 = vsel %vm2084, %v1976, %v2118
        %v2153 = vsel %vm2085, %v1981, %v2119
        %v2154 = vsel %vm2086, %v1984, %v2120
        %v2155 = vsel %vm2087, %v1989, %v2121
        %v2156 = vsel %vm2088, %v1992, %v2122
        %v2157 = vsel %vm2089, %v1997, %v2123
        %v2158 = vsel %vm2090, %v2000, %v2124
        %v2159 = vsel %vm2091, %v2005, %v2125
        %v2160 = vsel %vm2092, %v2008, %v2126
        %v2161 = vsel %vm2093, %v2013, %v2127
        %v2162 = vsel %vm2094, %v2016, %v2128
        %v2163 = vsel %vm2095, %v2021, %v2129
        %v2164 = vsel %vm2096, %v2024, %v2130
        %v2165 = vsel %vm2097, %v2029, %v2131
        %v2166 = vsel %vm2098, %v2032, %v2132
        %v2167 = vsel %vm2099, %v2037, %v2133
        %v2168 = vsel %vm2100, %v2040, %v2134
        %v2169 = vsel %vm2101, %v2045, %v2135
        %v2170 = vsel %vm2102, %v2048, %v2136
        %v2171 = vsel %vm2103, %v2053, %v2137
        %v2172 = vsel %vm2104, %v2056, %v2138
        %v2173 = vsel %vm2105, %v2061, %v2139
        %v2174 = vsel %vm2106, %v2064, %v2140
        %v2175 = vsel %vm2107, %v2069, %v2141
        %v2176 = vsel %vm2108, %v2072, %v2142
        %v2177 = vld [vmem:[%s3] sm:$0xff]
        %v2178 = vld [vmem:[%s3 + $0x8] sm:$0xff]
        %v2179 = vld [vmem:[%s3 + $0x10] sm:$0xff]
        %v2180 = vld [vmem:[%s3 + $0x18] sm:$0xff]
        %v2181 = vld [vmem:[%s3 + $0x20] sm:$0xff]
        %v2182 = vld [vmem:[%s3 + $0x28] sm:$0xff]
        %v2183 = vld [vmem:[%s3 + $0x30] sm:$0xff]
        %v2184 = vld [vmem:[%s3 + $0x38] sm:$0xff]
        %v2185 = vld [vmem:[%s3 + $0x40] sm:$0xff]
        %v2186 = vld [vmem:[%s3 + $0x48] sm:$0xff]
        %v2187 = vld [vmem:[%s3 + $0x50] sm:$0xff]
        %v2188 = vld [vmem:[%s3 + $0x58] sm:$0xff]
        %v2189 = vld [vmem:[%s3 + $0x60] sm:$0xff]
        %v2190 = vld [vmem:[%s3 + $0x68] sm:$0xff]
        %v2191 = vld [vmem:[%s3 + $0x70] sm:$0xff]
        %v2192 = vld [vmem:[%s3 + $0x78] sm:$0xff]
        %v2193 = vld [vmem:[%s3 + $0x80] sm:$0xff]
        %v2194 = vld [vmem:[%s3 + $0x88] sm:$0xff]
        %v2195 = vld [vmem:[%s3 + $0x90] sm:$0xff]
        %v2196 = vld [vmem:[%s3 + $0x98] sm:$0xff]
        %v2197 = vld [vmem:[%s3 + $0xa0] sm:$0xff]
        %v2198 = vld [vmem:[%s3 + $0xa8] sm:$0xff]
        %v2199 = vld [vmem:[%s3 + $0xb0] sm:$0xff]
        %v2200 = vld [vmem:[%s3 + $0xb8] sm:$0xff]
        %v2201 = vld [vmem:[%s3 + $0xc0] sm:$0xff]
        %v2202 = vld [vmem:[%s3 + $0xc8] sm:$0xff]
        %v2203 = vld [vmem:[%s3 + $0xd0] sm:$0xff]
        %v2204 = vld [vmem:[%s3 + $0xd8] sm:$0xff]
        %v2205 = vld [vmem:[%s3 + $0xe0] sm:$0xff]
        %v2206 = vld [vmem:[%s3 + $0xe8] sm:$0xff]
        %v2207 = vld [vmem:[%s3 + $0xf0] sm:$0xff]
        %v2208 = vld [vmem:[%s3 + $0xf8] sm:$0xff]
        %v2209 = vld [vmem:[%s3 + $0x100] sm:$0xff]
        %v2210 = vld [vmem:[%s3 + $0x108] sm:$0xff]
        %2212 = vset.pattern.permute.xlu0 0
        %2213 = vperm.xlu0 %2212, %v2177
        %v2214 = vpop.permute.xlu0 %2213
        %2217 = vset.pattern.permute.xlu0 0
        %2218 = vperm.xlu0 %2217, %v2178
        %v2219 = vpop.permute.xlu0 %2218
        %2222 = vset.pattern.permute.xlu0 0
        %2223 = vperm.xlu0 %2222, %v2179
        %v2224 = vpop.permute.xlu0 %2223
        %2227 = vset.pattern.permute.xlu0 0
        %2228 = vperm.xlu0 %2227, %v2180
        %v2229 = vpop.permute.xlu0 %2228
        %2232 = vset.pattern.permute.xlu0 0
        %2233 = vperm.xlu0 %2232, %v2181
        %v2234 = vpop.permute.xlu0 %2233
        %2237 = vset.pattern.permute.xlu0 0
        %2238 = vperm.xlu0 %2237, %v2182
        %v2239 = vpop.permute.xlu0 %2238
        %2242 = vset.pattern.permute.xlu0 0
        %2243 = vperm.xlu0 %2242, %v2183
        %v2244 = vpop.permute.xlu0 %2243
        %2247 = vset.pattern.permute.xlu0 0
        %2248 = vperm.xlu0 %2247, %v2184
        %v2249 = vpop.permute.xlu0 %2248
        %2252 = vset.pattern.permute.xlu0 0
        %2253 = vperm.xlu0 %2252, %v2185
        %v2254 = vpop.permute.xlu0 %2253
        %2257 = vset.pattern.permute.xlu0 0
        %2258 = vperm.xlu0 %2257, %v2186
        %v2259 = vpop.permute.xlu0 %2258
        %2262 = vset.pattern.permute.xlu0 0
        %2263 = vperm.xlu0 %2262, %v2187
        %v2264 = vpop.permute.xlu0 %2263
        %2267 = vset.pattern.permute.xlu0 0
        %2268 = vperm.xlu0 %2267, %v2188
        %v2269 = vpop.permute.xlu0 %2268
        %2272 = vset.pattern.permute.xlu0 0
        %2273 = vperm.xlu0 %2272, %v2189
        %v2274 = vpop.permute.xlu0 %2273
        %2277 = vset.pattern.permute.xlu0 0
        %2278 = vperm.xlu0 %2277, %v2190
        %v2279 = vpop.permute.xlu0 %2278
        %2282 = vset.pattern.permute.xlu0 0
        %2283 = vperm.xlu0 %2282, %v2191
        %v2284 = vpop.permute.xlu0 %2283
        %2287 = vset.pattern.permute.xlu0 0
        %2288 = vperm.xlu0 %2287, %v2192
        %v2289 = vpop.permute.xlu0 %2288
        %2292 = vset.pattern.permute.xlu0 0
        %2293 = vperm.xlu0 %2292, %v2193
        %v2294 = vpop.permute.xlu0 %2293
        %2297 = vset.pattern.permute.xlu0 0
        %2298 = vperm.xlu0 %2297, %v2194
        %v2299 = vpop.permute.xlu0 %2298
        %2302 = vset.pattern.permute.xlu0 0
        %2303 = vperm.xlu0 %2302, %v2195
        %v2304 = vpop.permute.xlu0 %2303
        %2307 = vset.pattern.permute.xlu0 0
        %2308 = vperm.xlu0 %2307, %v2196
        %v2309 = vpop.permute.xlu0 %2308
        %2312 = vset.pattern.permute.xlu0 0
        %2313 = vperm.xlu0 %2312, %v2197
        %v2314 = vpop.permute.xlu0 %2313
        %2317 = vset.pattern.permute.xlu0 0
        %2318 = vperm.xlu0 %2317, %v2198
        %v2319 = vpop.permute.xlu0 %2318
        %2322 = vset.pattern.permute.xlu0 0
        %2323 = vperm.xlu0 %2322, %v2199
        %v2324 = vpop.permute.xlu0 %2323
        %2327 = vset.pattern.permute.xlu0 0
        %2328 = vperm.xlu0 %2327, %v2200
        %v2329 = vpop.permute.xlu0 %2328
        %2332 = vset.pattern.permute.xlu0 0
        %2333 = vperm.xlu0 %2332, %v2201
        %v2334 = vpop.permute.xlu0 %2333
        %2337 = vset.pattern.permute.xlu0 0
        %2338 = vperm.xlu0 %2337, %v2202
        %v2339 = vpop.permute.xlu0 %2338
        %2342 = vset.pattern.permute.xlu0 0
        %2343 = vperm.xlu0 %2342, %v2203
        %v2344 = vpop.permute.xlu0 %2343
        %2347 = vset.pattern.permute.xlu0 0
        %2348 = vperm.xlu0 %2347, %v2204
        %v2349 = vpop.permute.xlu0 %2348
        %2352 = vset.pattern.permute.xlu0 0
        %2353 = vperm.xlu0 %2352, %v2205
        %v2354 = vpop.permute.xlu0 %2353
        %2357 = vset.pattern.permute.xlu0 0
        %2358 = vperm.xlu0 %2357, %v2206
        %v2359 = vpop.permute.xlu0 %2358
        %2362 = vset.pattern.permute.xlu0 0
        %2363 = vperm.xlu0 %2362, %v2207
        %v2364 = vpop.permute.xlu0 %2363
        %2367 = vset.pattern.permute.xlu0 0
        %2368 = vperm.xlu0 %2367, %v2208
        %v2369 = vpop.permute.xlu0 %2368
        %2372 = vset.pattern.permute.xlu0 0
        %2373 = vperm.xlu0 %2372, %v2209
        %v2374 = vpop.permute.xlu0 %2373
        %2377 = vset.pattern.permute.xlu0 0
        %2378 = vperm.xlu0 %2377, %v2210
        %v2379 = vpop.permute.xlu0 %2378
        %v2381 = vmul.f32 %v2143, %v2214
        %v2382 = vmul.f32 %v2144, %v2219
        %v2383 = vmul.f32 %v2145, %v2224
        %v2384 = vmul.f32 %v2146, %v2229
        %v2385 = vmul.f32 %v2147, %v2234
        %v2386 = vmul.f32 %v2148, %v2239
        %v2387 = vmul.f32 %v2149, %v2244
        %v2388 = vmul.f32 %v2150, %v2249
        %v2389 = vmul.f32 %v2151, %v2254
        %v2390 = vmul.f32 %v2152, %v2259
        %v2391 = vmul.f32 %v2153, %v2264
        %v2392 = vmul.f32 %v2154, %v2269
        %v2393 = vmul.f32 %v2155, %v2274
        %v2394 = vmul.f32 %v2156, %v2279
        %v2395 = vmul.f32 %v2157, %v2284
        %v2396 = vmul.f32 %v2158, %v2289
        %v2397 = vmul.f32 %v2159, %v2294
        %v2398 = vmul.f32 %v2160, %v2299
        %v2399 = vmul.f32 %v2161, %v2304
        %v2400 = vmul.f32 %v2162, %v2309
        %v2401 = vmul.f32 %v2163, %v2314
        %v2402 = vmul.f32 %v2164, %v2319
        %v2403 = vmul.f32 %v2165, %v2324
        %v2404 = vmul.f32 %v2166, %v2329
        %v2405 = vmul.f32 %v2167, %v2334
        %v2406 = vmul.f32 %v2168, %v2339
        %v2407 = vmul.f32 %v2169, %v2344
        %v2408 = vmul.f32 %v2170, %v2349
        %v2409 = vmul.f32 %v2171, %v2354
        %v2410 = vmul.f32 %v2172, %v2359
        %v2411 = vmul.f32 %v2173, %v2364
        %v2412 = vmul.f32 %v2174, %v2369
        %v2413 = vmul.f32 %v2175, %v2374
        %v2414 = vmul.f32 %v2176, %v2379
        %s2415 = ssub.s32 1, %s373
        %s2416 = smul.u32 %s2415, 312
        %s2417 = scalar_lea.vmem [#allocation2], %s2416
        %2418 = vst [vmem:[%s2417 + $0x12] sm:$0xff] %v2381
        %2419 = vst [vmem:[%s2417 + $0x1a] sm:$0xff] %v2382
        %2420 = vst [vmem:[%s2417 + $0x22] sm:$0xff] %v2383
        %2421 = vst [vmem:[%s2417 + $0x2a] sm:$0xff] %v2384
        %2422 = vst [vmem:[%s2417 + $0x32] sm:$0xff] %v2385
        %2423 = vst [vmem:[%s2417 + $0x3a] sm:$0xff] %v2386
        %2424 = vst [vmem:[%s2417 + $0x42] sm:$0xff] %v2387
        %2425 = vst [vmem:[%s2417 + $0x4a] sm:$0xff] %v2388
        %2426 = vst [vmem:[%s2417 + $0x52] sm:$0xff] %v2389
        %2427 = vst [vmem:[%s2417 + $0x5a] sm:$0xff] %v2390
        %2428 = vst [vmem:[%s2417 + $0x62] sm:$0xff] %v2391
        %2429 = vst [vmem:[%s2417 + $0x6a] sm:$0xff] %v2392
        %2430 = vst [vmem:[%s2417 + $0x72] sm:$0xff] %v2393
        %2431 = vst [vmem:[%s2417 + $0x7a] sm:$0xff] %v2394
        %2432 = vst [vmem:[%s2417 + $0x82] sm:$0xff] %v2395
        %2433 = vst [vmem:[%s2417 + $0x8a] sm:$0xff] %v2396
        %2434 = vst [vmem:[%s2417 + $0x92] sm:$0xff] %v2397
        %2435 = vst [vmem:[%s2417 + $0x9a] sm:$0xff] %v2398
        %2436 = vst [vmem:[%s2417 + $0xa2] sm:$0xff] %v2399
        %2437 = vst [vmem:[%s2417 + $0xaa] sm:$0xff] %v2400
        %2438 = vst [vmem:[%s2417 + $0xb2] sm:$0xff] %v2401
        %2439 = vst [vmem:[%s2417 + $0xba] sm:$0xff] %v2402
        %2440 = vst [vmem:[%s2417 + $0xc2] sm:$0xff] %v2403
        %2441 = vst [vmem:[%s2417 + $0xca] sm:$0xff] %v2404
        %2442 = vst [vmem:[%s2417 + $0xd2] sm:$0xff] %v2405
        %2443 = vst [vmem:[%s2417 + $0xda] sm:$0xff] %v2406
        %2444 = vst [vmem:[%s2417 + $0xe2] sm:$0xff] %v2407
        %2445 = vst [vmem:[%s2417 + $0xea] sm:$0xff] %v2408
        %2446 = vst [vmem:[%s2417 + $0xf2] sm:$0xff] %v2409
        %2447 = vst [vmem:[%s2417 + $0xfa] sm:$0xff] %v2410
        %2448 = vst [vmem:[%s2417 + $0x102] sm:$0xff] %v2411
        %2449 = vst [vmem:[%s2417 + $0x10a] sm:$0xff] %v2412
        %2450 = vst [vmem:[%s2417 + $0x112] sm:$0xff] %v2413
        %2451 = vst [vmem:[%s2417 + $0x11a] sm:$0xff] %v2414
      $region41: #{dncnn_forward.1} parent=35 // loop_footer
        %s361 = sadd.s32 1, %s357
      $region42: #{dncnn_forward.1} parent=35 // loop_footer_branch
        %356 = sbr.rel target = $region38
      $region43: #{dncnn_forward.1} parent=35 // loop_exit
        _
      %v2452 = vld [vmem:[#allocation2] sm:$0xff]
      %v2453 = vld [vmem:[#allocation2 + $0x8] sm:$0xff]
      %v2454 = vld [vmem:[#allocation2 + $0x10] sm:$0xff]
      %v2455 = vld [vmem:[#allocation2 + $0x18] sm:$0xff]
      %v2456 = vld [vmem:[#allocation2 + $0x20] sm:$0xff]
      %v2457 = vld [vmem:[#allocation2 + $0x28] sm:$0xff]
      %v2458 = vld [vmem:[#allocation2 + $0x30] sm:$0xff]
      %v2459 = vld [vmem:[#allocation2 + $0x38] sm:$0xff]
      %v2460 = vld [vmem:[#allocation2 + $0x40] sm:$0xff]
      %v2461 = vld [vmem:[#allocation2 + $0x48] sm:$0xff]
      %v2462 = vld [vmem:[#allocation2 + $0x50] sm:$0xff]
      %v2463 = vld [vmem:[#allocation2 + $0x58] sm:$0xff]
      %v2464 = vld [vmem:[#allocation2 + $0x60] sm:$0xff]
      %v2465 = vld [vmem:[#allocation2 + $0x68] sm:$0xff]
      %v2466 = vld [vmem:[#allocation2 + $0x70] sm:$0xff]
      %v2467 = vld [vmem:[#allocation2 + $0x78] sm:$0xff]
      %v2468 = vld [vmem:[#allocation2 + $0x80] sm:$0xff]
      %v2469 = vld [vmem:[#allocation2 + $0x88] sm:$0xff]
      %v2470 = vld [vmem:[#allocation2 + $0x90] sm:$0xff]
      %v2471 = vld [vmem:[#allocation2 + $0x98] sm:$0xff]
      %v2472 = vld [vmem:[#allocation2 + $0xa0] sm:$0xff]
      %v2473 = vld [vmem:[#allocation2 + $0xa8] sm:$0xff]
      %v2474 = vld [vmem:[#allocation2 + $0xb0] sm:$0xff]
      %v2475 = vld [vmem:[#allocation2 + $0xb8] sm:$0xff]
      %v2476 = vld [vmem:[#allocation2 + $0xc0] sm:$0xff]
      %v2477 = vld [vmem:[#allocation2 + $0xc8] sm:$0xff]
      %v2478 = vld [vmem:[#allocation2 + $0xd0] sm:$0xff]
      %v2479 = vld [vmem:[#allocation2 + $0xd8] sm:$0xff]
      %v2480 = vld [vmem:[#allocation2 + $0xe0] sm:$0xff]
      %v2481 = vld [vmem:[#allocation2 + $0xe8] sm:$0xff]
      %v2482 = vld [vmem:[#allocation2 + $0xf0] sm:$0xff]
      %v2483 = vld [vmem:[#allocation2 + $0xf8] sm:$0xff]
      %v2484 = vld [vmem:[#allocation2 + $0x100] sm:$0xff]
      %v2485 = vld [vmem:[#allocation2 + $0x108] sm:$0xff]
      %v2486 = vpack.c.bf16 %v2453, %v2452
      %v2487 = vpack.c.bf16 %v2455, %v2454
      %v2488 = vpack.c.bf16 %v2457, %v2456
      %v2489 = vpack.c.bf16 %v2459, %v2458
      %v2490 = vpack.c.bf16 %v2461, %v2460
      %v2491 = vpack.c.bf16 %v2463, %v2462
      %v2492 = vpack.c.bf16 %v2465, %v2464
      %v2493 = vpack.c.bf16 %v2467, %v2466
      %v2494 = vpack.c.bf16 %v2469, %v2468
      %v2495 = vpack.c.bf16 %v2471, %v2470
      %v2496 = vpack.c.bf16 %v2473, %v2472
      %v2497 = vpack.c.bf16 %v2475, %v2474
      %v2498 = vpack.c.bf16 %v2477, %v2476
      %v2499 = vpack.c.bf16 %v2479, %v2478
      %v2500 = vpack.c.bf16 %v2481, %v2480
      %v2501 = vpack.c.bf16 %v2483, %v2482
      %v2502 = vpack.c.bf16 %v2485, %v2484
      %v2503 = vld [vmem:[#allocation2 + $0x1] sm:$0xff]
      %v2504 = vld [vmem:[#allocation2 + $0x9] sm:$0xff]
      %v2505 = vld [vmem:[#allocation2 + $0x11] sm:$0xff]
      %v2506 = vld [vmem:[#allocation2 + $0x19] sm:$0xff]
      %v2507 = vld [vmem:[#allocation2 + $0x21] sm:$0xff]
      %v2508 = vld [vmem:[#allocation2 + $0x29] sm:$0xff]
      %v2509 = vld [vmem:[#allocation2 + $0x31] sm:$0xff]
      %v2510 = vld [vmem:[#allocation2 + $0x39] sm:$0xff]
      %v2511 = vld [vmem:[#allocation2 + $0x41] sm:$0xff]
      %v2512 = vld [vmem:[#allocation2 + $0x49] sm:$0xff]
      %v2513 = vld [vmem:[#allocation2 + $0x51] sm:$0xff]
      %v2514 = vld [vmem:[#allocation2 + $0x59] sm:$0xff]
      %v2515 = vld [vmem:[#allocation2 + $0x61] sm:$0xff]
      %v2516 = vld [vmem:[#allocation2 + $0x69] sm:$0xff]
      %v2517 = vld [vmem:[#allocation2 + $0x71] sm:$0xff]
      %v2518 = vld [vmem:[#allocation2 + $0x79] sm:$0xff]
      %v2519 = vld [vmem:[#allocation2 + $0x81] sm:$0xff]
      %v2520 = vld [vmem:[#allocation2 + $0x89] sm:$0xff]
      %v2521 = vld [vmem:[#allocation2 + $0x91] sm:$0xff]
      %v2522 = vld [vmem:[#allocation2 + $0x99] sm:$0xff]
      %v2523 = vld [vmem:[#allocation2 + $0xa1] sm:$0xff]
      %v2524 = vld [vmem:[#allocation2 + $0xa9] sm:$0xff]
      %v2525 = vld [vmem:[#allocation2 + $0xb1] sm:$0xff]
      %v2526 = vld [vmem:[#allocation2 + $0xb9] sm:$0xff]
      %v2527 = vld [vmem:[#allocation2 + $0xc1] sm:$0xff]
      %v2528 = vld [vmem:[#allocation2 + $0xc9] sm:$0xff]
      %v2529 = vld [vmem:[#allocation2 + $0xd1] sm:$0xff]
      %v2530 = vld [vmem:[#allocation2 + $0xd9] sm:$0xff]
      %v2531 = vld [vmem:[#allocation2 + $0xe1] sm:$0xff]
      %v2532 = vld [vmem:[#allocation2 + $0xe9] sm:$0xff]
      %v2533 = vld [vmem:[#allocation2 + $0xf1] sm:$0xff]
      %v2534 = vld [vmem:[#allocation2 + $0xf9] sm:$0xff]
      %v2535 = vld [vmem:[#allocation2 + $0x101] sm:$0xff]
      %v2536 = vld [vmem:[#allocation2 + $0x109] sm:$0xff]
      %v2537 = vpack.c.bf16 %v2504, %v2503
      %v2538 = vpack.c.bf16 %v2506, %v2505
      %v2539 = vpack.c.bf16 %v2508, %v2507
      %v2540 = vpack.c.bf16 %v2510, %v2509
      %v2541 = vpack.c.bf16 %v2512, %v2511
      %v2542 = vpack.c.bf16 %v2514, %v2513
      %v2543 = vpack.c.bf16 %v2516, %v2515
      %v2544 = vpack.c.bf16 %v2518, %v2517
      %v2545 = vpack.c.bf16 %v2520, %v2519
      %v2546 = vpack.c.bf16 %v2522, %v2521
      %v2547 = vpack.c.bf16 %v2524, %v2523
      %v2548 = vpack.c.bf16 %v2526, %v2525
      %v2549 = vpack.c.bf16 %v2528, %v2527
      %v2550 = vpack.c.bf16 %v2530, %v2529
      %v2551 = vpack.c.bf16 %v2532, %v2531
      %v2552 = vpack.c.bf16 %v2534, %v2533
      %v2553 = vpack.c.bf16 %v2536, %v2535
      %v2554 = vld [vmem:[#allocation2 + $0x2] sm:$0xff]
      %v2555 = vld [vmem:[#allocation2 + $0xa] sm:$0xff]
      %v2556 = vld [vmem:[#allocation2 + $0x12] sm:$0xff]
      %v2557 = vld [vmem:[#allocation2 + $0x1a] sm:$0xff]
      %v2558 = vld [vmem:[#allocation2 + $0x22] sm:$0xff]
      %v2559 = vld [vmem:[#allocation2 + $0x2a] sm:$0xff]
      %v2560 = vld [vmem:[#allocation2 + $0x32] sm:$0xff]
      %v2561 = vld [vmem:[#allocation2 + $0x3a] sm:$0xff]
      %v2562 = vld [vmem:[#allocation2 + $0x42] sm:$0xff]
      %v2563 = vld [vmem:[#allocation2 + $0x4a] sm:$0xff]
      %v2564 = vld [vmem:[#allocation2 + $0x52] sm:$0xff]
      %v2565 = vld [vmem:[#allocation2 + $0x5a] sm:$0xff]
      %v2566 = vld [vmem:[#allocation2 + $0x62] sm:$0xff]
      %v2567 = vld [vmem:[#allocation2 + $0x6a] sm:$0xff]
      %v2568 = vld [vmem:[#allocation2 + $0x72] sm:$0xff]
      %v2569 = vld [vmem:[#allocation2 + $0x7a] sm:$0xff]
      %v2570 = vld [vmem:[#allocation2 + $0x82] sm:$0xff]
      %v2571 = vld [vmem:[#allocation2 + $0x8a] sm:$0xff]
      %v2572 = vld [vmem:[#allocation2 + $0x92] sm:$0xff]
      %v2573 = vld [vmem:[#allocation2 + $0x9a] sm:$0xff]
      %v2574 = vld [vmem:[#allocation2 + $0xa2] sm:$0xff]
      %v2575 = vld [vmem:[#allocation2 + $0xaa] sm:$0xff]
      %v2576 = vld [vmem:[#allocation2 + $0xb2] sm:$0xff]
      %v2577 = vld [vmem:[#allocation2 + $0xba] sm:$0xff]
      %v2578 = vld [vmem:[#allocation2 + $0xc2] sm:$0xff]
      %v2579 = vld [vmem:[#allocation2 + $0xca] sm:$0xff]
      %v2580 = vld [vmem:[#allocation2 + $0xd2] sm:$0xff]
      %v2581 = vld [vmem:[#allocation2 + $0xda] sm:$0xff]
      %v2582 = vld [vmem:[#allocation2 + $0xe2] sm:$0xff]
      %v2583 = vld [vmem:[#allocation2 + $0xea] sm:$0xff]
      %v2584 = vld [vmem:[#allocation2 + $0xf2] sm:$0xff]
      %v2585 = vld [vmem:[#allocation2 + $0xfa] sm:$0xff]
      %v2586 = vld [vmem:[#allocation2 + $0x102] sm:$0xff]
      %v2587 = vld [vmem:[#allocation2 + $0x10a] sm:$0xff]
      %v2588 = vpack.c.bf16 %v2555, %v2554
      %v2589 = vpack.c.bf16 %v2557, %v2556
      %v2590 = vpack.c.bf16 %v2559, %v2558
      %v2591 = vpack.c.bf16 %v2561, %v2560
      %v2592 = vpack.c.bf16 %v2563, %v2562
      %v2593 = vpack.c.bf16 %v2565, %v2564
      %v2594 = vpack.c.bf16 %v2567, %v2566
      %v2595 = vpack.c.bf16 %v2569, %v2568
      %v2596 = vpack.c.bf16 %v2571, %v2570
      %v2597 = vpack.c.bf16 %v2573, %v2572
      %v2598 = vpack.c.bf16 %v2575, %v2574
      %v2599 = vpack.c.bf16 %v2577, %v2576
      %v2600 = vpack.c.bf16 %v2579, %v2578
      %v2601 = vpack.c.bf16 %v2581, %v2580
      %v2602 = vpack.c.bf16 %v2583, %v2582
      %v2603 = vpack.c.bf16 %v2585, %v2584
      %v2604 = vpack.c.bf16 %v2587, %v2586
      %v2605 = vld [vmem:[#allocation2 + $0x111] sm:$0xff]
      %v2606 = vld [vmem:[#allocation2 + $0x119] sm:$0xff]
      %v2607 = vpack.c.bf16 %v2606, %v2605
      %v2608 = vld [vmem:[#allocation2 + $0x112] sm:$0xff]
      %v2609 = vld [vmem:[#allocation2 + $0x11a] sm:$0xff]
      %v2610 = vpack.c.bf16 %v2609, %v2608
      %v2611 = vld [vmem:[#allocation2 + $0x13] sm:$0xff]
      %v2612 = vld [vmem:[#allocation2 + $0x1b] sm:$0xff]
      %v2613 = vld [vmem:[#allocation2 + $0x23] sm:$0xff]
      %v2614 = vld [vmem:[#allocation2 + $0x2b] sm:$0xff]
      %v2615 = vld [vmem:[#allocation2 + $0x33] sm:$0xff]
      %v2616 = vld [vmem:[#allocation2 + $0x3b] sm:$0xff]
      %v2617 = vld [vmem:[#allocation2 + $0x43] sm:$0xff]
      %v2618 = vld [vmem:[#allocation2 + $0x4b] sm:$0xff]
      %v2619 = vld [vmem:[#allocation2 + $0x53] sm:$0xff]
      %v2620 = vld [vmem:[#allocation2 + $0x5b] sm:$0xff]
      %v2621 = vld [vmem:[#allocation2 + $0x63] sm:$0xff]
      %v2622 = vld [vmem:[#allocation2 + $0x6b] sm:$0xff]
      %v2623 = vld [vmem:[#allocation2 + $0x73] sm:$0xff]
      %v2624 = vld [vmem:[#allocation2 + $0x7b] sm:$0xff]
      %v2625 = vld [vmem:[#allocation2 + $0x83] sm:$0xff]
      %v2626 = vld [vmem:[#allocation2 + $0x8b] sm:$0xff]
      %v2627 = vld [vmem:[#allocation2 + $0x93] sm:$0xff]
      %v2628 = vld [vmem:[#allocation2 + $0x9b] sm:$0xff]
      %v2629 = vld [vmem:[#allocation2 + $0xa3] sm:$0xff]
      %v2630 = vld [vmem:[#allocation2 + $0xab] sm:$0xff]
      %v2631 = vld [vmem:[#allocation2 + $0xb3] sm:$0xff]
      %v2632 = vld [vmem:[#allocation2 + $0xbb] sm:$0xff]
      %v2633 = vld [vmem:[#allocation2 + $0xc3] sm:$0xff]
      %v2634 = vld [vmem:[#allocation2 + $0xcb] sm:$0xff]
      %v2635 = vld [vmem:[#allocation2 + $0xd3] sm:$0xff]
      %v2636 = vld [vmem:[#allocation2 + $0xdb] sm:$0xff]
      %v2637 = vld [vmem:[#allocation2 + $0xe3] sm:$0xff]
      %v2638 = vld [vmem:[#allocation2 + $0xeb] sm:$0xff]
      %v2639 = vld [vmem:[#allocation2 + $0xf3] sm:$0xff]
      %v2640 = vld [vmem:[#allocation2 + $0xfb] sm:$0xff]
      %v2641 = vld [vmem:[#allocation2 + $0x103] sm:$0xff]
      %v2642 = vld [vmem:[#allocation2 + $0x10b] sm:$0xff]
      %v2643 = vld [vmem:[#allocation2 + $0x113] sm:$0xff]
      %v2644 = vld [vmem:[#allocation2 + $0x11b] sm:$0xff]
      %v2645 = vpack.c.bf16 %v2612, %v2611
      %v2646 = vpack.c.bf16 %v2614, %v2613
      %v2647 = vpack.c.bf16 %v2616, %v2615
      %v2648 = vpack.c.bf16 %v2618, %v2617
      %v2649 = vpack.c.bf16 %v2620, %v2619
      %v2650 = vpack.c.bf16 %v2622, %v2621
      %v2651 = vpack.c.bf16 %v2624, %v2623
      %v2652 = vpack.c.bf16 %v2626, %v2625
      %v2653 = vpack.c.bf16 %v2628, %v2627
      %v2654 = vpack.c.bf16 %v2630, %v2629
      %v2655 = vpack.c.bf16 %v2632, %v2631
      %v2656 = vpack.c.bf16 %v2634, %v2633
      %v2657 = vpack.c.bf16 %v2636, %v2635
      %v2658 = vpack.c.bf16 %v2638, %v2637
      %v2659 = vpack.c.bf16 %v2640, %v2639
      %v2660 = vpack.c.bf16 %v2642, %v2641
      %v2661 = vpack.c.bf16 %v2644, %v2643
      %v2662 = vld [vmem:[#allocation2 + $0x122] sm:$0xff]
      %v2663 = vld [vmem:[#allocation2 + $0x12a] sm:$0xff]
      %v2664 = vpack.c.bf16 %v2663, %v2662
      %v2665 = vld [vmem:[#allocation2 + $0x123] sm:$0xff]
      %v2666 = vld [vmem:[#allocation2 + $0x12b] sm:$0xff]
      %v2667 = vpack.c.bf16 %v2666, %v2665
      %v2668 = vld [vmem:[#allocation2 + $0x24] sm:$0xff]
      %v2669 = vld [vmem:[#allocation2 + $0x2c] sm:$0xff]
      %v2670 = vld [vmem:[#allocation2 + $0x34] sm:$0xff]
      %v2671 = vld [vmem:[#allocation2 + $0x3c] sm:$0xff]
      %v2672 = vld [vmem:[#allocation2 + $0x44] sm:$0xff]
      %v2673 = vld [vmem:[#allocation2 + $0x4c] sm:$0xff]
      %v2674 = vld [vmem:[#allocation2 + $0x54] sm:$0xff]
      %v2675 = vld [vmem:[#allocation2 + $0x5c] sm:$0xff]
      %v2676 = vld [vmem:[#allocation2 + $0x64] sm:$0xff]
      %v2677 = vld [vmem:[#allocation2 + $0x6c] sm:$0xff]
      %v2678 = vld [vmem:[#allocation2 + $0x74] sm:$0xff]
      %v2679 = vld [vmem:[#allocation2 + $0x7c] sm:$0xff]
      %v2680 = vld [vmem:[#allocation2 + $0x84] sm:$0xff]
      %v2681 = vld [vmem:[#allocation2 + $0x8c] sm:$0xff]
      %v2682 = vld [vmem:[#allocation2 + $0x94] sm:$0xff]
      %v2683 = vld [vmem:[#allocation2 + $0x9c] sm:$0xff]
      %v2684 = vld [vmem:[#allocation2 + $0xa4] sm:$0xff]
      %v2685 = vld [vmem:[#allocation2 + $0xac] sm:$0xff]
      %v2686 = vld [vmem:[#allocation2 + $0xb4] sm:$0xff]
      %v2687 = vld [vmem:[#allocation2 + $0xbc] sm:$0xff]
      %v2688 = vld [vmem:[#allocation2 + $0xc4] sm:$0xff]
      %v2689 = vld [vmem:[#allocation2 + $0xcc] sm:$0xff]
      %v2690 = vld [vmem:[#allocation2 + $0xd4] sm:$0xff]
      %v2691 = vld [vmem:[#allocation2 + $0xdc] sm:$0xff]
      %v2692 = vld [vmem:[#allocation2 + $0xe4] sm:$0xff]
      %v2693 = vld [vmem:[#allocation2 + $0xec] sm:$0xff]
      %v2694 = vld [vmem:[#allocation2 + $0xf4] sm:$0xff]
      %v2695 = vld [vmem:[#allocation2 + $0xfc] sm:$0xff]
      %v2696 = vld [vmem:[#allocation2 + $0x104] sm:$0xff]
      %v2697 = vld [vmem:[#allocation2 + $0x10c] sm:$0xff]
      %v2698 = vld [vmem:[#allocation2 + $0x114] sm:$0xff]
      %v2699 = vld [vmem:[#allocation2 + $0x11c] sm:$0xff]
      %v2700 = vld [vmem:[#allocation2 + $0x124] sm:$0xff]
      %v2701 = vld [vmem:[#allocation2 + $0x12c] sm:$0xff]
      %v2702 = vpack.c.bf16 %v2669, %v2668
      %v2703 = vpack.c.bf16 %v2671, %v2670
      %v2704 = vpack.c.bf16 %v2673, %v2672
      %v2705 = vpack.c.bf16 %v2675, %v2674
      %v2706 = vpack.c.bf16 %v2677, %v2676
      %v2707 = vpack.c.bf16 %v2679, %v2678
      %v2708 = vpack.c.bf16 %v2681, %v2680
      %v2709 = vpack.c.bf16 %v2683, %v2682
      %v2710 = vpack.c.bf16 %v2685, %v2684
      %v2711 = vpack.c.bf16 %v2687, %v2686
      %v2712 = vpack.c.bf16 %v2689, %v2688
      %v2713 = vpack.c.bf16 %v2691, %v2690
      %v2714 = vpack.c.bf16 %v2693, %v2692
      %v2715 = vpack.c.bf16 %v2695, %v2694
      %v2716 = vpack.c.bf16 %v2697, %v2696
      %v2717 = vpack.c.bf16 %v2699, %v2698
      %v2718 = vpack.c.bf16 %v2701, %v2700
      %s2719 = scalar_lea.vmem %s1, 2304
      %v2720 = vld [vmem:[%s2719] sm:$0xf]
      %v2721 = vld [vmem:[%s2719 + $0x4] sm:$0xf]
      %v2722 = vld [vmem:[%s2719 + $0x8] sm:$0xf]
      %v2723 = vld [vmem:[%s2719 + $0xc] sm:$0xf]
      %v2724 = vld [vmem:[%s2719 + $0x10] sm:$0xf]
      %v2725 = vld [vmem:[%s2719 + $0x14] sm:$0xf]
      %v2726 = vld [vmem:[%s2719 + $0x18] sm:$0xf]
      %v2727 = vld [vmem:[%s2719 + $0x1c] sm:$0xf]
      %v2728 = vld [vmem:[%s2719 + $0x20] sm:$0xf]
      %v2729 = vld [vmem:[%s2719 + $0x24] sm:$0xf]
      %v2730 = vld [vmem:[%s2719 + $0x28] sm:$0xf]
      %v2731 = vld [vmem:[%s2719 + $0x2c] sm:$0xf]
      %v2732 = vld [vmem:[%s2719 + $0x30] sm:$0xf]
      %v2733 = vld [vmem:[%s2719 + $0x34] sm:$0xf]
      %v2734 = vld [vmem:[%s2719 + $0x38] sm:$0xf]
      %v2735 = vld [vmem:[%s2719 + $0x3c] sm:$0xf]
      %v2736 = vld [vmem:[%s2719 + $0x40] sm:$0xf]
      %v2737 = vld [vmem:[%s2719 + $0x44] sm:$0xf]
      %v2738 = vld [vmem:[%s2719 + $0x48] sm:$0xf]
      %v2739 = vld [vmem:[%s2719 + $0x4c] sm:$0xf]
      %v2740 = vld [vmem:[%s2719 + $0x50] sm:$0xf]
      %v2741 = vld [vmem:[%s2719 + $0x54] sm:$0xf]
      %v2742 = vld [vmem:[%s2719 + $0x58] sm:$0xf]
      %v2743 = vld [vmem:[%s2719 + $0x5c] sm:$0xf]
      %v2744 = vld [vmem:[%s2719 + $0x60] sm:$0xf]
      %v2745 = vld [vmem:[%s2719 + $0x64] sm:$0xf]
      %v2746 = vld [vmem:[%s2719 + $0x68] sm:$0xf]
      %v2747 = vld [vmem:[%s2719 + $0x6c] sm:$0xf]
      %v2748 = vld [vmem:[%s2719 + $0x70] sm:$0xf]
      %v2749 = vld [vmem:[%s2719 + $0x74] sm:$0xf]
      %v2750 = vld [vmem:[%s2719 + $0x78] sm:$0xf]
      %v2751 = vld [vmem:[%s2719 + $0x7c] sm:$0xf]
      %v2752 = vld [vmem:[%s2719 + $0x80] sm:$0xf]
      %v2753 = vld [vmem:[%s2719 + $0x84] sm:$0xf]
      %v2754 = vld [vmem:[%s2719 + $0x88] sm:$0xf]
      %v2755 = vld [vmem:[%s2719 + $0x8c] sm:$0xf]
      %v2756 = vld [vmem:[%s2719 + $0x90] sm:$0xf]
      %v2757 = vld [vmem:[%s2719 + $0x94] sm:$0xf]
      %v2758 = vld [vmem:[%s2719 + $0x98] sm:$0xf]
      %v2759 = vld [vmem:[%s2719 + $0x9c] sm:$0xf]
      %v2760 = vld [vmem:[%s2719 + $0xa0] sm:$0xf]
      %v2761 = vld [vmem:[%s2719 + $0xa4] sm:$0xf]
      %v2762 = vld [vmem:[%s2719 + $0xa8] sm:$0xf]
      %v2763 = vld [vmem:[%s2719 + $0xac] sm:$0xf]
      %v2764 = vld [vmem:[%s2719 + $0xb0] sm:$0xf]
      %v2765 = vld [vmem:[%s2719 + $0xb4] sm:$0xf]
      %v2766 = vld [vmem:[%s2719 + $0xb8] sm:$0xf]
      %v2767 = vld [vmem:[%s2719 + $0xbc] sm:$0xf]
      %v2768 = vld [vmem:[%s2719 + $0xc0] sm:$0xf]
      %v2769 = vld [vmem:[%s2719 + $0xc4] sm:$0xf]
      %v2770 = vld [vmem:[%s2719 + $0xc8] sm:$0xf]
      %v2771 = vld [vmem:[%s2719 + $0xcc] sm:$0xf]
      %v2772 = vld [vmem:[%s2719 + $0xd0] sm:$0xf]
      %v2773 = vld [vmem:[%s2719 + $0xd4] sm:$0xf]
      %v2774 = vld [vmem:[%s2719 + $0xd8] sm:$0xf]
      %v2775 = vld [vmem:[%s2719 + $0xdc] sm:$0xf]
      %v2776 = vld [vmem:[%s2719 + $0xe0] sm:$0xf]
      %v2777 = vld [vmem:[%s2719 + $0xe4] sm:$0xf]
      %v2778 = vld [vmem:[%s2719 + $0xe8] sm:$0xf]
      %v2779 = vld [vmem:[%s2719 + $0xec] sm:$0xf]
      %v2780 = vld [vmem:[%s2719 + $0xf0] sm:$0xf]
      %v2781 = vld [vmem:[%s2719 + $0xf4] sm:$0xf]
      %v2782 = vld [vmem:[%s2719 + $0xf8] sm:$0xf]
      %v2783 = vld [vmem:[%s2719 + $0xfc] sm:$0xf]
      %v2784 = vld [vmem:[%s2719 + $0x100] sm:$0xf]
      %v2785 = vld [vmem:[%s2719 + $0x104] sm:$0xf]
      %v2786 = vld [vmem:[%s2719 + $0x108] sm:$0xf]
      %v2787 = vld [vmem:[%s2719 + $0x10c] sm:$0xf]
      %v2788 = vld [vmem:[%s2719 + $0x110] sm:$0xf]
      %v2789 = vld [vmem:[%s2719 + $0x114] sm:$0xf]
      %v2790 = vld [vmem:[%s2719 + $0x118] sm:$0xf]
      %v2791 = vld [vmem:[%s2719 + $0x11c] sm:$0xf]
      %v2792 = vld [vmem:[%s2719 + $0x120] sm:$0xf]
      %v2793 = vld [vmem:[%s2719 + $0x124] sm:$0xf]
      %v2794 = vld [vmem:[%s2719 + $0x128] sm:$0xf]
      %v2795 = vld [vmem:[%s2719 + $0x12c] sm:$0xf]
      %v2796 = vld [vmem:[%s2719 + $0x130] sm:$0xf]
      %v2797 = vld [vmem:[%s2719 + $0x134] sm:$0xf]
      %v2798 = vld [vmem:[%s2719 + $0x138] sm:$0xf]
      %v2799 = vld [vmem:[%s2719 + $0x13c] sm:$0xf]
      %v2800 = vld [vmem:[%s2719 + $0x140] sm:$0xf]
      %v2801 = vld [vmem:[%s2719 + $0x144] sm:$0xf]
      %v2802 = vld [vmem:[%s2719 + $0x148] sm:$0xf]
      %v2803 = vld [vmem:[%s2719 + $0x14c] sm:$0xf]
      %v2804 = vld [vmem:[%s2719 + $0x150] sm:$0xf]
      %v2805 = vld [vmem:[%s2719 + $0x154] sm:$0xf]
      %v2806 = vld [vmem:[%s2719 + $0x158] sm:$0xf]
      %v2807 = vld [vmem:[%s2719 + $0x15c] sm:$0xf]
      %v2808 = vld [vmem:[%s2719 + $0x160] sm:$0xf]
      %v2809 = vld [vmem:[%s2719 + $0x164] sm:$0xf]
      %v2810 = vld [vmem:[%s2719 + $0x168] sm:$0xf]
      %v2811 = vld [vmem:[%s2719 + $0x16c] sm:$0xf]
      %v2812 = vld [vmem:[%s2719 + $0x170] sm:$0xf]
      %v2813 = vld [vmem:[%s2719 + $0x174] sm:$0xf]
      %v2814 = vld [vmem:[%s2719 + $0x178] sm:$0xf]
      %v2815 = vld [vmem:[%s2719 + $0x17c] sm:$0xf]
      %v2816 = vld [vmem:[%s2719 + $0x180] sm:$0xf]
      %v2817 = vld [vmem:[%s2719 + $0x184] sm:$0xf]
      %v2818 = vld [vmem:[%s2719 + $0x188] sm:$0xf]
      %v2819 = vld [vmem:[%s2719 + $0x18c] sm:$0xf]
      %v2820 = vld [vmem:[%s2719 + $0x190] sm:$0xf]
      %v2821 = vld [vmem:[%s2719 + $0x194] sm:$0xf]
      %v2822 = vld [vmem:[%s2719 + $0x198] sm:$0xf]
      %v2823 = vld [vmem:[%s2719 + $0x19c] sm:$0xf]
      %v2824 = vld [vmem:[%s2719 + $0x1a0] sm:$0xf]
      %v2825 = vld [vmem:[%s2719 + $0x1a4] sm:$0xf]
      %v2826 = vld [vmem:[%s2719 + $0x1a8] sm:$0xf]
      %v2827 = vld [vmem:[%s2719 + $0x1ac] sm:$0xf]
      %v2828 = vld [vmem:[%s2719 + $0x1b0] sm:$0xf]
      %v2829 = vld [vmem:[%s2719 + $0x1b4] sm:$0xf]
      %v2830 = vld [vmem:[%s2719 + $0x1b8] sm:$0xf]
      %v2831 = vld [vmem:[%s2719 + $0x1bc] sm:$0xf]
      %v2832 = vld [vmem:[%s2719 + $0x1c0] sm:$0xf]
      %v2833 = vld [vmem:[%s2719 + $0x1c4] sm:$0xf]
      %v2834 = vld [vmem:[%s2719 + $0x1c8] sm:$0xf]
      %v2835 = vld [vmem:[%s2719 + $0x1cc] sm:$0xf]
      %v2836 = vld [vmem:[%s2719 + $0x1d0] sm:$0xf]
      %v2837 = vld [vmem:[%s2719 + $0x1d4] sm:$0xf]
      %v2838 = vld [vmem:[%s2719 + $0x1d8] sm:$0xf]
      %v2839 = vld [vmem:[%s2719 + $0x1dc] sm:$0xf]
      %v2840 = vld [vmem:[%s2719 + $0x1e0] sm:$0xf]
      %v2841 = vld [vmem:[%s2719 + $0x1e4] sm:$0xf]
      %v2842 = vld [vmem:[%s2719 + $0x1e8] sm:$0xf]
      %v2843 = vld [vmem:[%s2719 + $0x1ec] sm:$0xf]
      %v2844 = vld [vmem:[%s2719 + $0x1f0] sm:$0xf]
      %v2845 = vld [vmem:[%s2719 + $0x1f4] sm:$0xf]
      %v2846 = vld [vmem:[%s2719 + $0x1f8] sm:$0xf]
      %v2847 = vld [vmem:[%s2719 + $0x1fc] sm:$0xf]
      %v2848 = vld [vmem:[%s2719 + $0x200] sm:$0xf]
      %v2849 = vld [vmem:[%s2719 + $0x204] sm:$0xf]
      %v2850 = vld [vmem:[%s2719 + $0x208] sm:$0xf]
      %v2851 = vld [vmem:[%s2719 + $0x20c] sm:$0xf]
      %v2852 = vld [vmem:[%s2719 + $0x210] sm:$0xf]
      %v2853 = vld [vmem:[%s2719 + $0x214] sm:$0xf]
      %v2854 = vld [vmem:[%s2719 + $0x218] sm:$0xf]
      %v2855 = vld [vmem:[%s2719 + $0x21c] sm:$0xf]
      %v2856 = vld [vmem:[%s2719 + $0x220] sm:$0xf]
      %v2857 = vld [vmem:[%s2719 + $0x224] sm:$0xf]
      %v2858 = vld [vmem:[%s2719 + $0x228] sm:$0xf]
      %v2859 = vld [vmem:[%s2719 + $0x22c] sm:$0xf]
      %v2860 = vld [vmem:[%s2719 + $0x230] sm:$0xf]
      %v2861 = vld [vmem:[%s2719 + $0x234] sm:$0xf]
      %v2862 = vld [vmem:[%s2719 + $0x238] sm:$0xf]
      %v2863 = vld [vmem:[%s2719 + $0x23c] sm:$0xf]
      %s2864 = scalar_lea.vmem %s2, 4
      %v2865 = vld [vmem:[%s2864] sm:$0x1]
      %v2867 = vlaneseq
      %v2868 = vshrl.u32 %v2867, 7
      %v2869 = vsub.s32 0, %v2868
      %v2870 = vrot.slane %v2865, %v2869
      %v3016 = vunpack.c.l.b16 %v2720
      %v3017 = vunpack.c.l.b16 %v2721
      %v3018 = vunpack.c.l.b16 %v2722
      %v3019 = vunpack.c.l.b16 %v2723
      %v3020 = vunpack.c.l.b16 %v2724
      %v3021 = vunpack.c.l.b16 %v2725
      %v3022 = vunpack.c.l.b16 %v2726
      %v3023 = vunpack.c.l.b16 %v2727
      %v3024 = vunpack.c.l.b16 %v2728
      %v3025 = vunpack.c.l.b16 %v2729
      %v3026 = vunpack.c.l.b16 %v2730
      %v3027 = vunpack.c.l.b16 %v2731
      %v3028 = vunpack.c.l.b16 %v2732
      %v3029 = vunpack.c.l.b16 %v2733
      %v3030 = vunpack.c.l.b16 %v2734
      %v3031 = vunpack.c.l.b16 %v2735
      %v3032 = vunpack.c.l.b16 %v2736
      %v3033 = vunpack.c.l.b16 %v2737
      %v3034 = vunpack.c.l.b16 %v2738
      %v3035 = vunpack.c.l.b16 %v2739
      %v3036 = vunpack.c.l.b16 %v2740
      %v3037 = vunpack.c.l.b16 %v2741
      %v3038 = vunpack.c.l.b16 %v2742
      %v3039 = vunpack.c.l.b16 %v2743
      %v3040 = vunpack.c.l.b16 %v2744
      %v3041 = vunpack.c.l.b16 %v2745
      %v3042 = vunpack.c.l.b16 %v2746
      %v3043 = vunpack.c.l.b16 %v2747
      %v3044 = vunpack.c.l.b16 %v2748
      %v3045 = vunpack.c.l.b16 %v2749
      %v3046 = vunpack.c.l.b16 %v2750
      %v3047 = vunpack.c.l.b16 %v2751
      %v3048 = vunpack.c.l.b16 %v2752
      %v3049 = vunpack.c.l.b16 %v2753
      %v3050 = vunpack.c.l.b16 %v2754
      %v3051 = vunpack.c.l.b16 %v2755
      %v3052 = vunpack.c.l.b16 %v2756
      %v3053 = vunpack.c.l.b16 %v2757
      %v3054 = vunpack.c.l.b16 %v2758
      %v3055 = vunpack.c.l.b16 %v2759
      %v3056 = vunpack.c.l.b16 %v2760
      %v3057 = vunpack.c.l.b16 %v2761
      %v3058 = vunpack.c.l.b16 %v2762
      %v3059 = vunpack.c.l.b16 %v2763
      %v3060 = vunpack.c.l.b16 %v2764
      %v3061 = vunpack.c.l.b16 %v2765
      %v3062 = vunpack.c.l.b16 %v2766
      %v3063 = vunpack.c.l.b16 %v2767
      %v3064 = vunpack.c.l.b16 %v2768
      %v3065 = vunpack.c.l.b16 %v2769
      %v3066 = vunpack.c.l.b16 %v2770
      %v3067 = vunpack.c.l.b16 %v2771
      %v3068 = vunpack.c.l.b16 %v2772
      %v3069 = vunpack.c.l.b16 %v2773
      %v3070 = vunpack.c.l.b16 %v2774
      %v3071 = vunpack.c.l.b16 %v2775
      %v3072 = vunpack.c.l.b16 %v2776
      %v3073 = vunpack.c.l.b16 %v2777
      %v3074 = vunpack.c.l.b16 %v2778
      %v3075 = vunpack.c.l.b16 %v2779
      %v3076 = vunpack.c.l.b16 %v2780
      %v3077 = vunpack.c.l.b16 %v2781
      %v3078 = vunpack.c.l.b16 %v2782
      %v3079 = vunpack.c.l.b16 %v2783
      %v3080 = vunpack.c.l.b16 %v2784
      %v3081 = vunpack.c.l.b16 %v2785
      %v3082 = vunpack.c.l.b16 %v2786
      %v3083 = vunpack.c.l.b16 %v2787
      %v3084 = vunpack.c.l.b16 %v2788
      %v3085 = vunpack.c.l.b16 %v2789
      %v3086 = vunpack.c.l.b16 %v2790
      %v3087 = vunpack.c.l.b16 %v2791
      %v3088 = vunpack.c.l.b16 %v2792
      %v3089 = vunpack.c.l.b16 %v2793
      %v3090 = vunpack.c.l.b16 %v2794
      %v3091 = vunpack.c.l.b16 %v2795
      %v3092 = vunpack.c.l.b16 %v2796
      %v3093 = vunpack.c.l.b16 %v2797
      %v3094 = vunpack.c.l.b16 %v2798
      %v3095 = vunpack.c.l.b16 %v2799
      %v3096 = vunpack.c.l.b16 %v2800
      %v3097 = vunpack.c.l.b16 %v2801
      %v3098 = vunpack.c.l.b16 %v2802
      %v3099 = vunpack.c.l.b16 %v2803
      %v3100 = vunpack.c.l.b16 %v2804
      %v3101 = vunpack.c.l.b16 %v2805
      %v3102 = vunpack.c.l.b16 %v2806
      %v3103 = vunpack.c.l.b16 %v2807
      %v3104 = vunpack.c.l.b16 %v2808
      %v3105 = vunpack.c.l.b16 %v2809
      %v3106 = vunpack.c.l.b16 %v2810
      %v3107 = vunpack.c.l.b16 %v2811
      %v3108 = vunpack.c.l.b16 %v2812
      %v3109 = vunpack.c.l.b16 %v2813
      %v3110 = vunpack.c.l.b16 %v2814
      %v3111 = vunpack.c.l.b16 %v2815
      %v3112 = vunpack.c.l.b16 %v2816
      %v3113 = vunpack.c.l.b16 %v2817
      %v3114 = vunpack.c.l.b16 %v2818
      %v3115 = vunpack.c.l.b16 %v2819
      %v3116 = vunpack.c.l.b16 %v2820
      %v3117 = vunpack.c.l.b16 %v2821
      %v3118 = vunpack.c.l.b16 %v2822
      %v3119 = vunpack.c.l.b16 %v2823
      %v3120 = vunpack.c.l.b16 %v2824
      %v3121 = vunpack.c.l.b16 %v2825
      %v3122 = vunpack.c.l.b16 %v2826
      %v3123 = vunpack.c.l.b16 %v2827
      %v3124 = vunpack.c.l.b16 %v2828
      %v3125 = vunpack.c.l.b16 %v2829
      %v3126 = vunpack.c.l.b16 %v2830
      %v3127 = vunpack.c.l.b16 %v2831
      %v3128 = vunpack.c.l.b16 %v2832
      %v3129 = vunpack.c.l.b16 %v2833
      %v3130 = vunpack.c.l.b16 %v2834
      %v3131 = vunpack.c.l.b16 %v2835
      %v3132 = vunpack.c.l.b16 %v2836
      %v3133 = vunpack.c.l.b16 %v2837
      %v3134 = vunpack.c.l.b16 %v2838
      %v3135 = vunpack.c.l.b16 %v2839
      %v3136 = vunpack.c.l.b16 %v2840
      %v3137 = vunpack.c.l.b16 %v2841
      %v3138 = vunpack.c.l.b16 %v2842
      %v3139 = vunpack.c.l.b16 %v2843
      %v3140 = vunpack.c.l.b16 %v2844
      %v3141 = vunpack.c.l.b16 %v2845
      %v3142 = vunpack.c.l.b16 %v2846
      %v3143 = vunpack.c.l.b16 %v2847
      %v3144 = vunpack.c.l.b16 %v2848
      %v3145 = vunpack.c.l.b16 %v2849
      %v3146 = vunpack.c.l.b16 %v2850
      %v3147 = vunpack.c.l.b16 %v2851
      %v3148 = vunpack.c.l.b16 %v2852
      %v3149 = vunpack.c.l.b16 %v2853
      %v3150 = vunpack.c.l.b16 %v2854
      %v3151 = vunpack.c.l.b16 %v2855
      %v3152 = vunpack.c.l.b16 %v2856
      %v3153 = vunpack.c.l.b16 %v2857
      %v3154 = vunpack.c.l.b16 %v2858
      %v3155 = vunpack.c.l.b16 %v2859
      %v3156 = vunpack.c.l.b16 %v2860
      %v3157 = vunpack.c.l.b16 %v2861
      %v3158 = vunpack.c.l.b16 %v2862
      %v3159 = vunpack.c.l.b16 %v2863
      %v3160 = vpack.c.b16 %v3017, %v3016
      %v3161 = vpack.c.b16 %v3019, %v3018
      %v3162 = vpack.c.b16 %v3021, %v3020
      %v3163 = vpack.c.b16 %v3023, %v3022
      %v3164 = vpack.c.b16 %v3025, %v3024
      %v3165 = vpack.c.b16 %v3027, %v3026
      %v3166 = vpack.c.b16 %v3029, %v3028
      %v3167 = vpack.c.b16 %v3031, %v3030
      %v3168 = vpack.c.b16 %v3033, %v3032
      %v3169 = vpack.c.b16 %v3035, %v3034
      %v3170 = vpack.c.b16 %v3037, %v3036
      %v3171 = vpack.c.b16 %v3039, %v3038
      %v3172 = vpack.c.b16 %v3041, %v3040
      %v3173 = vpack.c.b16 %v3043, %v3042
      %v3174 = vpack.c.b16 %v3045, %v3044
      %v3175 = vpack.c.b16 %v3047, %v3046
      %v3176 = vpack.c.b16 %v3049, %v3048
      %v3177 = vpack.c.b16 %v3051, %v3050
      %v3178 = vpack.c.b16 %v3053, %v3052
      %v3179 = vpack.c.b16 %v3055, %v3054
      %v3180 = vpack.c.b16 %v3057, %v3056
      %v3181 = vpack.c.b16 %v3059, %v3058
      %v3182 = vpack.c.b16 %v3061, %v3060
      %v3183 = vpack.c.b16 %v3063, %v3062
      %v3184 = vpack.c.b16 %v3065, %v3064
      %v3185 = vpack.c.b16 %v3067, %v3066
      %v3186 = vpack.c.b16 %v3069, %v3068
      %v3187 = vpack.c.b16 %v3071, %v3070
      %v3188 = vpack.c.b16 %v3073, %v3072
      %v3189 = vpack.c.b16 %v3075, %v3074
      %v3190 = vpack.c.b16 %v3077, %v3076
      %v3191 = vpack.c.b16 %v3079, %v3078
      %v3192 = vpack.c.b16 %v3081, %v3080
      %v3193 = vpack.c.b16 %v3083, %v3082
      %v3194 = vpack.c.b16 %v3085, %v3084
      %v3195 = vpack.c.b16 %v3087, %v3086
      %v3196 = vpack.c.b16 %v3089, %v3088
      %v3197 = vpack.c.b16 %v3091, %v3090
      %v3198 = vpack.c.b16 %v3093, %v3092
      %v3199 = vpack.c.b16 %v3095, %v3094
      %v3200 = vpack.c.b16 %v3097, %v3096
      %v3201 = vpack.c.b16 %v3099, %v3098
      %v3202 = vpack.c.b16 %v3101, %v3100
      %v3203 = vpack.c.b16 %v3103, %v3102
      %v3204 = vpack.c.b16 %v3105, %v3104
      %v3205 = vpack.c.b16 %v3107, %v3106
      %v3206 = vpack.c.b16 %v3109, %v3108
      %v3207 = vpack.c.b16 %v3111, %v3110
      %v3208 = vpack.c.b16 %v3113, %v3112
      %v3209 = vpack.c.b16 %v3115, %v3114
      %v3210 = vpack.c.b16 %v3117, %v3116
      %v3211 = vpack.c.b16 %v3119, %v3118
      %v3212 = vpack.c.b16 %v3121, %v3120
      %v3213 = vpack.c.b16 %v3123, %v3122
      %v3214 = vpack.c.b16 %v3125, %v3124
      %v3215 = vpack.c.b16 %v3127, %v3126
      %v3216 = vpack.c.b16 %v3129, %v3128
      %v3217 = vpack.c.b16 %v3131, %v3130
      %v3218 = vpack.c.b16 %v3133, %v3132
      %v3219 = vpack.c.b16 %v3135, %v3134
      %v3220 = vpack.c.b16 %v3137, %v3136
      %v3221 = vpack.c.b16 %v3139, %v3138
      %v3222 = vpack.c.b16 %v3141, %v3140
      %v3223 = vpack.c.b16 %v3143, %v3142
      %v3224 = vpack.c.b16 %v3145, %v3144
      %v3225 = vpack.c.b16 %v3147, %v3146
      %v3226 = vpack.c.b16 %v3149, %v3148
      %v3227 = vpack.c.b16 %v3151, %v3150
      %v3228 = vpack.c.b16 %v3153, %v3152
      %v3229 = vpack.c.b16 %v3155, %v3154
      %v3230 = vpack.c.b16 %v3157, %v3156
      %v3231 = vpack.c.b16 %v3159, %v3158
      %3304 = vmatprep.subr.bf16.mxu0 0
      %3305 = vmatpush1.bf16.msra.mxu0 %v3160
      %3306 = vmatprep.subr.bf16.mxu0 0
      %3307 = vmatpush1.bf16.msra.mxu0 %v3161
      %3308 = vmatprep.subr.bf16.mxu0 0
      %3309 = vmatpush1.bf16.msra.mxu0 %v3162
      %3310 = vmatprep.subr.bf16.mxu0 0
      %3311 = vmatpush1.bf16.msra.mxu0 %v3163
      %3312 = vmatprep.subr.bf16.mxu0 0
      %3313 = vmatpush1.bf16.msra.mxu0 %v3164
      %3314 = vmatprep.subr.bf16.mxu0 0
      %3315 = vmatpush1.bf16.msra.mxu0 %v3165
      %3316 = vmatprep.subr.bf16.mxu0 0
      %3317 = vmatpush1.bf16.msra.mxu0 %v3166
      %3318 = vmatprep.subr.bf16.mxu0 0
      %3319 = vmatpush1.bf16.msra.mxu0 %v3167
      %3320 = vmatprep.subr.bf16.mxu0 0
      %3321 = vmatpush1.bf16.msra.mxu0 %v3168
      %3322 = vmatprep.subr.bf16.mxu0 0
      %3323 = vmatpush1.bf16.msra.mxu0 %v3169
      %3324 = vmatprep.subr.bf16.mxu0 0
      %3325 = vmatpush1.bf16.msra.mxu0 %v3170
      %3326 = vmatprep.subr.bf16.mxu0 0
      %3327 = vmatpush1.bf16.msra.mxu0 %v3171
      %3328 = vmatprep.subr.bf16.mxu0 0
      %3329 = vmatpush1.bf16.msra.mxu0 %v3172
      %3330 = vmatprep.subr.bf16.mxu0 0
      %3331 = vmatpush1.bf16.msra.mxu0 %v3173
      %3332 = vmatprep.subr.bf16.mxu0 0
      %3333 = vmatpush1.bf16.msra.mxu0 %v3174
      %3334 = vmatprep.subr.bf16.mxu0 0
      %3335 = vmatpush1.bf16.msra.mxu0 %v3175
      %3336 = vmatprep.mubr.bf16.mxu0 %v2537
      %3337 = vmatmul.mubr.bf16.gmra.mrb[0].mxu0 %v2486
      %v3338 = vpop.f32.mrb[0].mxu0
      %v3339 = vadd.f32 %v2870, %v3338
      %v3340 = vpop.f32.mrb[0].mxu0
      %v3341 = vpop.f32.mrb[0].mxu0
      %v3342 = vadd.f32 %v2870, %v3341
      %v3343 = vpop.f32.mrb[0].mxu0
      %3344 = vmatprep.mubr.bf16.mxu0 %v2538
      %3345 = vmatmul.mubr.bf16.gmra.mrb[0].mxu0 %v2487
      %v3346 = vpop.f32.mrb[0].mxu0
      %v3347 = vadd.f32 %v2870, %v3346
      %v3348 = vpop.f32.mrb[0].mxu0
      %v3349 = vpop.f32.mrb[0].mxu0
      %v3350 = vadd.f32 %v2870, %v3349
      %v3351 = vpop.f32.mrb[0].mxu0
      %3352 = vmatprep.mubr.bf16.mxu0 %v2539
      %3353 = vmatmul.mubr.bf16.gmra.mrb[0].mxu0 %v2488
      %v3354 = vpop.f32.mrb[0].mxu0
      %v3355 = vadd.f32 %v2870, %v3354
      %v3356 = vpop.f32.mrb[0].mxu0
      %v3357 = vpop.f32.mrb[0].mxu0
      %v3358 = vadd.f32 %v2870, %v3357
      %v3359 = vpop.f32.mrb[0].mxu0
      %3360 = vmatprep.mubr.bf16.mxu0 %v2540
      %3361 = vmatmul.mubr.bf16.gmra.mrb[0].mxu0 %v2489
      %v3362 = vpop.f32.mrb[0].mxu0
      %v3363 = vadd.f32 %v2870, %v3362
      %v3364 = vpop.f32.mrb[0].mxu0
      %v3365 = vpop.f32.mrb[0].mxu0
      %v3366 = vadd.f32 %v2870, %v3365
      %v3367 = vpop.f32.mrb[0].mxu0
      %3368 = vmatprep.mubr.bf16.mxu0 %v2541
      %3369 = vmatmul.mubr.bf16.gmra.mrb[0].mxu0 %v2490
      %v3370 = vpop.f32.mrb[0].mxu0
      %v3371 = vadd.f32 %v2870, %v3370
      %v3372 = vpop.f32.mrb[0].mxu0
      %v3373 = vpop.f32.mrb[0].mxu0
      %v3374 = vadd.f32 %v2870, %v3373
      %v3375 = vpop.f32.mrb[0].mxu0
      %3376 = vmatprep.mubr.bf16.mxu0 %v2542
      %3377 = vmatmul.mubr.bf16.gmra.mrb[0].mxu0 %v2491
      %v3378 = vpop.f32.mrb[0].mxu0
      %v3379 = vadd.f32 %v2870, %v3378
      %v3380 = vpop.f32.mrb[0].mxu0
      %v3381 = vpop.f32.mrb[0].mxu0
      %v3382 = vadd.f32 %v2870, %v3381
      %v3383 = vpop.f32.mrb[0].mxu0
      %3384 = vmatprep.mubr.bf16.mxu0 %v2543
      %3385 = vmatmul.mubr.bf16.gmra.mrb[0].mxu0 %v2492
      %v3386 = vpop.f32.mrb[0].mxu0
      %v3387 = vadd.f32 %v2870, %v3386
      %v3388 = vpop.f32.mrb[0].mxu0
      %v3389 = vpop.f32.mrb[0].mxu0
      %v3390 = vadd.f32 %v2870, %v3389
      %v3391 = vpop.f32.mrb[0].mxu0
      %3392 = vmatprep.mubr.bf16.mxu0 %v2544
      %3393 = vmatmul.mubr.bf16.gmra.mrb[0].mxu0 %v2493
      %v3394 = vpop.f32.mrb[0].mxu0
      %v3395 = vadd.f32 %v2870, %v3394
      %v3396 = vpop.f32.mrb[0].mxu0
      %v3397 = vpop.f32.mrb[0].mxu0
      %v3398 = vadd.f32 %v2870, %v3397
      %v3399 = vpop.f32.mrb[0].mxu0
      %3400 = vmatprep.mubr.bf16.mxu0 %v2545
      %3401 = vmatmul.mubr.bf16.gmra.mrb[0].mxu0 %v2494
      %v3402 = vpop.f32.mrb[0].mxu0
      %v3403 = vadd.f32 %v2870, %v3402
      %v3404 = vpop.f32.mrb[0].mxu0
      %v3405 = vpop.f32.mrb[0].mxu0
      %v3406 = vadd.f32 %v2870, %v3405
      %v3407 = vpop.f32.mrb[0].mxu0
      %3408 = vmatprep.mubr.bf16.mxu0 %v2546
      %3409 = vmatmul.mubr.bf16.gmra.mrb[0].mxu0 %v2495
      %v3410 = vpop.f32.mrb[0].mxu0
      %v3411 = vadd.f32 %v2870, %v3410
      %v3412 = vpop.f32.mrb[0].mxu0
      %v3413 = vpop.f32.mrb[0].mxu0
      %v3414 = vadd.f32 %v2870, %v3413
      %v3415 = vpop.f32.mrb[0].mxu0
      %3416 = vmatprep.mubr.bf16.mxu0 %v2547
      %3417 = vmatmul.mubr.bf16.gmra.mrb[0].mxu0 %v2496
      %v3418 = vpop.f32.mrb[0].mxu0
      %v3419 = vadd.f32 %v2870, %v3418
      %v3420 = vpop.f32.mrb[0].mxu0
      %v3421 = vpop.f32.mrb[0].mxu0
      %v3422 = vadd.f32 %v2870, %v3421
      %v3423 = vpop.f32.mrb[0].mxu0
      %3424 = vmatprep.mubr.bf16.mxu0 %v2548
      %3425 = vmatmul.mubr.bf16.gmra.mrb[0].mxu0 %v2497
      %v3426 = vpop.f32.mrb[0].mxu0
      %v3427 = vadd.f32 %v2870, %v3426
      %v3428 = vpop.f32.mrb[0].mxu0
      %v3429 = vpop.f32.mrb[0].mxu0
      %v3430 = vadd.f32 %v2870, %v3429
      %v3431 = vpop.f32.mrb[0].mxu0
      %3432 = vmatprep.mubr.bf16.mxu0 %v2549
      %3433 = vmatmul.mubr.bf16.gmra.mrb[0].mxu0 %v2498
      %v3434 = vpop.f32.mrb[0].mxu0
      %v3435 = vadd.f32 %v2870, %v3434
      %v3436 = vpop.f32.mrb[0].mxu0
      %v3437 = vpop.f32.mrb[0].mxu0
      %v3438 = vadd.f32 %v2870, %v3437
      %v3439 = vpop.f32.mrb[0].mxu0
      %3440 = vmatprep.mubr.bf16.mxu0 %v2550
      %3441 = vmatmul.mubr.bf16.gmra.mrb[0].mxu0 %v2499
      %v3442 = vpop.f32.mrb[0].mxu0
      %v3443 = vadd.f32 %v2870, %v3442
      %v3444 = vpop.f32.mrb[0].mxu0
      %v3445 = vpop.f32.mrb[0].mxu0
      %v3446 = vadd.f32 %v2870, %v3445
      %v3447 = vpop.f32.mrb[0].mxu0
      %3448 = vmatprep.mubr.bf16.mxu0 %v2551
      %3449 = vmatmul.mubr.bf16.gmra.mrb[0].mxu0 %v2500
      %v3450 = vpop.f32.mrb[0].mxu0
      %v3451 = vadd.f32 %v2870, %v3450
      %v3452 = vpop.f32.mrb[0].mxu0
      %v3453 = vpop.f32.mrb[0].mxu0
      %v3454 = vadd.f32 %v2870, %v3453
      %v3455 = vpop.f32.mrb[0].mxu0
      %3456 = vmatprep.mubr.bf16.mxu0 %v2552
      %3457 = vmatmul.mubr.bf16.gmra.mrb[0].mxu0 %v2501
      %v3458 = vpop.f32.mrb[0].mxu0
      %v3459 = vadd.f32 %v2870, %v3458
      %v3460 = vpop.f32.mrb[0].mxu0
      %v3461 = vpop.f32.mrb[0].mxu0
      %v3462 = vadd.f32 %v2870, %v3461
      %v3463 = vpop.f32.mrb[0].mxu0
      %3464 = vmatprep.mubr.bf16.mxu0 %v2553
      %3465 = vmatmul.mubr.bf16.gmra.mrb[0].mxu0 %v2502
      %v3466 = vpop.f32.mrb[0].mxu0
      %v3467 = vadd.f32 %v2870, %v3466
      %v3468 = vpop.f32.mrb[0].mxu0
      %v3469 = vpop.f32.mrb[0].mxu0
      %v3470 = vadd.f32 %v2870, %v3469
      %v3471 = vpop.f32.mrb[0].mxu0
      %3472 = vdwg.mxu0
      %3473 = vmatprep.subr.bf16.mxu0 0
      %3474 = vmatpush1.bf16.msra.mxu0 %v3176
      %3475 = vmatprep.subr.bf16.mxu0 0
      %3476 = vmatpush1.bf16.msra.mxu0 %v3177
      %3477 = vmatprep.subr.bf16.mxu0 0
      %3478 = vmatpush1.bf16.msra.mxu0 %v3178
      %3479 = vmatprep.subr.bf16.mxu0 0
      %3480 = vmatpush1.bf16.msra.mxu0 %v3179
      %3481 = vmatprep.subr.bf16.mxu0 0
      %3482 = vmatpush1.bf16.msra.mxu0 %v3180
      %3483 = vmatprep.subr.bf16.mxu0 0
      %3484 = vmatpush1.bf16.msra.mxu0 %v3181
      %3485 = vmatprep.subr.bf16.mxu0 0
      %3486 = vmatpush1.bf16.msra.mxu0 %v3182
      %3487 = vmatprep.subr.bf16.mxu0 0
      %3488 = vmatpush1.bf16.msra.mxu0 %v3183
      %3489 = vmatprep.subr.bf16.mxu0 0
      %3490 = vmatpush1.bf16.msra.mxu0 %v3184
      %3491 = vmatprep.subr.bf16.mxu0 0
      %3492 = vmatpush1.bf16.msra.mxu0 %v3185
      %3493 = vmatprep.subr.bf16.mxu0 0
      %3494 = vmatpush1.bf16.msra.mxu0 %v3186
      %3495 = vmatprep.subr.bf16.mxu0 0
      %3496 = vmatpush1.bf16.msra.mxu0 %v3187
      %3497 = vmatprep.subr.bf16.mxu0 0
      %3498 = vmatpush1.bf16.msra.mxu0 %v3188
      %3499 = vmatprep.subr.bf16.mxu0 0
      %3500 = vmatpush1.bf16.msra.mxu0 %v3189
      %3501 = vmatprep.subr.bf16.mxu0 0
      %3502 = vmatpush1.bf16.msra.mxu0 %v3190
      %3503 = vmatprep.subr.bf16.mxu0 0
      %3504 = vmatpush1.bf16.msra.mxu0 %v3191
      %3505 = vmatprep.mubr.bf16.mxu0 %v2538
      %3506 = vmatmul.mubr.bf16.gmra.mrb[0].mxu0 %v2588
      %v3507 = vpop.f32.mrb[0].mxu0
      %v3508 = vadd.f32 %v3339, %v3507
      %v3509 = vpop.f32.mrb[0].mxu0
      %v3510 = vpop.f32.mrb[0].mxu0
      %v3511 = vadd.f32 %v3342, %v3510
      %v3512 = vpop.f32.mrb[0].mxu0
      %3513 = vmatprep.mubr.bf16.mxu0 %v2539
      %3514 = vmatmul.mubr.bf16.gmra.mrb[0].mxu0 %v2589
      %v3515 = vpop.f32.mrb[0].mxu0
      %v3516 = vadd.f32 %v3347, %v3515
      %v3517 = vpop.f32.mrb[0].mxu0
      %v3518 = vpop.f32.mrb[0].mxu0
      %v3519 = vadd.f32 %v3350, %v3518
      %v3520 = vpop.f32.mrb[0].mxu0
      %3521 = vmatprep.mubr.bf16.mxu0 %v2540
      %3522 = vmatmul.mubr.bf16.gmra.mrb[0].mxu0 %v2590
      %v3523 = vpop.f32.mrb[0].mxu0
      %v3524 = vadd.f32 %v3355, %v3523
      %v3525 = vpop.f32.mrb[0].mxu0
      %v3526 = vpop.f32.mrb[0].mxu0
      %v3527 = vadd.f32 %v3358, %v3526
      %v3528 = vpop.f32.mrb[0].mxu0
      %3529 = vmatprep.mubr.bf16.mxu0 %v2541
      %3530 = vmatmul.mubr.bf16.gmra.mrb[0].mxu0 %v2591
      %v3531 = vpop.f32.mrb[0].mxu0
      %v3532 = vadd.f32 %v3363, %v3531
      %v3533 = vpop.f32.mrb[0].mxu0
      %v3534 = vpop.f32.mrb[0].mxu0
      %v3535 = vadd.f32 %v3366, %v3534
      %v3536 = vpop.f32.mrb[0].mxu0
      %3537 = vmatprep.mubr.bf16.mxu0 %v2542
      %3538 = vmatmul.mubr.bf16.gmra.mrb[0].mxu0 %v2592
      %v3539 = vpop.f32.mrb[0].mxu0
      %v3540 = vadd.f32 %v3371, %v3539
      %v3541 = vpop.f32.mrb[0].mxu0
      %v3542 = vpop.f32.mrb[0].mxu0
      %v3543 = vadd.f32 %v3374, %v3542
      %v3544 = vpop.f32.mrb[0].mxu0
      %3545 = vmatprep.mubr.bf16.mxu0 %v2543
      %3546 = vmatmul.mubr.bf16.gmra.mrb[0].mxu0 %v2593
      %v3547 = vpop.f32.mrb[0].mxu0
      %v3548 = vadd.f32 %v3379, %v3547
      %v3549 = vpop.f32.mrb[0].mxu0
      %v3550 = vpop.f32.mrb[0].mxu0
      %v3551 = vadd.f32 %v3382, %v3550
      %v3552 = vpop.f32.mrb[0].mxu0
      %3553 = vmatprep.mubr.bf16.mxu0 %v2544
      %3554 = vmatmul.mubr.bf16.gmra.mrb[0].mxu0 %v2594
      %v3555 = vpop.f32.mrb[0].mxu0
      %v3556 = vadd.f32 %v3387, %v3555
      %v3557 = vpop.f32.mrb[0].mxu0
      %v3558 = vpop.f32.mrb[0].mxu0
      %v3559 = vadd.f32 %v3390, %v3558
      %v3560 = vpop.f32.mrb[0].mxu0
      %3561 = vmatprep.mubr.bf16.mxu0 %v2545
      %3562 = vmatmul.mubr.bf16.gmra.mrb[0].mxu0 %v2595
      %v3563 = vpop.f32.mrb[0].mxu0
      %v3564 = vadd.f32 %v3395, %v3563
      %v3565 = vpop.f32.mrb[0].mxu0
      %v3566 = vpop.f32.mrb[0].mxu0
      %v3567 = vadd.f32 %v3398, %v3566
      %v3568 = vpop.f32.mrb[0].mxu0
      %3569 = vmatprep.mubr.bf16.mxu0 %v2546
      %3570 = vmatmul.mubr.bf16.gmra.mrb[0].mxu0 %v2596
      %v3571 = vpop.f32.mrb[0].mxu0
      %v3572 = vadd.f32 %v3403, %v3571
      %v3573 = vpop.f32.mrb[0].mxu0
      %v3574 = vpop.f32.mrb[0].mxu0
      %v3575 = vadd.f32 %v3406, %v3574
      %v3576 = vpop.f32.mrb[0].mxu0
      %3577 = vmatprep.mubr.bf16.mxu0 %v2547
      %3578 = vmatmul.mubr.bf16.gmra.mrb[0].mxu0 %v2597
      %v3579 = vpop.f32.mrb[0].mxu0
      %v3580 = vadd.f32 %v3411, %v3579
      %v3581 = vpop.f32.mrb[0].mxu0
      %v3582 = vpop.f32.mrb[0].mxu0
      %v3583 = vadd.f32 %v3414, %v3582
      %v3584 = vpop.f32.mrb[0].mxu0
      %3585 = vmatprep.mubr.bf16.mxu0 %v2548
      %3586 = vmatmul.mubr.bf16.gmra.mrb[0].mxu0 %v2598
      %v3587 = vpop.f32.mrb[0].mxu0
      %v3588 = vadd.f32 %v3419, %v3587
      %v3589 = vpop.f32.mrb[0].mxu0
      %v3590 = vpop.f32.mrb[0].mxu0
      %v3591 = vadd.f32 %v3422, %v3590
      %v3592 = vpop.f32.mrb[0].mxu0
      %3593 = vmatprep.mubr.bf16.mxu0 %v2549
      %3594 = vmatmul.mubr.bf16.gmra.mrb[0].mxu0 %v2599
      %v3595 = vpop.f32.mrb[0].mxu0
      %v3596 = vadd.f32 %v3427, %v3595
      %v3597 = vpop.f32.mrb[0].mxu0
      %v3598 = vpop.f32.mrb[0].mxu0
      %v3599 = vadd.f32 %v3430, %v3598
      %v3600 = vpop.f32.mrb[0].mxu0
      %3601 = vmatprep.mubr.bf16.mxu0 %v2550
      %3602 = vmatmul.mubr.bf16.gmra.mrb[0].mxu0 %v2600
      %v3603 = vpop.f32.mrb[0].mxu0
      %v3604 = vadd.f32 %v3435, %v3603
      %v3605 = vpop.f32.mrb[0].mxu0
      %v3606 = vpop.f32.mrb[0].mxu0
      %v3607 = vadd.f32 %v3438, %v3606
      %v3608 = vpop.f32.mrb[0].mxu0
      %3609 = vmatprep.mubr.bf16.mxu0 %v2551
      %3610 = vmatmul.mubr.bf16.gmra.mrb[0].mxu0 %v2601
      %v3611 = vpop.f32.mrb[0].mxu0
      %v3612 = vadd.f32 %v3443, %v3611
      %v3613 = vpop.f32.mrb[0].mxu0
      %v3614 = vpop.f32.mrb[0].mxu0
      %v3615 = vadd.f32 %v3446, %v3614
      %v3616 = vpop.f32.mrb[0].mxu0
      %3617 = vmatprep.mubr.bf16.mxu0 %v2552
      %3618 = vmatmul.mubr.bf16.gmra.mrb[0].mxu0 %v2602
      %v3619 = vpop.f32.mrb[0].mxu0
      %v3620 = vadd.f32 %v3451, %v3619
      %v3621 = vpop.f32.mrb[0].mxu0
      %v3622 = vpop.f32.mrb[0].mxu0
      %v3623 = vadd.f32 %v3454, %v3622
      %v3624 = vpop.f32.mrb[0].mxu0
      %3625 = vmatprep.mubr.bf16.mxu0 %v2553
      %3626 = vmatmul.mubr.bf16.gmra.mrb[0].mxu0 %v2603
      %v3627 = vpop.f32.mrb[0].mxu0
      %v3628 = vadd.f32 %v3459, %v3627
      %v3629 = vpop.f32.mrb[0].mxu0
      %v3630 = vpop.f32.mrb[0].mxu0
      %v3631 = vadd.f32 %v3462, %v3630
      %v3632 = vpop.f32.mrb[0].mxu0
      %3633 = vmatprep.mubr.bf16.mxu0 %v2607
      %3634 = vmatmul.mubr.bf16.gmra.mrb[0].mxu0 %v2604
      %v3635 = vpop.f32.mrb[0].mxu0
      %v3636 = vadd.f32 %v3467, %v3635
      %v3637 = vpop.f32.mrb[0].mxu0
      %v3638 = vpop.f32.mrb[0].mxu0
      %v3639 = vadd.f32 %v3470, %v3638
      %v3640 = vpop.f32.mrb[0].mxu0
      %3641 = vdwg.mxu0
      %3642 = vmatprep.subr.bf16.mxu0 0
      %3643 = vmatpush1.bf16.msra.mxu0 %v3192
      %3644 = vmatprep.subr.bf16.mxu0 0
      %3645 = vmatpush1.bf16.msra.mxu0 %v3193
      %3646 = vmatprep.subr.bf16.mxu0 0
      %3647 = vmatpush1.bf16.msra.mxu0 %v3194
      %3648 = vmatprep.subr.bf16.mxu0 0
      %3649 = vmatpush1.bf16.msra.mxu0 %v3195
      %3650 = vmatprep.subr.bf16.mxu0 0
      %3651 = vmatpush1.bf16.msra.mxu0 %v3196
      %3652 = vmatprep.subr.bf16.mxu0 0
      %3653 = vmatpush1.bf16.msra.mxu0 %v3197
      %3654 = vmatprep.subr.bf16.mxu0 0
      %3655 = vmatpush1.bf16.msra.mxu0 %v3198
      %3656 = vmatprep.subr.bf16.mxu0 0
      %3657 = vmatpush1.bf16.msra.mxu0 %v3199
      %3658 = vmatprep.subr.bf16.mxu0 0
      %3659 = vmatpush1.bf16.msra.mxu0 %v3200
      %3660 = vmatprep.subr.bf16.mxu0 0
      %3661 = vmatpush1.bf16.msra.mxu0 %v3201
      %3662 = vmatprep.subr.bf16.mxu0 0
      %3663 = vmatpush1.bf16.msra.mxu0 %v3202
      %3664 = vmatprep.subr.bf16.mxu0 0
      %3665 = vmatpush1.bf16.msra.mxu0 %v3203
      %3666 = vmatprep.subr.bf16.mxu0 0
      %3667 = vmatpush1.bf16.msra.mxu0 %v3204
      %3668 = vmatprep.subr.bf16.mxu0 0
      %3669 = vmatpush1.bf16.msra.mxu0 %v3205
      %3670 = vmatprep.subr.bf16.mxu0 0
      %3671 = vmatpush1.bf16.msra.mxu0 %v3206
      %3672 = vmatprep.subr.bf16.mxu0 0
      %3673 = vmatpush1.bf16.msra.mxu0 %v3207
      %3674 = vmatprep.mubr.bf16.mxu0 %v2645
      %3675 = vmatmul.mubr.bf16.gmra.mrb[0].mxu0 %v2589
      %v3676 = vpop.f32.mrb[0].mxu0
      %v3677 = vadd.f32 %v3508, %v3676
      %v3678 = vpop.f32.mrb[0].mxu0
      %v3679 = vpop.f32.mrb[0].mxu0
      %v3680 = vadd.f32 %v3511, %v3679
      %v3681 = vpop.f32.mrb[0].mxu0
      %3682 = vmatprep.mubr.bf16.mxu0 %v2646
      %3683 = vmatmul.mubr.bf16.gmra.mrb[0].mxu0 %v2590
      %v3684 = vpop.f32.mrb[0].mxu0
      %v3685 = vadd.f32 %v3516, %v3684
      %v3686 = vpop.f32.mrb[0].mxu0
      %v3687 = vpop.f32.mrb[0].mxu0
      %v3688 = vadd.f32 %v3519, %v3687
      %v3689 = vpop.f32.mrb[0].mxu0
      %3690 = vmatprep.mubr.bf16.mxu0 %v2647
      %3691 = vmatmul.mubr.bf16.gmra.mrb[0].mxu0 %v2591
      %v3692 = vpop.f32.mrb[0].mxu0
      %v3693 = vadd.f32 %v3524, %v3692
      %v3694 = vpop.f32.mrb[0].mxu0
      %v3695 = vpop.f32.mrb[0].mxu0
      %v3696 = vadd.f32 %v3527, %v3695
      %v3697 = vpop.f32.mrb[0].mxu0
      %3698 = vmatprep.mubr.bf16.mxu0 %v2648
      %3699 = vmatmul.mubr.bf16.gmra.mrb[0].mxu0 %v2592
      %v3700 = vpop.f32.mrb[0].mxu0
      %v3701 = vadd.f32 %v3532, %v3700
      %v3702 = vpop.f32.mrb[0].mxu0
      %v3703 = vpop.f32.mrb[0].mxu0
      %v3704 = vadd.f32 %v3535, %v3703
      %v3705 = vpop.f32.mrb[0].mxu0
      %3706 = vmatprep.mubr.bf16.mxu0 %v2649
      %3707 = vmatmul.mubr.bf16.gmra.mrb[0].mxu0 %v2593
      %v3708 = vpop.f32.mrb[0].mxu0
      %v3709 = vadd.f32 %v3540, %v3708
      %v3710 = vpop.f32.mrb[0].mxu0
      %v3711 = vpop.f32.mrb[0].mxu0
      %v3712 = vadd.f32 %v3543, %v3711
      %v3713 = vpop.f32.mrb[0].mxu0
      %3714 = vmatprep.mubr.bf16.mxu0 %v2650
      %3715 = vmatmul.mubr.bf16.gmra.mrb[0].mxu0 %v2594
      %v3716 = vpop.f32.mrb[0].mxu0
      %v3717 = vadd.f32 %v3548, %v3716
      %v3718 = vpop.f32.mrb[0].mxu0
      %v3719 = vpop.f32.mrb[0].mxu0
      %v3720 = vadd.f32 %v3551, %v3719
      %v3721 = vpop.f32.mrb[0].mxu0
      %3722 = vmatprep.mubr.bf16.mxu0 %v2651
      %3723 = vmatmul.mubr.bf16.gmra.mrb[0].mxu0 %v2595
      %v3724 = vpop.f32.mrb[0].mxu0
      %v3725 = vadd.f32 %v3556, %v3724
      %v3726 = vpop.f32.mrb[0].mxu0
      %v3727 = vpop.f32.mrb[0].mxu0
      %v3728 = vadd.f32 %v3559, %v3727
      %v3729 = vpop.f32.mrb[0].mxu0
      %3730 = vmatprep.mubr.bf16.mxu0 %v2652
      %3731 = vmatmul.mubr.bf16.gmra.mrb[0].mxu0 %v2596
      %v3732 = vpop.f32.mrb[0].mxu0
      %v3733 = vadd.f32 %v3564, %v3732
      %v3734 = vpop.f32.mrb[0].mxu0
      %v3735 = vpop.f32.mrb[0].mxu0
      %v3736 = vadd.f32 %v3567, %v3735
      %v3737 = vpop.f32.mrb[0].mxu0
      %3738 = vmatprep.mubr.bf16.mxu0 %v2653
      %3739 = vmatmul.mubr.bf16.gmra.mrb[0].mxu0 %v2597
      %v3740 = vpop.f32.mrb[0].mxu0
      %v3741 = vadd.f32 %v3572, %v3740
      %v3742 = vpop.f32.mrb[0].mxu0
      %v3743 = vpop.f32.mrb[0].mxu0
      %v3744 = vadd.f32 %v3575, %v3743
      %v3745 = vpop.f32.mrb[0].mxu0
      %3746 = vmatprep.mubr.bf16.mxu0 %v2654
      %3747 = vmatmul.mubr.bf16.gmra.mrb[0].mxu0 %v2598
      %v3748 = vpop.f32.mrb[0].mxu0
      %v3749 = vadd.f32 %v3580, %v3748
      %v3750 = vpop.f32.mrb[0].mxu0
      %v3751 = vpop.f32.mrb[0].mxu0
      %v3752 = vadd.f32 %v3583, %v3751
      %v3753 = vpop.f32.mrb[0].mxu0
      %3754 = vmatprep.mubr.bf16.mxu0 %v2655
      %3755 = vmatmul.mubr.bf16.gmra.mrb[0].mxu0 %v2599
      %v3756 = vpop.f32.mrb[0].mxu0
      %v3757 = vadd.f32 %v3588, %v3756
      %v3758 = vpop.f32.mrb[0].mxu0
      %v3759 = vpop.f32.mrb[0].mxu0
      %v3760 = vadd.f32 %v3591, %v3759
      %v3761 = vpop.f32.mrb[0].mxu0
      %3762 = vmatprep.mubr.bf16.mxu0 %v2656
      %3763 = vmatmul.mubr.bf16.gmra.mrb[0].mxu0 %v2600
      %v3764 = vpop.f32.mrb[0].mxu0
      %v3765 = vadd.f32 %v3596, %v3764
      %v3766 = vpop.f32.mrb[0].mxu0
      %v3767 = vpop.f32.mrb[0].mxu0
      %v3768 = vadd.f32 %v3599, %v3767
      %v3769 = vpop.f32.mrb[0].mxu0
      %3770 = vmatprep.mubr.bf16.mxu0 %v2657
      %3771 = vmatmul.mubr.bf16.gmra.mrb[0].mxu0 %v2601
      %v3772 = vpop.f32.mrb[0].mxu0
      %v3773 = vadd.f32 %v3604, %v3772
      %v3774 = vpop.f32.mrb[0].mxu0
      %v3775 = vpop.f32.mrb[0].mxu0
      %v3776 = vadd.f32 %v3607, %v3775
      %v3777 = vpop.f32.mrb[0].mxu0
      %3778 = vmatprep.mubr.bf16.mxu0 %v2658
      %3779 = vmatmul.mubr.bf16.gmra.mrb[0].mxu0 %v2602
      %v3780 = vpop.f32.mrb[0].mxu0
      %v3781 = vadd.f32 %v3612, %v3780
      %v3782 = vpop.f32.mrb[0].mxu0
      %v3783 = vpop.f32.mrb[0].mxu0
      %v3784 = vadd.f32 %v3615, %v3783
      %v3785 = vpop.f32.mrb[0].mxu0
      %3786 = vmatprep.mubr.bf16.mxu0 %v2659
      %3787 = vmatmul.mubr.bf16.gmra.mrb[0].mxu0 %v2603
      %v3788 = vpop.f32.mrb[0].mxu0
      %v3789 = vadd.f32 %v3620, %v3788
      %v3790 = vpop.f32.mrb[0].mxu0
      %v3791 = vpop.f32.mrb[0].mxu0
      %v3792 = vadd.f32 %v3623, %v3791
      %v3793 = vpop.f32.mrb[0].mxu0
      %3794 = vmatprep.mubr.bf16.mxu0 %v2660
      %3795 = vmatmul.mubr.bf16.gmra.mrb[0].mxu0 %v2604
      %v3796 = vpop.f32.mrb[0].mxu0
      %v3797 = vadd.f32 %v3628, %v3796
      %v3798 = vpop.f32.mrb[0].mxu0
      %v3799 = vpop.f32.mrb[0].mxu0
      %v3800 = vadd.f32 %v3631, %v3799
      %v3801 = vpop.f32.mrb[0].mxu0
      %3802 = vmatprep.mubr.bf16.mxu0 %v2661
      %3803 = vmatmul.mubr.bf16.gmra.mrb[0].mxu0 %v2610
      %v3804 = vpop.f32.mrb[0].mxu0
      %v3805 = vadd.f32 %v3636, %v3804
      %v3806 = vpop.f32.mrb[0].mxu0
      %v3807 = vpop.f32.mrb[0].mxu0
      %v3808 = vadd.f32 %v3639, %v3807
      %v3809 = vpop.f32.mrb[0].mxu0
      %3810 = vdwg.mxu0
      %3811 = vmatprep.subr.bf16.mxu0 0
      %3812 = vmatpush1.bf16.msra.mxu0 %v3208
      %3813 = vmatprep.subr.bf16.mxu0 0
      %3814 = vmatpush1.bf16.msra.mxu0 %v3209
      %3815 = vmatprep.subr.bf16.mxu0 0
      %3816 = vmatpush1.bf16.msra.mxu0 %v3210
      %3817 = vmatprep.subr.bf16.mxu0 0
      %3818 = vmatpush1.bf16.msra.mxu0 %v3211
      %3819 = vmatprep.subr.bf16.mxu0 0
      %3820 = vmatpush1.bf16.msra.mxu0 %v3212
      %3821 = vmatprep.subr.bf16.mxu0 0
      %3822 = vmatpush1.bf16.msra.mxu0 %v3213
      %3823 = vmatprep.subr.bf16.mxu0 0
      %3824 = vmatpush1.bf16.msra.mxu0 %v3214
      %3825 = vmatprep.subr.bf16.mxu0 0
      %3826 = vmatpush1.bf16.msra.mxu0 %v3215
      %3827 = vmatprep.subr.bf16.mxu0 0
      %3828 = vmatpush1.bf16.msra.mxu0 %v3216
      %3829 = vmatprep.subr.bf16.mxu0 0
      %3830 = vmatpush1.bf16.msra.mxu0 %v3217
      %3831 = vmatprep.subr.bf16.mxu0 0
      %3832 = vmatpush1.bf16.msra.mxu0 %v3218
      %3833 = vmatprep.subr.bf16.mxu0 0
      %3834 = vmatpush1.bf16.msra.mxu0 %v3219
      %3835 = vmatprep.subr.bf16.mxu0 0
      %3836 = vmatpush1.bf16.msra.mxu0 %v3220
      %3837 = vmatprep.subr.bf16.mxu0 0
      %3838 = vmatpush1.bf16.msra.mxu0 %v3221
      %3839 = vmatprep.subr.bf16.mxu0 0
      %3840 = vmatpush1.bf16.msra.mxu0 %v3222
      %3841 = vmatprep.subr.bf16.mxu0 0
      %3842 = vmatpush1.bf16.msra.mxu0 %v3223
      %3843 = vmatprep.mubr.bf16.mxu0 %v2646
      %3844 = vmatmul.mubr.bf16.gmra.mrb[0].mxu0 %v2590
      %v3845 = vpop.f32.mrb[0].mxu0
      %v3846 = vadd.f32 %v3677, %v3845
      %v3847 = vpop.f32.mrb[0].mxu0
      %v3848 = vpop.f32.mrb[0].mxu0
      %v3849 = vadd.f32 %v3680, %v3848
      %v3850 = vpop.f32.mrb[0].mxu0
      %3851 = vmatprep.mubr.bf16.mxu0 %v2647
      %3852 = vmatmul.mubr.bf16.gmra.mrb[0].mxu0 %v2591
      %v3853 = vpop.f32.mrb[0].mxu0
      %v3854 = vadd.f32 %v3685, %v3853
      %v3855 = vpop.f32.mrb[0].mxu0
      %v3856 = vpop.f32.mrb[0].mxu0
      %v3857 = vadd.f32 %v3688, %v3856
      %v3858 = vpop.f32.mrb[0].mxu0
      %3859 = vmatprep.mubr.bf16.mxu0 %v2648
      %3860 = vmatmul.mubr.bf16.gmra.mrb[0].mxu0 %v2592
      %v3861 = vpop.f32.mrb[0].mxu0
      %v3862 = vadd.f32 %v3693, %v3861
      %v3863 = vpop.f32.mrb[0].mxu0
      %v3864 = vpop.f32.mrb[0].mxu0
      %v3865 = vadd.f32 %v3696, %v3864
      %v3866 = vpop.f32.mrb[0].mxu0
      %3867 = vmatprep.mubr.bf16.mxu0 %v2649
      %3868 = vmatmul.mubr.bf16.gmra.mrb[0].mxu0 %v2593
      %v3869 = vpop.f32.mrb[0].mxu0
      %v3870 = vadd.f32 %v3701, %v3869
      %v3871 = vpop.f32.mrb[0].mxu0
      %v3872 = vpop.f32.mrb[0].mxu0
      %v3873 = vadd.f32 %v3704, %v3872
      %v3874 = vpop.f32.mrb[0].mxu0
      %3875 = vmatprep.mubr.bf16.mxu0 %v2650
      %3876 = vmatmul.mubr.bf16.gmra.mrb[0].mxu0 %v2594
      %v3877 = vpop.f32.mrb[0].mxu0
      %v3878 = vadd.f32 %v3709, %v3877
      %v3879 = vpop.f32.mrb[0].mxu0
      %v3880 = vpop.f32.mrb[0].mxu0
      %v3881 = vadd.f32 %v3712, %v3880
      %v3882 = vpop.f32.mrb[0].mxu0
      %3883 = vmatprep.mubr.bf16.mxu0 %v2651
      %3884 = vmatmul.mubr.bf16.gmra.mrb[0].mxu0 %v2595
      %v3885 = vpop.f32.mrb[0].mxu0
      %v3886 = vadd.f32 %v3717, %v3885
      %v3887 = vpop.f32.mrb[0].mxu0
      %v3888 = vpop.f32.mrb[0].mxu0
      %v3889 = vadd.f32 %v3720, %v3888
      %v3890 = vpop.f32.mrb[0].mxu0
      %3891 = vmatprep.mubr.bf16.mxu0 %v2652
      %3892 = vmatmul.mubr.bf16.gmra.mrb[0].mxu0 %v2596
      %v3893 = vpop.f32.mrb[0].mxu0
      %v3894 = vadd.f32 %v3725, %v3893
      %v3895 = vpop.f32.mrb[0].mxu0
      %v3896 = vpop.f32.mrb[0].mxu0
      %v3897 = vadd.f32 %v3728, %v3896
      %v3898 = vpop.f32.mrb[0].mxu0
      %3899 = vmatprep.mubr.bf16.mxu0 %v2653
      %3900 = vmatmul.mubr.bf16.gmra.mrb[0].mxu0 %v2597
      %v3901 = vpop.f32.mrb[0].mxu0
      %v3902 = vadd.f32 %v3733, %v3901
      %v3903 = vpop.f32.mrb[0].mxu0
      %v3904 = vpop.f32.mrb[0].mxu0
      %v3905 = vadd.f32 %v3736, %v3904
      %v3906 = vpop.f32.mrb[0].mxu0
      %3907 = vmatprep.mubr.bf16.mxu0 %v2654
      %3908 = vmatmul.mubr.bf16.gmra.mrb[0].mxu0 %v2598
      %v3909 = vpop.f32.mrb[0].mxu0
      %v3910 = vadd.f32 %v3741, %v3909
      %v3911 = vpop.f32.mrb[0].mxu0
      %v3912 = vpop.f32.mrb[0].mxu0
      %v3913 = vadd.f32 %v3744, %v3912
      %v3914 = vpop.f32.mrb[0].mxu0
      %3915 = vmatprep.mubr.bf16.mxu0 %v2655
      %3916 = vmatmul.mubr.bf16.gmra.mrb[0].mxu0 %v2599
      %v3917 = vpop.f32.mrb[0].mxu0
      %v3918 = vadd.f32 %v3749, %v3917
      %v3919 = vpop.f32.mrb[0].mxu0
      %v3920 = vpop.f32.mrb[0].mxu0
      %v3921 = vadd.f32 %v3752, %v3920
      %v3922 = vpop.f32.mrb[0].mxu0
      %3923 = vmatprep.mubr.bf16.mxu0 %v2656
      %3924 = vmatmul.mubr.bf16.gmra.mrb[0].mxu0 %v2600
      %v3925 = vpop.f32.mrb[0].mxu0
      %v3926 = vadd.f32 %v3757, %v3925
      %v3927 = vpop.f32.mrb[0].mxu0
      %v3928 = vpop.f32.mrb[0].mxu0
      %v3929 = vadd.f32 %v3760, %v3928
      %v3930 = vpop.f32.mrb[0].mxu0
      %3931 = vmatprep.mubr.bf16.mxu0 %v2657
      %3932 = vmatmul.mubr.bf16.gmra.mrb[0].mxu0 %v2601
      %v3933 = vpop.f32.mrb[0].mxu0
      %v3934 = vadd.f32 %v3765, %v3933
      %v3935 = vpop.f32.mrb[0].mxu0
      %v3936 = vpop.f32.mrb[0].mxu0
      %v3937 = vadd.f32 %v3768, %v3936
      %v3938 = vpop.f32.mrb[0].mxu0
      %3939 = vmatprep.mubr.bf16.mxu0 %v2658
      %3940 = vmatmul.mubr.bf16.gmra.mrb[0].mxu0 %v2602
      %v3941 = vpop.f32.mrb[0].mxu0
      %v3942 = vadd.f32 %v3773, %v3941
      %v3943 = vpop.f32.mrb[0].mxu0
      %v3944 = vpop.f32.mrb[0].mxu0
      %v3945 = vadd.f32 %v3776, %v3944
      %v3946 = vpop.f32.mrb[0].mxu0
      %3947 = vmatprep.mubr.bf16.mxu0 %v2659
      %3948 = vmatmul.mubr.bf16.gmra.mrb[0].mxu0 %v2603
      %v3949 = vpop.f32.mrb[0].mxu0
      %v3950 = vadd.f32 %v3781, %v3949
      %v3951 = vpop.f32.mrb[0].mxu0
      %v3952 = vpop.f32.mrb[0].mxu0
      %v3953 = vadd.f32 %v3784, %v3952
      %v3954 = vpop.f32.mrb[0].mxu0
      %3955 = vmatprep.mubr.bf16.mxu0 %v2660
      %3956 = vmatmul.mubr.bf16.gmra.mrb[0].mxu0 %v2604
      %v3957 = vpop.f32.mrb[0].mxu0
      %v3958 = vadd.f32 %v3789, %v3957
      %v3959 = vpop.f32.mrb[0].mxu0
      %v3960 = vpop.f32.mrb[0].mxu0
      %v3961 = vadd.f32 %v3792, %v3960
      %v3962 = vpop.f32.mrb[0].mxu0
      %3963 = vmatprep.mubr.bf16.mxu0 %v2661
      %3964 = vmatmul.mubr.bf16.gmra.mrb[0].mxu0 %v2610
      %v3965 = vpop.f32.mrb[0].mxu0
      %v3966 = vadd.f32 %v3797, %v3965
      %v3967 = vpop.f32.mrb[0].mxu0
      %v3968 = vpop.f32.mrb[0].mxu0
      %v3969 = vadd.f32 %v3800, %v3968
      %v3970 = vpop.f32.mrb[0].mxu0
      %3971 = vmatprep.mubr.bf16.mxu0 %v2667
      %3972 = vmatmul.mubr.bf16.gmra.mrb[0].mxu0 %v2664
      %v3973 = vpop.f32.mrb[0].mxu0
      %v3974 = vadd.f32 %v3805, %v3973
      %v3975 = vpop.f32.mrb[0].mxu0
      %v3976 = vpop.f32.mrb[0].mxu0
      %v3977 = vadd.f32 %v3808, %v3976
      %v3978 = vpop.f32.mrb[0].mxu0
      %3979 = vdwg.mxu0
      %3980 = vmatprep.subr.bf16.mxu0 0
      %3981 = vmatpush1.bf16.msra.mxu0 %v3224
      %3982 = vmatprep.subr.bf16.mxu0 0
      %3983 = vmatpush1.bf16.msra.mxu0 %v3225
      %3984 = vmatprep.subr.bf16.mxu0 0
      %3985 = vmatpush1.bf16.msra.mxu0 %v3226
      %3986 = vmatprep.subr.bf16.mxu0 0
      %3987 = vmatpush1.bf16.msra.mxu0 %v3227
      %3988 = vmatprep.subr.bf16.mxu0 0
      %3989 = vmatpush1.bf16.msra.mxu0 %v3228
      %3990 = vmatprep.subr.bf16.mxu0 0
      %3991 = vmatpush1.bf16.msra.mxu0 %v3229
      %3992 = vmatprep.subr.bf16.mxu0 0
      %3993 = vmatpush1.bf16.msra.mxu0 %v3230
      %3994 = vmatprep.subr.bf16.mxu0 0
      %3995 = vmatpush1.bf16.msra.mxu0 %v3231
      %3996 = vmatprep.subr.bf16.mxu0 0
      %3997 = vmatpush1.bf16.msra.mxu0 0
      %3998 = vmatprep.subr.bf16.mxu0 0
      %3999 = vmatpush1.bf16.msra.mxu0 0
      %4000 = vmatprep.subr.bf16.mxu0 0
      %4001 = vmatpush1.bf16.msra.mxu0 0
      %4002 = vmatprep.subr.bf16.mxu0 0
      %4003 = vmatpush1.bf16.msra.mxu0 0
      %4004 = vmatprep.subr.bf16.mxu0 0
      %4005 = vmatpush1.bf16.msra.mxu0 0
      %4006 = vmatprep.subr.bf16.mxu0 0
      %4007 = vmatpush1.bf16.msra.mxu0 0
      %4008 = vmatprep.subr.bf16.mxu0 0
      %4009 = vmatpush1.bf16.msra.mxu0 0
      %4010 = vmatprep.subr.bf16.mxu0 0
      %4011 = vmatpush1.bf16.msra.mxu0 0
      %4012 = vmatprep.mubr.bf16.mxu0 0
      %4013 = vmatmul.mubr.bf16.gmra.mrb[0].mxu0 %v2702
      %v4014 = vpop.f32.mrb[0].mxu0
      %v4015 = vadd.f32 %v3846, %v4014
      %v4016 = vpop.f32.mrb[0].mxu0
      %v4017 = vpop.f32.mrb[0].mxu0
      %v4018 = vadd.f32 %v3849, %v4017
      %v4019 = vpop.f32.mrb[0].mxu0
      %4020 = vmatprep.mubr.bf16.mxu0 0
      %4021 = vmatmul.mubr.bf16.gmra.mrb[0].mxu0 %v2703
      %v4022 = vpop.f32.mrb[0].mxu0
      %v4023 = vadd.f32 %v3854, %v4022
      %v4024 = vpop.f32.mrb[0].mxu0
      %v4025 = vpop.f32.mrb[0].mxu0
      %v4026 = vadd.f32 %v3857, %v4025
      %v4027 = vpop.f32.mrb[0].mxu0
      %4028 = vmatprep.mubr.bf16.mxu0 0
      %4029 = vmatmul.mubr.bf16.gmra.mrb[0].mxu0 %v2704
      %v4030 = vpop.f32.mrb[0].mxu0
      %v4031 = vadd.f32 %v3862, %v4030
      %v4032 = vpop.f32.mrb[0].mxu0
      %v4033 = vpop.f32.mrb[0].mxu0
      %v4034 = vadd.f32 %v3865, %v4033
      %v4035 = vpop.f32.mrb[0].mxu0
      %4036 = vmatprep.mubr.bf16.mxu0 0
      %4037 = vmatmul.mubr.bf16.gmra.mrb[0].mxu0 %v2705
      %v4038 = vpop.f32.mrb[0].mxu0
      %v4039 = vadd.f32 %v3870, %v4038
      %v4040 = vpop.f32.mrb[0].mxu0
      %v4041 = vpop.f32.mrb[0].mxu0
      %v4042 = vadd.f32 %v3873, %v4041
      %v4043 = vpop.f32.mrb[0].mxu0
      %4044 = vmatprep.mubr.bf16.mxu0 0
      %4045 = vmatmul.mubr.bf16.gmra.mrb[0].mxu0 %v2706
      %v4046 = vpop.f32.mrb[0].mxu0
      %v4047 = vadd.f32 %v3878, %v4046
      %v4048 = vpop.f32.mrb[0].mxu0
      %v4049 = vpop.f32.mrb[0].mxu0
      %v4050 = vadd.f32 %v3881, %v4049
      %v4051 = vpop.f32.mrb[0].mxu0
      %4052 = vmatprep.mubr.bf16.mxu0 0
      %4053 = vmatmul.mubr.bf16.gmra.mrb[0].mxu0 %v2707
      %v4054 = vpop.f32.mrb[0].mxu0
      %v4055 = vadd.f32 %v3886, %v4054
      %v4056 = vpop.f32.mrb[0].mxu0
      %v4057 = vpop.f32.mrb[0].mxu0
      %v4058 = vadd.f32 %v3889, %v4057
      %v4059 = vpop.f32.mrb[0].mxu0
      %4060 = vmatprep.mubr.bf16.mxu0 0
      %4061 = vmatmul.mubr.bf16.gmra.mrb[0].mxu0 %v2708
      %v4062 = vpop.f32.mrb[0].mxu0
      %v4063 = vadd.f32 %v3894, %v4062
      %v4064 = vpop.f32.mrb[0].mxu0
      %v4065 = vpop.f32.mrb[0].mxu0
      %v4066 = vadd.f32 %v3897, %v4065
      %v4067 = vpop.f32.mrb[0].mxu0
      %4068 = vmatprep.mubr.bf16.mxu0 0
      %4069 = vmatmul.mubr.bf16.gmra.mrb[0].mxu0 %v2709
      %v4070 = vpop.f32.mrb[0].mxu0
      %v4071 = vadd.f32 %v3902, %v4070
      %v4072 = vpop.f32.mrb[0].mxu0
      %v4073 = vpop.f32.mrb[0].mxu0
      %v4074 = vadd.f32 %v3905, %v4073
      %v4075 = vpop.f32.mrb[0].mxu0
      %4076 = vmatprep.mubr.bf16.mxu0 0
      %4077 = vmatmul.mubr.bf16.gmra.mrb[0].mxu0 %v2710
      %v4078 = vpop.f32.mrb[0].mxu0
      %v4079 = vadd.f32 %v3910, %v4078
      %v4080 = vpop.f32.mrb[0].mxu0
      %v4081 = vpop.f32.mrb[0].mxu0
      %v4082 = vadd.f32 %v3913, %v4081
      %v4083 = vpop.f32.mrb[0].mxu0
      %4084 = vmatprep.mubr.bf16.mxu0 0
      %4085 = vmatmul.mubr.bf16.gmra.mrb[0].mxu0 %v2711
      %v4086 = vpop.f32.mrb[0].mxu0
      %v4087 = vadd.f32 %v3918, %v4086
      %v4088 = vpop.f32.mrb[0].mxu0
      %v4089 = vpop.f32.mrb[0].mxu0
      %v4090 = vadd.f32 %v3921, %v4089
      %v4091 = vpop.f32.mrb[0].mxu0
      %4092 = vmatprep.mubr.bf16.mxu0 0
      %4093 = vmatmul.mubr.bf16.gmra.mrb[0].mxu0 %v2712
      %v4094 = vpop.f32.mrb[0].mxu0
      %v4095 = vadd.f32 %v3926, %v4094
      %v4096 = vpop.f32.mrb[0].mxu0
      %v4097 = vpop.f32.mrb[0].mxu0
      %v4098 = vadd.f32 %v3929, %v4097
      %v4099 = vpop.f32.mrb[0].mxu0
      %4100 = vmatprep.mubr.bf16.mxu0 0
      %4101 = vmatmul.mubr.bf16.gmra.mrb[0].mxu0 %v2713
      %v4102 = vpop.f32.mrb[0].mxu0
      %v4103 = vadd.f32 %v3934, %v4102
      %v4104 = vpop.f32.mrb[0].mxu0
      %v4105 = vpop.f32.mrb[0].mxu0
      %v4106 = vadd.f32 %v3937, %v4105
      %v4107 = vpop.f32.mrb[0].mxu0
      %4108 = vmatprep.mubr.bf16.mxu0 0
      %4109 = vmatmul.mubr.bf16.gmra.mrb[0].mxu0 %v2714
      %v4110 = vpop.f32.mrb[0].mxu0
      %v4111 = vadd.f32 %v3942, %v4110
      %v4112 = vpop.f32.mrb[0].mxu0
      %v4113 = vpop.f32.mrb[0].mxu0
      %v4114 = vadd.f32 %v3945, %v4113
      %v4115 = vpop.f32.mrb[0].mxu0
      %4116 = vmatprep.mubr.bf16.mxu0 0
      %4117 = vmatmul.mubr.bf16.gmra.mrb[0].mxu0 %v2715
      %v4118 = vpop.f32.mrb[0].mxu0
      %v4119 = vadd.f32 %v3950, %v4118
      %v4120 = vpop.f32.mrb[0].mxu0
      %v4121 = vpop.f32.mrb[0].mxu0
      %v4122 = vadd.f32 %v3953, %v4121
      %v4123 = vpop.f32.mrb[0].mxu0
      %4124 = vmatprep.mubr.bf16.mxu0 0
      %4125 = vmatmul.mubr.bf16.gmra.mrb[0].mxu0 %v2716
      %v4126 = vpop.f32.mrb[0].mxu0
      %v4127 = vadd.f32 %v3958, %v4126
      %v4128 = vpop.f32.mrb[0].mxu0
      %v4129 = vpop.f32.mrb[0].mxu0
      %v4130 = vadd.f32 %v3961, %v4129
      %v4131 = vpop.f32.mrb[0].mxu0
      %4132 = vmatprep.mubr.bf16.mxu0 0
      %4133 = vmatmul.mubr.bf16.gmra.mrb[0].mxu0 %v2717
      %v4134 = vpop.f32.mrb[0].mxu0
      %v4135 = vadd.f32 %v3966, %v4134
      %v4136 = vpop.f32.mrb[0].mxu0
      %v4137 = vpop.f32.mrb[0].mxu0
      %v4138 = vadd.f32 %v3969, %v4137
      %v4139 = vpop.f32.mrb[0].mxu0
      %4140 = vmatprep.mubr.bf16.mxu0 0
      %4141 = vmatmul.mubr.bf16.gmra.mrb[0].mxu0 %v2718
      %v4142 = vpop.f32.mrb[0].mxu0
      %v4143 = vadd.f32 %v3974, %v4142
      %v4144 = vpop.f32.mrb[0].mxu0
      %v4145 = vpop.f32.mrb[0].mxu0
      %v4146 = vadd.f32 %v3977, %v4145
      %v4147 = vpop.f32.mrb[0].mxu0
      %4148 = vdwg.mxu0
      %4149 = vst.msk [vmem:[%s197] sm:$0xff] %vm316, %v4015
      %4150 = vst.msk [vmem:[%s197 + $0x8] sm:$0xff] %vm316, %v4018
      %4151 = vst.msk [vmem:[%s197 + $0x10] sm:$0xff] %vm316, %v4023
      %4152 = vst.msk [vmem:[%s197 + $0x18] sm:$0xff] %vm316, %v4026
      %4153 = vst.msk [vmem:[%s197 + $0x20] sm:$0xff] %vm316, %v4031
      %4154 = vst.msk [vmem:[%s197 + $0x28] sm:$0xff] %vm316, %v4034
      %4155 = vst.msk [vmem:[%s197 + $0x30] sm:$0xff] %vm316, %v4039
      %4156 = vst.msk [vmem:[%s197 + $0x38] sm:$0xff] %vm316, %v4042
      %4157 = vst.msk [vmem:[%s197 + $0x40] sm:$0xff] %vm316, %v4047
      %4158 = vst.msk [vmem:[%s197 + $0x48] sm:$0xff] %vm316, %v4050
      %4159 = vst.msk [vmem:[%s197 + $0x50] sm:$0xff] %vm316, %v4055
      %4160 = vst.msk [vmem:[%s197 + $0x58] sm:$0xff] %vm316, %v4058
      %4161 = vst.msk [vmem:[%s197 + $0x60] sm:$0xff] %vm316, %v4063
      %4162 = vst.msk [vmem:[%s197 + $0x68] sm:$0xff] %vm316, %v4066
      %4163 = vst.msk [vmem:[%s197 + $0x70] sm:$0xff] %vm316, %v4071
      %4164 = vst.msk [vmem:[%s197 + $0x78] sm:$0xff] %vm316, %v4074
      %4165 = vst.msk [vmem:[%s197 + $0x80] sm:$0xff] %vm316, %v4079
      %4166 = vst.msk [vmem:[%s197 + $0x88] sm:$0xff] %vm316, %v4082
      %4167 = vst.msk [vmem:[%s197 + $0x90] sm:$0xff] %vm316, %v4087
      %4168 = vst.msk [vmem:[%s197 + $0x98] sm:$0xff] %vm316, %v4090
      %4169 = vst.msk [vmem:[%s197 + $0xa0] sm:$0xff] %vm316, %v4095
      %4170 = vst.msk [vmem:[%s197 + $0xa8] sm:$0xff] %vm316, %v4098
      %4171 = vst.msk [vmem:[%s197 + $0xb0] sm:$0xff] %vm316, %v4103
      %4172 = vst.msk [vmem:[%s197 + $0xb8] sm:$0xff] %vm316, %v4106
      %4173 = vst.msk [vmem:[%s197 + $0xc0] sm:$0xff] %vm316, %v4111
      %4174 = vst.msk [vmem:[%s197 + $0xc8] sm:$0xff] %vm316, %v4114
      %4175 = vst.msk [vmem:[%s197 + $0xd0] sm:$0xff] %vm316, %v4119
      %4176 = vst.msk [vmem:[%s197 + $0xd8] sm:$0xff] %vm316, %v4122
      %4177 = vst.msk [vmem:[%s197 + $0xe0] sm:$0xff] %vm316, %v4127
      %4178 = vst.msk [vmem:[%s197 + $0xe8] sm:$0xff] %vm316, %v4130
      %4179 = vst.msk [vmem:[%s197 + $0xf0] sm:$0xff] %vm316, %v4135
      %4180 = vst.msk [vmem:[%s197 + $0xf8] sm:$0xff] %vm316, %v4138
      %4181 = vst.msk [vmem:[%s197 + $0x100] sm:$0xff] %vm316, %v4143
      %4182 = vst.msk [vmem:[%s197 + $0x108] sm:$0xff] %vm316, %v4146
      %p4183 = scmp.lt.s32.totalorder %s15, 1
      %s4184 = scalar_select %p4183, %s15, 1
      %s4185 = smul.addr %s4184, 34
      %s4186 = smul.addr %s4185, 8
      %s4187 = scalar_lea.vmem %s4, %s4186
      // Predicated region
      $region44: #{dncnn_forward.1} parent=35 // pred_check
        %p4188 = pneg %p122
      $region45: #{dncnn_forward.1} parent=35 // pred_check_branch
        %4190 = sbr.rel (%p4188) target = $region47
      $region46: #{dncnn_forward.1} parent=35 // pred_region
        _
      $region47: #{dncnn_forward.1} parent=35 // pred_fallthru
        _
    $region36: #{dncnn_forward.1} parent=5 // pred_fallthru
      _
    %p4191 = scmp.le.s32.totalorder 2, %s10
    // Predicated region
    $region48: #{dncnn_forward.1} parent=5 // pred_check
      %p4192 = pneg %p4191
    $region49: #{dncnn_forward.1} parent=5 // pred_check_branch
      %4194 = sbr.rel (%p4192) target = $region51
    $region50: #{dncnn_forward.1} parent=5 // pred_region
      %s4195 = ssub.s32 %s10, 2
      // Predicated region
      $region52: #{dncnn_forward.1} parent=50 // pred_check
        %p4196 = pneg %p128
      $region53: #{dncnn_forward.1} parent=50 // pred_check_branch
        %4198 = sbr.rel (%p4196) target = $region55
      $region54: #{dncnn_forward.1} parent=50 // pred_region
        %p4199 = scmp.lt.s32.totalorder %s16, 1
        %s4200 = scalar_select %p4199, %s16, 1
        %s4201 = smul.addr %s4200, 34
        %s4202 = smul.addr %s4201, 8
        %s4203 = scalar_lea.vmem %s4, %s4202
      $region55: #{dncnn_forward.1} parent=50 // pred_fallthru
        _
    $region51: #{dncnn_forward.1} parent=5 // pred_fallthru
      _
  $region6: #{dncnn_forward.1} parent=0 // loop_footer
    %s14 = sadd.s32 1, %s10
  $region7: #{dncnn_forward.1} parent=0 // loop_footer_branch
    %9 = sbr.rel target = $region3
  $region8: #{dncnn_forward.1} parent=0 // loop_exit
    _

</llo_original>
